<compile_context>
chip_gen: v7x
topology: tpu7x:2x2x1
jax: 0.10.0
libtpu: 0.0.40
codegen_flags: <defaults>
</compile_context>

<pallas_src>
import functools

import jax
import jax.numpy as jnp
from jax.experimental import pallas as pl
from jax.experimental.pallas import tpu as pltpu

# ---------------- synthetic, deterministic stand-in for MODEL_PARAM_DICT['sac'] -----
SAC_PARAM_NAMES = ["KC", "PCTIM", "ADIMP", "UZTWM", "UZFWM", "LZTWM", "LZFSM", "LZFPM",
                   "RSERV", "PFREE", "RIVA", "ZPERC", "REXP", "UZK", "LZSK", "LZPK",
                   "CI", "CGS", "CGP", "KE", "XE"]
SAC_PARAM_RANGE = {
    "KC": (0.1, 1.2), "PCTIM": (0.0, 0.1), "ADIMP": (0.0, 0.3),
    "UZTWM": (10.0, 300.0), "UZFWM": (5.0, 150.0), "LZTWM": (10.0, 500.0),
    "LZFSM": (5.0, 400.0), "LZFPM": (10.0, 1000.0), "RSERV": (0.0, 0.4),
    "PFREE": (0.0, 0.6), "RIVA": (0.0, 0.3), "ZPERC": (1.0, 250.0),
    "REXP": (1.1, 5.0), "UZK": (0.1, 0.75), "LZSK": (0.01, 0.35),
    "LZPK": (0.001, 0.05), "CI": (0.0, 0.9), "CGS": (0.95, 0.998),
    "CGP": (0.98, 0.998), "KE": (0.0, 1.0), "XE": (0.0, 0.5),
}

_VMEM_SPEC = pl.BlockSpec(memory_space=pltpu.MemorySpace.VMEM)

LANE = 128     # basins per lane row
CHUNK = 8      # time steps per grid step (fully unrolled; matches sublane-dense store)


# =============================== Kernel 1: SimpleAnn =================================
def _ann_kernel(z_ref, w1_ref, b1_ref, w2_ref, b2_ref, lo_ref, hi_ref, o_ref):
    h = jnp.dot(z_ref[...], w1_ref[...], preferred_element_type=jnp.float32) + b1_ref[...]
    h = jnp.maximum(h, 0.0)                                    # ReLU
    g = jnp.dot(h, w2_ref[...], preferred_element_type=jnp.float32) + b2_ref[...]
    g = jnp.clip(g, 0.0, 1.0)                                  # param_limit_func == 'clamp'
    o_ref[...] = lo_ref[...] + g * (hi_ref[...] - lo_ref[...])  # fused physical rescale


def ann_params_forward(z_last, w1, b1, w2, b2, lo, hi):
    """z_last: (B, n_in) final-timestep DL input. Returns physical SAC params (B, 21)."""
    B = z_last.shape[0]
    n_out = w2.shape[1]
    return pl.pallas_call(
        _ann_kernel,
        out_shape=jax.ShapeDtypeStruct((B, n_out), jnp.float32),
        in_specs=[_VMEM_SPEC] * 7,
        out_specs=_VMEM_SPEC,
    )(z_last, w1, b1, w2, b2, lo, hi)


# =============================== Kernel 2: Sac4Dpl ===================================
def _sac_kernel(prcp_ref, pet_ref, par_ref, q_ref, st_ref):
    # st_ref: (12, SUB, LANE) recurrent state carried across the sequential chunk axis:
    #   [auztw, alztw, uztw, uzfw, lztw, lzfs, lzfp, qs, qi, qgs, qgp, mq]
    @pl.when(pl.program_id(1) == 0)
    def _init():
        st_ref[...] = jnp.full(st_ref.shape, 0.01, jnp.float32)

    par = par_ref[...]                                  # (21, SUB, LANE)
    kc, pctim, adimp = par[0], par[1], par[2]
    uztwm, uzfwm, lztwm = par[3], par[4], par[5]
    lzfsm, lzfpm, rserv = par[6], par[7], par[8]
    pfree = par[9]
    # par[10] (RIVA) only feeds the unused evaporation output -> skipped
    zperc, rexp, uzk = par[11], par[12], par[13]
    lzsk, lzpk = par[14], par[15]
    ci, cgs, cgp, ke, xe = par[16], par[17], par[18], par[19], par[20]

    # ---- loop-invariant derived quantities (hoisted out of the time recurrence) ----
    parea0 = 1.0 - pctim - adimp          # un-clamped parea (used for rs and u)
    parea_c = jnp.maximum(parea0, 0.0)    # clamped parea used in the routing loop
    u = parea0 * 1000.0
    pbase = lzfsm * lzsk + lzfpm * lzpk
    ut_lt = uztwm + lztwm
    uz_sum = uztwm + uzfwm
    lzf_sum = lzfsm + lzfpm
    lz_sum = lzf_sum + lztwm
    saved = rserv * lzf_sum
    inv_uztwm = 1.0 / uztwm
    inv_uzfwm = 1.0 / uzfwm
    inv_lztwm = 1.0 / lztwm
    inv_lzfpm = 1.0 / lzfpm
    inv_ut_lt = 1.0 / ut_lt
    inv_uz_sum = 1.0 / uz_sum
    inv_lz_sum = 1.0 / lz_sum
    inv_ratio_den = 1.0 / (lzf_sum - saved + lztwm)
    coef_pref = lzfpm / lzf_sum
    one_m_ci = 1.0 - ci
    one_m_cgs = 1.0 - cgs
    one_m_cgp = 1.0 - cgp

    # Muskingum routing constants (rivernumber == 1 for every basin)
    dt = 12.0                              # hydrodt * 24 / 2
    ko = ke * 24.0
    c1v = jnp.maximum(ko * (1.0 - xe) + dt, 0.0)
    inv_c1v = 1.0 / c1v
    c2 = jnp.maximum((-ko * xe + dt) * inv_c1v, 0.0)
    c3 = jnp.maximum((ko * (1.0 - xe) - dt) * inv_c1v, 0.0)
    c1_ = (ko * xe + dt) * inv_c1v

    st = st_ref[...]
    auztw, alztw = st[0], st[1]
    uztw, uzfw, lztw, lzfs, lzfp = st[2], st[3], st[4], st[5], st[6]
    qs, qi, qgs, qgp, mq = st[7], st[8], st[9], st[10], st[11]

    q_rows = []
    for i in range(CHUNK):                 # fully unrolled 8-step chunk, static indices
        p = jnp.maximum(prcp_ref[i], 0.0)
        e = pet_ref[i]
        e = jnp.where((e == e) & (jnp.abs(e) < jnp.inf), e, 0.0)   # nan_to_num -> 0
        e = jnp.maximum(e, 0.0)

        ep = kc * e
        roimp = pctim * p
        ae1 = jnp.minimum(auztw, ep * (auztw * inv_uztwm))
        ae3 = jnp.maximum((ep - ae1) * (alztw * inv_ut_lt), 0.0)
        pav = jnp.maximum(p - (uztwm - (auztw - ae1)), 0.0)
        adsur = jnp.maximum(pav * ((alztw - ae3) * inv_lztwm), 0.0)
        ars = jnp.maximum(pav - adsur + (alztw - ae3) - lztwm, 0.0)
        auztw = jnp.maximum(jnp.minimum(uztwm, auztw - ae1 + p), 0.0)
        alztw = jnp.maximum(jnp.minimum(lztwm, pav - adsur + (alztw - ae3)), 0.0)
        e1 = jnp.minimum(uztw, ep * (uztw * inv_uztwm))
        e2 = jnp.maximum(jnp.minimum(uzfw, ep - e1), 0.0)
        e3 = jnp.maximum((ep - e1 - e2) * (lztw * inv_ut_lt), 0.0)
        lt1 = jnp.maximum(lztw - e3, 0.0)
        # e4 / et feed only the (unused) evaporation output -> not computed
        adsur_adimp = adsur * adimp
        ars_adimp = ars * adimp
        rs = jnp.maximum(p + (uztw + uzfw - e1 - e2) - uz_sum, 0.0) * parea0
        ut = jnp.maximum(jnp.minimum(uztwm, uztw - e1 + p), 0.0)
        uf = jnp.maximum(jnp.minimum(uzfwm, p + (uztw + uzfw - e1 - e2) - ut), 0.0)
        ri = uf * uzk
        uf = jnp.maximum(uf - ri, 0.0)
        defr = jnp.maximum(1.0 - (lzfs + lzfp + lt1) * inv_lz_sum, 0.0)
        # pow(defr, rexp) for defr >= 0, rexp > 1 via exp/log (matches torch.pow)
        defr_pow = jnp.where(defr > 0.0,
                             jnp.exp(rexp * jnp.log(jnp.where(defr > 0.0, defr, 1.0))),
                             0.0)
        perc = pbase * (1.0 + zperc * defr_pow) * uf * inv_uzfwm
        rate = jnp.maximum(jnp.minimum(perc, lz_sum - (lzfs + lzfp + lt1)), 0.0)
        fx = jnp.maximum(jnp.minimum(lzf_sum - (lzfs + lzfp),
                                     jnp.maximum(rate - (lztwm - lt1), rate * pfree)), 0.0)
        perct = jnp.maximum(rate - fx, 0.0)
        # reference: coef = lzfpm/(lzfsm+lzfpm) * 2*(1-lzfp/lzfpm)/((1-lzfp/lzfpm)+(1-lzfsm/lzfsm))
        # and (1 - lzfsm/lzfsm) == 0 exactly, so the denominator is just (1 - lzfp/lzfpm).
        tlp = 1.0 - lzfp * inv_lzfpm
        coef = jnp.clip(coef_pref * ((2.0 * tlp) / tlp), 0.0, 1.0)
        percp = jnp.maximum(jnp.minimum(lzfpm - lzfp,
                                        jnp.maximum(fx - (lzfsm - lzfs), coef * fx)), 0.0)
        percs = jnp.maximum(fx - percp, 0.0)
        lt2 = lt1 + perct
        ls = lzfs + percs
        lp = lzfp + percp
        rgs = ls * lzsk
        ls2 = jnp.maximum(ls - rgs, 0.0)
        rgp = lp * lzpk
        lp2 = jnp.maximum(lp - rgp, 0.0)
        utr = ut * inv_uztwm
        ufr = uf * inv_uzfwm
        utfr = (ut + uf) * inv_uz_sum
        cond_u = utr < ufr
        uztw = jnp.where(cond_u, uztwm * utfr, ut)
        uzfw = jnp.where(cond_u, uzfwm * utfr, uf)
        ratio = jnp.maximum((ls + lp - saved + lt2) * inv_ratio_den, 0.0)
        ltr = lt2 * inv_lztwm
        cond_l = ltr < ratio
        lztw = jnp.where(cond_l, lztwm * ratio, lt2)
        lzfs = jnp.where(cond_l, jnp.maximum(ls - (lztw - lt2), 0.0), ls2)
        lzfp = jnp.where(cond_l, lp - jnp.maximum(lztw - lt2 - ls, 0.0), lp2)

        # ---- runoff concentration + single-reach Muskingum routing (fused 2nd loop) ----
        q_prev = qs + qi + qgs + qgp
        # (adsur_adimp + ars_adimp) * adimp keeps the reference's double adimp factor.
        qs = (roimp + (adsur_adimp + ars_adimp) * adimp + rs * parea_c) * 1000.0
        qi = jnp.maximum(ci * qi + one_m_ci * ri * u, 0.0)
        qgs = jnp.maximum(cgs * qgs + one_m_cgs * rgs * u, 0.0)
        qgp = jnp.maximum(cgp * qgp + one_m_cgp * rgp * u, 0.0)
        q_new = qs + qi + qgs + qgp
        q_rout = c1_ * q_prev + c2 * q_new + c3 * mq
        mq = q_rout
        q_rows.append(q_rout)

    q_ref[...] = jnp.stack(q_rows, axis=0)          # one dense (CHUNK, SUB, LANE) store
    st_ref[...] = jnp.stack(
        [auztw, alztw, uztw, uzfw, lztw, lzfs, lzfp, qs, qi, qgs, qgp, mq], axis=0)


def sac_simulate_q(prcp, pet, params_phys, warmup_length):
    """prcp, pet: (T, B); params_phys: (B, 21) physical params. Returns q: (T-warmup, B)."""
    T, B = prcp.shape

    # pack basins into (SUB, 128) vreg tiles; grid over basin tiles (parallel axis)
    sub_total = -(-B // LANE)
    if sub_total >= 8:
        sub = 8
        n_tiles = -(-sub_total // sub)
    else:
        sub = sub_total
        n_tiles = 1
    b_pad = n_tiles * sub * LANE
    n_chunks = -(-T // CHUNK)
    t_pad = n_chunks * CHUNK

    def pack_forcing(a):
        a = jnp.pad(a.astype(jnp.float32), ((0, t_pad - T), (0, b_pad - B)))
        return a.reshape(t_pad, n_tiles * sub, LANE)

    prcp_p = pack_forcing(prcp)
    pet_p = pack_forcing(pet)
    # pad basin lanes with a copy of the last real basin's params so padded lanes stay
    # finite (they are sliced away afterwards)
    par_t = jnp.transpose(params_phys).astype(jnp.float32)              # (21, B)
    par_p = jnp.pad(par_t, ((0, 0), (0, b_pad - B)), mode="edge")
    par_p = par_p.reshape(21, n_tiles * sub, LANE)

    q = pl.pallas_call(
        _sac_kernel,
        out_shape=jax.ShapeDtypeStruct((t_pad, n_tiles * sub, LANE), jnp.float32),
        grid_spec=pltpu.PrefetchScalarGridSpec(
            num_scalar_prefetch=0,
            grid=(n_tiles, n_chunks),
            in_specs=[
                pl.BlockSpec((CHUNK, sub, LANE), lambda b, c: (c, b, 0)),   # prcp
                pl.BlockSpec((CHUNK, sub, LANE), lambda b, c: (c, b, 0)),   # pet
                pl.BlockSpec((21, sub, LANE), lambda b, c: (0, b, 0)),      # params
            ],
            out_specs=pl.BlockSpec((CHUNK, sub, LANE), lambda b, c: (c, b, 0)),
            scratch_shapes=[pltpu.VMEM((12, sub, LANE), jnp.float32)],
        ),
        compiler_params=pltpu.CompilerParams(
            dimension_semantics=("parallel", "arbitrary")),
    )(prcp_p, pet_p, par_p)

    return q.reshape(t_pad, b_pad)[warmup_length:T, :B]


# =============================== DplAnnSac forward ===================================
def dpl_ann_sac_forward(x, z, weights, warmup_length):
    """x: (T, B, F) physical forcing; z: (Tz, B, n_in) normalized DL input.
    Returns q: (T - warmup, B, 1)."""
    w1, b1, w2, b2 = weights
    # param_test_way == 'final': only the final timestep's parameters are used,
    # so only run the ANN on z[-1].
    z_last = (z[-1] if z.ndim == 3 else z).astype(jnp.float32)
    lo = jnp.array([SAC_PARAM_RANGE[n][0] for n in SAC_PARAM_NAMES], jnp.float32)[None, :]
    hi = jnp.array([SAC_PARAM_RANGE[n][1] for n in SAC_PARAM_NAMES], jnp.float32)[None, :]
    params_phys = ann_params_forward(z_last, w1, b1, w2, b2, lo, hi)    # (B, 21)
    prcp = x[:, :, 0]
    pet = x[:, :, 1]                                   # pb_model.feature_size == 2
    q = sac_simulate_q(prcp, pet, params_phys, warmup_length)
    return q[..., None]                                # (T - warmup, B, 1)


if __name__ == "__main__":
    key = jax.random.PRNGKey(0)
    T, B, F = 12, 8, 4            # seq, basins, forcing features
    n_in, n_hidden, n_out = 16, 32, 21
    warmup = 4

    k1, k2, k3, k4 = jax.random.split(key, 4)
    x = jax.random.uniform(k1, (T, B, F), jnp.float32, 0.0, 10.0)   # prcp / pet like forcing
    z = jax.random.normal(k2, (T, B, n_in), jnp.float32)

    # deterministic synthetic SimpleAnn weights: Linear(n_in, hidden) -> ReLU -> Linear(hidden, 21)
    w1 = jax.random.normal(k3, (n_in, n_hidden), jnp.float32) * (1.0 / jnp.sqrt(n_in))
    b1 = jnp.zeros((1, n_hidden), jnp.float32)
    w2 = jax.random.normal(k4, (n_hidden, n_out), jnp.float32) * (1.0 / jnp.sqrt(n_hidden))
    b2 = jnp.zeros((1, n_out), jnp.float32)

    fwd = jax.jit(functools.partial(dpl_ann_sac_forward, warmup_length=warmup))
    q = fwd(x, z, (w1, b1, w2, b2))
    q = jax.block_until_ready(q)

    assert q.shape == (T - warmup, B, 1), q.shape
    assert bool(jnp.all(jnp.isfinite(q)))
    print("KERNEL_OK")
</pallas_src>

<mosaic_0001>
module attributes {stable_mosaic.version = 11 : i64} {
  func.func @_ann_kernel(%arg0: memref<8x16xf32, #tpu.memory_space<vmem>>, %arg1: memref<16x32xf32, #tpu.memory_space<vmem>>, %arg2: memref<1x32xf32, #tpu.memory_space<vmem>>, %arg3: memref<32x21xf32, #tpu.memory_space<vmem>>, %arg4: memref<1x21xf32, #tpu.memory_space<vmem>>, %arg5: memref<1x21xf32, #tpu.memory_space<vmem>>, %arg6: memref<1x21xf32, #tpu.memory_space<vmem>>, %arg7: memref<8x21xf32, #tpu.memory_space<vmem>>) attributes {dimension_semantics = [], scalar_prefetch = 0 : i64, scratch_operands = 0 : i64, tpu.core_type = #tpu.core_type<tc>} {
    %c0 = arith.constant 0 : index
    %c0_0 = arith.constant 0 : index
    %0 = vector.load %arg0[%c0, %c0_0] : memref<8x16xf32, #tpu.memory_space<vmem>>, vector<8x16xf32>
    %c0_1 = arith.constant 0 : index
    %c0_2 = arith.constant 0 : index
    %1 = vector.load %arg1[%c0_1, %c0_2] : memref<16x32xf32, #tpu.memory_space<vmem>>, vector<16x32xf32>
    %cst = arith.constant dense<0.000000e+00> : vector<8x32xf32>
    %2 = tpu.matmul %0, %1, %cst {dimension_numbers = #tpu.dot_dimension_numbers<[1], [0], [0], [1], [0, 0, 1, 1], [], []>} : vector<8x16xf32>, vector<16x32xf32>, vector<8x32xf32> -> vector<8x32xf32>
    %c0_3 = arith.constant 0 : index
    %c0_4 = arith.constant 0 : index
    %3 = vector.load %arg2[%c0_3, %c0_4] : memref<1x32xf32, #tpu.memory_space<vmem>>, vector<1x32xf32>
    %4 = vector.broadcast %3 : vector<1x32xf32> to vector<8x32xf32>
    %5 = arith.addf %2, %4 : vector<8x32xf32>
    %cst_5 = arith.constant 0.000000e+00 : f32
    %6 = vector.broadcast %cst_5 : f32 to vector<8x32xf32>
    %7 = arith.maximumf %5, %6 : vector<8x32xf32>
    %c0_6 = arith.constant 0 : index
    %c0_7 = arith.constant 0 : index
    %8 = vector.load %arg3[%c0_6, %c0_7] : memref<32x21xf32, #tpu.memory_space<vmem>>, vector<32x21xf32>
    %cst_8 = arith.constant dense<0.000000e+00> : vector<8x21xf32>
    %9 = tpu.matmul %7, %8, %cst_8 {dimension_numbers = #tpu.dot_dimension_numbers<[1], [0], [0], [1], [0, 0, 1, 1], [], []>} : vector<8x32xf32>, vector<32x21xf32>, vector<8x21xf32> -> vector<8x21xf32>
    %c0_9 = arith.constant 0 : index
    %c0_10 = arith.constant 0 : index
    %10 = vector.load %arg4[%c0_9, %c0_10] : memref<1x21xf32, #tpu.memory_space<vmem>>, vector<1x21xf32>
    %11 = vector.broadcast %10 : vector<1x21xf32> to vector<8x21xf32>
    %12 = arith.addf %9, %11 : vector<8x21xf32>
    %cst_11 = arith.constant 0.000000e+00 : f32
    %cst_12 = arith.constant 1.000000e+00 : f32
    %13 = vector.broadcast %cst_11 : f32 to vector<8x21xf32>
    %14 = arith.maximumf %13, %12 : vector<8x21xf32>
    %15 = vector.broadcast %cst_12 : f32 to vector<8x21xf32>
    %16 = arith.minimumf %15, %14 : vector<8x21xf32>
    %c0_13 = arith.constant 0 : index
    %c0_14 = arith.constant 0 : index
    %17 = vector.load %arg5[%c0_13, %c0_14] : memref<1x21xf32, #tpu.memory_space<vmem>>, vector<1x21xf32>
    %c0_15 = arith.constant 0 : index
    %c0_16 = arith.constant 0 : index
    %18 = vector.load %arg6[%c0_15, %c0_16] : memref<1x21xf32, #tpu.memory_space<vmem>>, vector<1x21xf32>
    %c0_17 = arith.constant 0 : index
    %c0_18 = arith.constant 0 : index
    %19 = vector.load %arg5[%c0_17, %c0_18] : memref<1x21xf32, #tpu.memory_space<vmem>>, vector<1x21xf32>
    %20 = arith.subf %18, %19 : vector<1x21xf32>
    %21 = vector.broadcast %20 : vector<1x21xf32> to vector<8x21xf32>
    %22 = arith.mulf %16, %21 : vector<8x21xf32>
    %23 = vector.broadcast %17 : vector<1x21xf32> to vector<8x21xf32>
    %24 = arith.addf %23, %22 : vector<8x21xf32>
    %c0_19 = arith.constant 0 : index
    %c0_20 = arith.constant 0 : index
    %25 = vector.load %arg7[%c0_19, %c0_20] : memref<8x21xf32, #tpu.memory_space<vmem>>, vector<8x21xf32>
    tpu.vector_store %arg7[%c0_19, %c0_20], %24 {strides = array<i32>} : memref<8x21xf32, #tpu.memory_space<vmem>>, vector<8x21xf32>,
    return
  }
}

module attributes {stable_mosaic.version = 11 : i64} {
  func.func @_sac_kernel(%arg0: i32, %arg1: i32, %arg2: memref<8x1x128xf32, #tpu.memory_space<vmem>>, %arg3: memref<8x1x128xf32, #tpu.memory_space<vmem>>, %arg4: memref<21x1x128xf32, #tpu.memory_space<vmem>>, %arg5: memref<8x1x128xf32, #tpu.memory_space<vmem>>, %arg6: memref<12x1x128xf32, #tpu.memory_space<vmem>>) attributes {dimension_semantics = [#tpu.dimension_semantics<parallel>, #tpu.dimension_semantics<arbitrary>], iteration_bounds = array<i64: 1, 2>, scalar_prefetch = 0 : i64, scratch_operands = 1 : i64, tpu.core_type = #tpu.core_type<tc>, window_params = [{transform_indices = @transform_0, window_bounds = array<i64: 8, 1, 128>}, {transform_indices = @transform_1, window_bounds = array<i64: 8, 1, 128>}, {transform_indices = @transform_2, window_bounds = array<i64: 21, 1, 128>}, {transform_indices = @transform_3, window_bounds = array<i64: 8, 1, 128>}]} {
    %c0_i32 = arith.constant 0 : i32
    %0 = arith.cmpi eq, %arg1, %c0_i32 : i32
    %1 = arith.extui %0 : i1 to i32
    %c0_i32_0 = arith.constant 0 : i32
    %2 = arith.cmpi ne, %1, %c0_i32_0 : i32
    scf.if %2 {
      %cst_414 = arith.constant 0.00999999977 : f32
      %2052 = vector.broadcast %cst_414 : f32 to vector<12x1x128xf32>
      %c0_415 = arith.constant 0 : index
      %c0_416 = arith.constant 0 : index
      %c0_417 = arith.constant 0 : index
      %2053 = vector.load %arg6[%c0_415, %c0_416, %c0_417] : memref<12x1x128xf32, #tpu.memory_space<vmem>>, vector<12x1x128xf32>
      tpu.vector_store %arg6[%c0_415, %c0_416, %c0_417], %2052 {strides = array<i32>} : memref<12x1x128xf32, #tpu.memory_space<vmem>>, vector<12x1x128xf32>,
    } else {
    }
    %c0 = arith.constant 0 : index
    %c0_1 = arith.constant 0 : index
    %c0_2 = arith.constant 0 : index
    %3 = vector.load %arg4[%c0, %c0_1, %c0_2] : memref<21x1x128xf32, #tpu.memory_space<vmem>>, vector<21x1x128xf32>
    %4 = vector.extract_strided_slice %3 {offsets = [0, 0, 0], sizes = [1, 1, 128], strides = [1, 1, 1]} : vector<21x1x128xf32> to vector<1x1x128xf32>
    %5 = vector.shape_cast %4 : vector<1x1x128xf32> to vector<1x128xf32>
    %6 = vector.extract_strided_slice %3 {offsets = [1, 0, 0], sizes = [1, 1, 128], strides = [1, 1, 1]} : vector<21x1x128xf32> to vector<1x1x128xf32>
    %7 = vector.shape_cast %6 : vector<1x1x128xf32> to vector<1x128xf32>
    %8 = vector.extract_strided_slice %3 {offsets = [2, 0, 0], sizes = [1, 1, 128], strides = [1, 1, 1]} : vector<21x1x128xf32> to vector<1x1x128xf32>
    %9 = vector.shape_cast %8 : vector<1x1x128xf32> to vector<1x128xf32>
    %10 = vector.extract_strided_slice %3 {offsets = [3, 0, 0], sizes = [1, 1, 128], strides = [1, 1, 1]} : vector<21x1x128xf32> to vector<1x1x128xf32>
    %11 = vector.shape_cast %10 : vector<1x1x128xf32> to vector<1x128xf32>
    %12 = vector.extract_strided_slice %3 {offsets = [4, 0, 0], sizes = [1, 1, 128], strides = [1, 1, 1]} : vector<21x1x128xf32> to vector<1x1x128xf32>
    %13 = vector.shape_cast %12 : vector<1x1x128xf32> to vector<1x128xf32>
    %14 = vector.extract_strided_slice %3 {offsets = [5, 0, 0], sizes = [1, 1, 128], strides = [1, 1, 1]} : vector<21x1x128xf32> to vector<1x1x128xf32>
    %15 = vector.shape_cast %14 : vector<1x1x128xf32> to vector<1x128xf32>
    %16 = vector.extract_strided_slice %3 {offsets = [6, 0, 0], sizes = [1, 1, 128], strides = [1, 1, 1]} : vector<21x1x128xf32> to vector<1x1x128xf32>
    %17 = vector.shape_cast %16 : vector<1x1x128xf32> to vector<1x128xf32>
    %18 = vector.extract_strided_slice %3 {offsets = [7, 0, 0], sizes = [1, 1, 128], strides = [1, 1, 1]} : vector<21x1x128xf32> to vector<1x1x128xf32>
    %19 = vector.shape_cast %18 : vector<1x1x128xf32> to vector<1x128xf32>
    %20 = vector.extract_strided_slice %3 {offsets = [8, 0, 0], sizes = [1, 1, 128], strides = [1, 1, 1]} : vector<21x1x128xf32> to vector<1x1x128xf32>
    %21 = vector.shape_cast %20 : vector<1x1x128xf32> to vector<1x128xf32>
    %22 = vector.extract_strided_slice %3 {offsets = [9, 0, 0], sizes = [1, 1, 128], strides = [1, 1, 1]} : vector<21x1x128xf32> to vector<1x1x128xf32>
    %23 = vector.shape_cast %22 : vector<1x1x128xf32> to vector<1x128xf32>
    %24 = vector.extract_strided_slice %3 {offsets = [11, 0, 0], sizes = [1, 1, 128], strides = [1, 1, 1]} : vector<21x1x128xf32> to vector<1x1x128xf32>
    %25 = vector.shape_cast %24 : vector<1x1x128xf32> to vector<1x128xf32>
    %26 = vector.extract_strided_slice %3 {offsets = [12, 0, 0], sizes = [1, 1, 128], strides = [1, 1, 1]} : vector<21x1x128xf32> to vector<1x1x128xf32>
    %27 = vector.shape_cast %26 : vector<1x1x128xf32> to vector<1x128xf32>
    %28 = vector.extract_strided_slice %3 {offsets = [13, 0, 0], sizes = [1, 1, 128], strides = [1, 1, 1]} : vector<21x1x128xf32> to vector<1x1x128xf32>
    %29 = vector.shape_cast %28 : vector<1x1x128xf32> to vector<1x128xf32>
    %30 = vector.extract_strided_slice %3 {offsets = [14, 0, 0], sizes = [1, 1, 128], strides = [1, 1, 1]} : vector<21x1x128xf32> to vector<1x1x128xf32>
    %31 = vector.shape_cast %30 : vector<1x1x128xf32> to vector<1x128xf32>
    %32 = vector.extract_strided_slice %3 {offsets = [15, 0, 0], sizes = [1, 1, 128], strides = [1, 1, 1]} : vector<21x1x128xf32> to vector<1x1x128xf32>
    %33 = vector.shape_cast %32 : vector<1x1x128xf32> to vector<1x128xf32>
    %34 = vector.extract_strided_slice %3 {offsets = [16, 0, 0], sizes = [1, 1, 128], strides = [1, 1, 1]} : vector<21x1x128xf32> to vector<1x1x128xf32>
    %35 = vector.shape_cast %34 : vector<1x1x128xf32> to vector<1x128xf32>
    %36 = vector.extract_strided_slice %3 {offsets = [17, 0, 0], sizes = [1, 1, 128], strides = [1, 1, 1]} : vector<21x1x128xf32> to vector<1x1x128xf32>
    %37 = vector.shape_cast %36 : vector<1x1x128xf32> to vector<1x128xf32>
    %38 = vector.extract_strided_slice %3 {offsets = [18, 0, 0], sizes = [1, 1, 128], strides = [1, 1, 1]} : vector<21x1x128xf32> to vector<1x1x128xf32>
    %39 = vector.shape_cast %38 : vector<1x1x128xf32> to vector<1x128xf32>
    %40 = vector.extract_strided_slice %3 {offsets = [19, 0, 0], sizes = [1, 1, 128], strides = [1, 1, 1]} : vector<21x1x128xf32> to vector<1x1x128xf32>
    %41 = vector.shape_cast %40 : vector<1x1x128xf32> to vector<1x128xf32>
    %42 = vector.extract_strided_slice %3 {offsets = [20, 0, 0], sizes = [1, 1, 128], strides = [1, 1, 1]} : vector<21x1x128xf32> to vector<1x1x128xf32>
    %43 = vector.shape_cast %42 : vector<1x1x128xf32> to vector<1x128xf32>
    %cst = arith.constant 1.000000e+00 : f32
    %44 = vector.broadcast %cst : f32 to vector<1x128xf32>
    %45 = arith.subf %44, %7 : vector<1x128xf32>
    %46 = arith.subf %45, %9 : vector<1x128xf32>
    %cst_3 = arith.constant 0.000000e+00 : f32
    %47 = vector.broadcast %cst_3 : f32 to vector<1x128xf32>
    %48 = arith.maximumf %46, %47 : vector<1x128xf32>
    %cst_4 = arith.constant 1.000000e+03 : f32
    %49 = vector.broadcast %cst_4 : f32 to vector<1x128xf32>
    %50 = arith.mulf %46, %49 : vector<1x128xf32>
    %51 = arith.mulf %17, %31 : vector<1x128xf32>
    %52 = arith.mulf %19, %33 : vector<1x128xf32>
    %53 = arith.addf %51, %52 : vector<1x128xf32>
    %54 = arith.addf %11, %15 : vector<1x128xf32>
    %55 = arith.addf %11, %13 : vector<1x128xf32>
    %56 = arith.addf %17, %19 : vector<1x128xf32>
    %57 = arith.addf %56, %15 : vector<1x128xf32>
    %58 = arith.mulf %21, %56 : vector<1x128xf32>
    %cst_5 = arith.constant 1.000000e+00 : f32
    %59 = vector.broadcast %cst_5 : f32 to vector<1x128xf32>
    %60 = arith.divf %59, %11 : vector<1x128xf32>
    %cst_6 = arith.constant 1.000000e+00 : f32
    %61 = vector.broadcast %cst_6 : f32 to vector<1x128xf32>
    %62 = arith.divf %61, %13 : vector<1x128xf32>
    %cst_7 = arith.constant 1.000000e+00 : f32
    %63 = vector.broadcast %cst_7 : f32 to vector<1x128xf32>
    %64 = arith.divf %63, %15 : vector<1x128xf32>
    %cst_8 = arith.constant 1.000000e+00 : f32
    %65 = vector.broadcast %cst_8 : f32 to vector<1x128xf32>
    %66 = arith.divf %65, %19 : vector<1x128xf32>
    %cst_9 = arith.constant 1.000000e+00 : f32
    %67 = vector.broadcast %cst_9 : f32 to vector<1x128xf32>
    %68 = arith.divf %67, %54 : vector<1x128xf32>
    %cst_10 = arith.constant 1.000000e+00 : f32
    %69 = vector.broadcast %cst_10 : f32 to vector<1x128xf32>
    %70 = arith.divf %69, %55 : vector<1x128xf32>
    %cst_11 = arith.constant 1.000000e+00 : f32
    %71 = vector.broadcast %cst_11 : f32 to vector<1x128xf32>
    %72 = arith.divf %71, %57 : vector<1x128xf32>
    %73 = arith.subf %56, %58 : vector<1x128xf32>
    %74 = arith.addf %73, %15 : vector<1x128xf32>
    %cst_12 = arith.constant 1.000000e+00 : f32
    %75 = vector.broadcast %cst_12 : f32 to vector<1x128xf32>
    %76 = arith.divf %75, %74 : vector<1x128xf32>
    %77 = arith.divf %19, %56 : vector<1x128xf32>
    %cst_13 = arith.constant 1.000000e+00 : f32
    %78 = vector.broadcast %cst_13 : f32 to vector<1x128xf32>
    %79 = arith.subf %78, %35 : vector<1x128xf32>
    %cst_14 = arith.constant 1.000000e+00 : f32
    %80 = vector.broadcast %cst_14 : f32 to vector<1x128xf32>
    %81 = arith.subf %80, %37 : vector<1x128xf32>
    %cst_15 = arith.constant 1.000000e+00 : f32
    %82 = vector.broadcast %cst_15 : f32 to vector<1x128xf32>
    %83 = arith.subf %82, %39 : vector<1x128xf32>
    %cst_16 = arith.constant 2.400000e+01 : f32
    %84 = vector.broadcast %cst_16 : f32 to vector<1x128xf32>
    %85 = arith.mulf %41, %84 : vector<1x128xf32>
    %cst_17 = arith.constant 1.000000e+00 : f32
    %86 = vector.broadcast %cst_17 : f32 to vector<1x128xf32>
    %87 = arith.subf %86, %43 : vector<1x128xf32>
    %88 = arith.mulf %85, %87 : vector<1x128xf32>
    %cst_18 = arith.constant 1.200000e+01 : f32
    %89 = vector.broadcast %cst_18 : f32 to vector<1x128xf32>
    %90 = arith.addf %88, %89 : vector<1x128xf32>
    %cst_19 = arith.constant 0.000000e+00 : f32
    %91 = vector.broadcast %cst_19 : f32 to vector<1x128xf32>
    %92 = arith.maximumf %90, %91 : vector<1x128xf32>
    %cst_20 = arith.constant 1.000000e+00 : f32
    %93 = vector.broadcast %cst_20 : f32 to vector<1x128xf32>
    %94 = arith.divf %93, %92 : vector<1x128xf32>
    %cst_21 = arith.constant 0.000000e+00 : f32
    %95 = vector.broadcast %cst_21 : f32 to vector<1x128xf32>
    %96 = arith.subf %95, %85 : vector<1x128xf32>
    %97 = arith.mulf %96, %43 : vector<1x128xf32>
    %cst_22 = arith.constant 1.200000e+01 : f32
    %98 = vector.broadcast %cst_22 : f32 to vector<1x128xf32>
    %99 = arith.addf %97, %98 : vector<1x128xf32>
    %100 = arith.mulf %99, %94 : vector<1x128xf32>
    %cst_23 = arith.constant 0.000000e+00 : f32
    %101 = vector.broadcast %cst_23 : f32 to vector<1x128xf32>
    %102 = arith.maximumf %100, %101 : vector<1x128xf32>
    %cst_24 = arith.constant 1.000000e+00 : f32
    %103 = vector.broadcast %cst_24 : f32 to vector<1x128xf32>
    %104 = arith.subf %103, %43 : vector<1x128xf32>
    %105 = arith.mulf %85, %104 : vector<1x128xf32>
    %cst_25 = arith.constant 1.200000e+01 : f32
    %106 = vector.broadcast %cst_25 : f32 to vector<1x128xf32>
    %107 = arith.subf %105, %106 : vector<1x128xf32>
    %108 = arith.mulf %107, %94 : vector<1x128xf32>
    %cst_26 = arith.constant 0.000000e+00 : f32
    %109 = vector.broadcast %cst_26 : f32 to vector<1x128xf32>
    %110 = arith.maximumf %108, %109 : vector<1x128xf32>
    %111 = arith.mulf %85, %43 : vector<1x128xf32>
    %cst_27 = arith.constant 1.200000e+01 : f32
    %112 = vector.broadcast %cst_27 : f32 to vector<1x128xf32>
    %113 = arith.addf %111, %112 : vector<1x128xf32>
    %114 = arith.mulf %113, %94 : vector<1x128xf32>
    %c0_28 = arith.constant 0 : index
    %c0_29 = arith.constant 0 : index
    %c0_30 = arith.constant 0 : index
    %115 = vector.load %arg6[%c0_28, %c0_29, %c0_30] : memref<12x1x128xf32, #tpu.memory_space<vmem>>, vector<12x1x128xf32>
    %116 = vector.extract_strided_slice %115 {offsets = [0, 0, 0], sizes = [1, 1, 128], strides = [1, 1, 1]} : vector<12x1x128xf32> to vector<1x1x128xf32>
    %117 = vector.shape_cast %116 : vector<1x1x128xf32> to vector<1x128xf32>
    %118 = vector.extract_strided_slice %115 {offsets = [1, 0, 0], sizes = [1, 1, 128], strides = [1, 1, 1]} : vector<12x1x128xf32> to vector<1x1x128xf32>
    %119 = vector.shape_cast %118 : vector<1x1x128xf32> to vector<1x128xf32>
    %120 = vector.extract_strided_slice %115 {offsets = [2, 0, 0], sizes = [1, 1, 128], strides = [1, 1, 1]} : vector<12x1x128xf32> to vector<1x1x128xf32>
    %121 = vector.shape_cast %120 : vector<1x1x128xf32> to vector<1x128xf32>
    %122 = vector.extract_strided_slice %115 {offsets = [3, 0, 0], sizes = [1, 1, 128], strides = [1, 1, 1]} : vector<12x1x128xf32> to vector<1x1x128xf32>
    %123 = vector.shape_cast %122 : vector<1x1x128xf32> to vector<1x128xf32>
    %124 = vector.extract_strided_slice %115 {offsets = [4, 0, 0], sizes = [1, 1, 128], strides = [1, 1, 1]} : vector<12x1x128xf32> to vector<1x1x128xf32>
    %125 = vector.shape_cast %124 : vector<1x1x128xf32> to vector<1x128xf32>
    %126 = vector.extract_strided_slice %115 {offsets = [5, 0, 0], sizes = [1, 1, 128], strides = [1, 1, 1]} : vector<12x1x128xf32> to vector<1x1x128xf32>
    %127 = vector.shape_cast %126 : vector<1x1x128xf32> to vector<1x128xf32>
    %128 = vector.extract_strided_slice %115 {offsets = [6, 0, 0], sizes = [1, 1, 128], strides = [1, 1, 1]} : vector<12x1x128xf32> to vector<1x1x128xf32>
    %129 = vector.shape_cast %128 : vector<1x1x128xf32> to vector<1x128xf32>
    %130 = vector.extract_strided_slice %115 {offsets = [7, 0, 0], sizes = [1, 1, 128], strides = [1, 1, 1]} : vector<12x1x128xf32> to vector<1x1x128xf32>
    %131 = vector.shape_cast %130 : vector<1x1x128xf32> to vector<1x128xf32>
    %132 = vector.extract_strided_slice %115 {offsets = [8, 0, 0], sizes = [1, 1, 128], strides = [1, 1, 1]} : vector<12x1x128xf32> to vector<1x1x128xf32>
    %133 = vector.shape_cast %132 : vector<1x1x128xf32> to vector<1x128xf32>
    %134 = vector.extract_strided_slice %115 {offsets = [9, 0, 0], sizes = [1, 1, 128], strides = [1, 1, 1]} : vector<12x1x128xf32> to vector<1x1x128xf32>
    %135 = vector.shape_cast %134 : vector<1x1x128xf32> to vector<1x128xf32>
    %136 = vector.extract_strided_slice %115 {offsets = [10, 0, 0], sizes = [1, 1, 128], strides = [1, 1, 1]} : vector<12x1x128xf32> to vector<1x1x128xf32>
    %137 = vector.shape_cast %136 : vector<1x1x128xf32> to vector<1x128xf32>
    %138 = vector.extract_strided_slice %115 {offsets = [11, 0, 0], sizes = [1, 1, 128], strides = [1, 1, 1]} : vector<12x1x128xf32> to vector<1x1x128xf32>
    %139 = vector.shape_cast %138 : vector<1x1x128xf32> to vector<1x128xf32>
    %c0_31 = arith.constant 0 : index
    %c0_32 = arith.constant 0 : index
    %c0_33 = arith.constant 0 : index
    %140 = vector.load %arg2[%c0_31, %c0_32, %c0_33] : memref<8x1x128xf32, #tpu.memory_space<vmem>>, vector<1x1x128xf32>
    %141 = vector.shape_cast %140 : vector<1x1x128xf32> to vector<1x128xf32>
    %cst_34 = arith.constant 0.000000e+00 : f32
    %142 = vector.broadcast %cst_34 : f32 to vector<1x128xf32>
    %143 = arith.maximumf %141, %142 : vector<1x128xf32>
    %c0_35 = arith.constant 0 : index
    %c0_36 = arith.constant 0 : index
    %c0_37 = arith.constant 0 : index
    %144 = vector.load %arg3[%c0_35, %c0_36, %c0_37] : memref<8x1x128xf32, #tpu.memory_space<vmem>>, vector<1x1x128xf32>
    %145 = vector.shape_cast %144 : vector<1x1x128xf32> to vector<1x128xf32>
    %146 = arith.cmpf oeq, %145, %145 : vector<1x128xf32>
    %147 = math.absf %145 : vector<1x128xf32>
    %cst_38 = arith.constant 0x7F800000 : f32
    %148 = vector.broadcast %cst_38 : f32 to vector<1x128xf32>
    %149 = arith.cmpf olt, %147, %148 : vector<1x128xf32>
    %150 = arith.andi %146, %149 : vector<1x128xi1>
    %cst_39 = arith.constant 0.000000e+00 : f32
    %151 = vector.broadcast %cst_39 : f32 to vector<1x128xf32>
    %152 = arith.select %150, %145, %151 : vector<1x128xi1>, vector<1x128xf32>
    %cst_40 = arith.constant 0.000000e+00 : f32
    %153 = vector.broadcast %cst_40 : f32 to vector<1x128xf32>
    %154 = arith.maximumf %152, %153 : vector<1x128xf32>
    %155 = arith.mulf %5, %154 : vector<1x128xf32>
    %156 = arith.mulf %7, %143 : vector<1x128xf32>
    %157 = arith.mulf %117, %60 : vector<1x128xf32>
    %158 = arith.mulf %155, %157 : vector<1x128xf32>
    %159 = arith.minimumf %117, %158 : vector<1x128xf32>
    %160 = arith.subf %155, %159 : vector<1x128xf32>
    %161 = arith.mulf %119, %68 : vector<1x128xf32>
    %162 = arith.mulf %160, %161 : vector<1x128xf32>
    %cst_41 = arith.constant 0.000000e+00 : f32
    %163 = vector.broadcast %cst_41 : f32 to vector<1x128xf32>
    %164 = arith.maximumf %162, %163 : vector<1x128xf32>
    %165 = arith.subf %117, %159 : vector<1x128xf32>
    %166 = arith.subf %11, %165 : vector<1x128xf32>
    %167 = arith.subf %143, %166 : vector<1x128xf32>
    %cst_42 = arith.constant 0.000000e+00 : f32
    %168 = vector.broadcast %cst_42 : f32 to vector<1x128xf32>
    %169 = arith.maximumf %167, %168 : vector<1x128xf32>
    %170 = arith.subf %119, %164 : vector<1x128xf32>
    %171 = arith.mulf %170, %64 : vector<1x128xf32>
    %172 = arith.mulf %169, %171 : vector<1x128xf32>
    %cst_43 = arith.constant 0.000000e+00 : f32
    %173 = vector.broadcast %cst_43 : f32 to vector<1x128xf32>
    %174 = arith.maximumf %172, %173 : vector<1x128xf32>
    %175 = arith.subf %169, %174 : vector<1x128xf32>
    %176 = arith.subf %119, %164 : vector<1x128xf32>
    %177 = arith.addf %175, %176 : vector<1x128xf32>
    %178 = arith.subf %177, %15 : vector<1x128xf32>
    %cst_44 = arith.constant 0.000000e+00 : f32
    %179 = vector.broadcast %cst_44 : f32 to vector<1x128xf32>
    %180 = arith.maximumf %178, %179 : vector<1x128xf32>
    %181 = arith.subf %117, %159 : vector<1x128xf32>
    %182 = arith.addf %181, %143 : vector<1x128xf32>
    %183 = arith.minimumf %11, %182 : vector<1x128xf32>
    %cst_45 = arith.constant 0.000000e+00 : f32
    %184 = vector.broadcast %cst_45 : f32 to vector<1x128xf32>
    %185 = arith.maximumf %183, %184 : vector<1x128xf32>
    %186 = arith.subf %169, %174 : vector<1x128xf32>
    %187 = arith.subf %119, %164 : vector<1x128xf32>
    %188 = arith.addf %186, %187 : vector<1x128xf32>
    %189 = arith.minimumf %15, %188 : vector<1x128xf32>
    %cst_46 = arith.constant 0.000000e+00 : f32
    %190 = vector.broadcast %cst_46 : f32 to vector<1x128xf32>
    %191 = arith.maximumf %189, %190 : vector<1x128xf32>
    %192 = arith.mulf %121, %60 : vector<1x128xf32>
    %193 = arith.mulf %155, %192 : vector<1x128xf32>
    %194 = arith.minimumf %121, %193 : vector<1x128xf32>
    %195 = arith.subf %155, %194 : vector<1x128xf32>
    %196 = arith.minimumf %123, %195 : vector<1x128xf32>
    %cst_47 = arith.constant 0.000000e+00 : f32
    %197 = vector.broadcast %cst_47 : f32 to vector<1x128xf32>
    %198 = arith.maximumf %196, %197 : vector<1x128xf32>
    %199 = arith.subf %155, %194 : vector<1x128xf32>
    %200 = arith.subf %199, %198 : vector<1x128xf32>
    %201 = arith.mulf %125, %68 : vector<1x128xf32>
    %202 = arith.mulf %200, %201 : vector<1x128xf32>
    %cst_48 = arith.constant 0.000000e+00 : f32
    %203 = vector.broadcast %cst_48 : f32 to vector<1x128xf32>
    %204 = arith.maximumf %202, %203 : vector<1x128xf32>
    %205 = arith.subf %125, %204 : vector<1x128xf32>
    %cst_49 = arith.constant 0.000000e+00 : f32
    %206 = vector.broadcast %cst_49 : f32 to vector<1x128xf32>
    %207 = arith.maximumf %205, %206 : vector<1x128xf32>
    %208 = arith.mulf %174, %9 : vector<1x128xf32>
    %209 = arith.mulf %180, %9 : vector<1x128xf32>
    %210 = arith.addf %121, %123 : vector<1x128xf32>
    %211 = arith.subf %210, %194 : vector<1x128xf32>
    %212 = arith.subf %211, %198 : vector<1x128xf32>
    %213 = arith.addf %143, %212 : vector<1x128xf32>
    %214 = arith.subf %213, %55 : vector<1x128xf32>
    %cst_50 = arith.constant 0.000000e+00 : f32
    %215 = vector.broadcast %cst_50 : f32 to vector<1x128xf32>
    %216 = arith.maximumf %214, %215 : vector<1x128xf32>
    %217 = arith.mulf %216, %46 : vector<1x128xf32>
    %218 = arith.subf %121, %194 : vector<1x128xf32>
    %219 = arith.addf %218, %143 : vector<1x128xf32>
    %220 = arith.minimumf %11, %219 : vector<1x128xf32>
    %cst_51 = arith.constant 0.000000e+00 : f32
    %221 = vector.broadcast %cst_51 : f32 to vector<1x128xf32>
    %222 = arith.maximumf %220, %221 : vector<1x128xf32>
    %223 = arith.addf %121, %123 : vector<1x128xf32>
    %224 = arith.subf %223, %194 : vector<1x128xf32>
    %225 = arith.subf %224, %198 : vector<1x128xf32>
    %226 = arith.addf %143, %225 : vector<1x128xf32>
    %227 = arith.subf %226, %222 : vector<1x128xf32>
    %228 = arith.minimumf %13, %227 : vector<1x128xf32>
    %cst_52 = arith.constant 0.000000e+00 : f32
    %229 = vector.broadcast %cst_52 : f32 to vector<1x128xf32>
    %230 = arith.maximumf %228, %229 : vector<1x128xf32>
    %231 = arith.mulf %230, %29 : vector<1x128xf32>
    %232 = arith.subf %230, %231 : vector<1x128xf32>
    %cst_53 = arith.constant 0.000000e+00 : f32
    %233 = vector.broadcast %cst_53 : f32 to vector<1x128xf32>
    %234 = arith.maximumf %232, %233 : vector<1x128xf32>
    %235 = arith.addf %127, %129 : vector<1x128xf32>
    %236 = arith.addf %235, %207 : vector<1x128xf32>
    %237 = arith.mulf %236, %72 : vector<1x128xf32>
    %cst_54 = arith.constant 1.000000e+00 : f32
    %238 = vector.broadcast %cst_54 : f32 to vector<1x128xf32>
    %239 = arith.subf %238, %237 : vector<1x128xf32>
    %cst_55 = arith.constant 0.000000e+00 : f32
    %240 = vector.broadcast %cst_55 : f32 to vector<1x128xf32>
    %241 = arith.maximumf %239, %240 : vector<1x128xf32>
    %cst_56 = arith.constant 0.000000e+00 : f32
    %242 = vector.broadcast %cst_56 : f32 to vector<1x128xf32>
    %243 = arith.cmpf ogt, %241, %242 : vector<1x128xf32>
    %cst_57 = arith.constant 0.000000e+00 : f32
    %244 = vector.broadcast %cst_57 : f32 to vector<1x128xf32>
    %245 = arith.cmpf ogt, %241, %244 : vector<1x128xf32>
    %cst_58 = arith.constant 1.000000e+00 : f32
    %246 = vector.broadcast %cst_58 : f32 to vector<1x128xf32>
    %247 = arith.select %245, %241, %246 : vector<1x128xi1>, vector<1x128xf32>
    %248 = math.log %247 : vector<1x128xf32>
    %249 = arith.mulf %27, %248 : vector<1x128xf32>
    %250 = math.exp %249 : vector<1x128xf32>
    %cst_59 = arith.constant 0.000000e+00 : f32
    %251 = vector.broadcast %cst_59 : f32 to vector<1x128xf32>
    %252 = arith.select %243, %250, %251 : vector<1x128xi1>, vector<1x128xf32>
    %253 = arith.mulf %25, %252 : vector<1x128xf32>
    %cst_60 = arith.constant 1.000000e+00 : f32
    %254 = vector.broadcast %cst_60 : f32 to vector<1x128xf32>
    %255 = arith.addf %254, %253 : vector<1x128xf32>
    %256 = arith.mulf %53, %255 : vector<1x128xf32>
    %257 = arith.mulf %256, %234 : vector<1x128xf32>
    %258 = arith.mulf %257, %62 : vector<1x128xf32>
    %259 = arith.addf %127, %129 : vector<1x128xf32>
    %260 = arith.addf %259, %207 : vector<1x128xf32>
    %261 = arith.subf %57, %260 : vector<1x128xf32>
    %262 = arith.minimumf %258, %261 : vector<1x128xf32>
    %cst_61 = arith.constant 0.000000e+00 : f32
    %263 = vector.broadcast %cst_61 : f32 to vector<1x128xf32>
    %264 = arith.maximumf %262, %263 : vector<1x128xf32>
    %265 = arith.addf %127, %129 : vector<1x128xf32>
    %266 = arith.subf %56, %265 : vector<1x128xf32>
    %267 = arith.subf %15, %207 : vector<1x128xf32>
    %268 = arith.subf %264, %267 : vector<1x128xf32>
    %269 = arith.mulf %264, %23 : vector<1x128xf32>
    %270 = arith.maximumf %268, %269 : vector<1x128xf32>
    %271 = arith.minimumf %266, %270 : vector<1x128xf32>
    %cst_62 = arith.constant 0.000000e+00 : f32
    %272 = vector.broadcast %cst_62 : f32 to vector<1x128xf32>
    %273 = arith.maximumf %271, %272 : vector<1x128xf32>
    %274 = arith.subf %264, %273 : vector<1x128xf32>
    %cst_63 = arith.constant 0.000000e+00 : f32
    %275 = vector.broadcast %cst_63 : f32 to vector<1x128xf32>
    %276 = arith.maximumf %274, %275 : vector<1x128xf32>
    %277 = arith.mulf %129, %66 : vector<1x128xf32>
    %cst_64 = arith.constant 1.000000e+00 : f32
    %278 = vector.broadcast %cst_64 : f32 to vector<1x128xf32>
    %279 = arith.subf %278, %277 : vector<1x128xf32>
    %cst_65 = arith.constant 2.000000e+00 : f32
    %280 = vector.broadcast %cst_65 : f32 to vector<1x128xf32>
    %281 = arith.mulf %280, %279 : vector<1x128xf32>
    %282 = arith.divf %281, %279 : vector<1x128xf32>
    %283 = arith.mulf %77, %282 : vector<1x128xf32>
    %cst_66 = arith.constant 0.000000e+00 : f32
    %cst_67 = arith.constant 1.000000e+00 : f32
    %284 = vector.broadcast %cst_66 : f32 to vector<1x128xf32>
    %285 = arith.maximumf %284, %283 : vector<1x128xf32>
    %286 = vector.broadcast %cst_67 : f32 to vector<1x128xf32>
    %287 = arith.minimumf %286, %285 : vector<1x128xf32>
    %288 = arith.subf %19, %129 : vector<1x128xf32>
    %289 = arith.subf %17, %127 : vector<1x128xf32>
    %290 = arith.subf %273, %289 : vector<1x128xf32>
    %291 = arith.mulf %287, %273 : vector<1x128xf32>
    %292 = arith.maximumf %290, %291 : vector<1x128xf32>
    %293 = arith.minimumf %288, %292 : vector<1x128xf32>
    %cst_68 = arith.constant 0.000000e+00 : f32
    %294 = vector.broadcast %cst_68 : f32 to vector<1x128xf32>
    %295 = arith.maximumf %293, %294 : vector<1x128xf32>
    %296 = arith.subf %273, %295 : vector<1x128xf32>
    %cst_69 = arith.constant 0.000000e+00 : f32
    %297 = vector.broadcast %cst_69 : f32 to vector<1x128xf32>
    %298 = arith.maximumf %296, %297 : vector<1x128xf32>
    %299 = arith.addf %207, %276 : vector<1x128xf32>
    %300 = arith.addf %127, %298 : vector<1x128xf32>
    %301 = arith.addf %129, %295 : vector<1x128xf32>
    %302 = arith.mulf %300, %31 : vector<1x128xf32>
    %303 = arith.subf %300, %302 : vector<1x128xf32>
    %cst_70 = arith.constant 0.000000e+00 : f32
    %304 = vector.broadcast %cst_70 : f32 to vector<1x128xf32>
    %305 = arith.maximumf %303, %304 : vector<1x128xf32>
    %306 = arith.mulf %301, %33 : vector<1x128xf32>
    %307 = arith.subf %301, %306 : vector<1x128xf32>
    %cst_71 = arith.constant 0.000000e+00 : f32
    %308 = vector.broadcast %cst_71 : f32 to vector<1x128xf32>
    %309 = arith.maximumf %307, %308 : vector<1x128xf32>
    %310 = arith.mulf %222, %60 : vector<1x128xf32>
    %311 = arith.mulf %234, %62 : vector<1x128xf32>
    %312 = arith.addf %222, %234 : vector<1x128xf32>
    %313 = arith.mulf %312, %70 : vector<1x128xf32>
    %314 = arith.cmpf olt, %310, %311 : vector<1x128xf32>
    %315 = arith.mulf %11, %313 : vector<1x128xf32>
    %316 = arith.select %314, %315, %222 : vector<1x128xi1>, vector<1x128xf32>
    %317 = arith.mulf %13, %313 : vector<1x128xf32>
    %318 = arith.select %314, %317, %234 : vector<1x128xi1>, vector<1x128xf32>
    %319 = arith.addf %300, %301 : vector<1x128xf32>
    %320 = arith.subf %319, %58 : vector<1x128xf32>
    %321 = arith.addf %320, %299 : vector<1x128xf32>
    %322 = arith.mulf %321, %76 : vector<1x128xf32>
    %cst_72 = arith.constant 0.000000e+00 : f32
    %323 = vector.broadcast %cst_72 : f32 to vector<1x128xf32>
    %324 = arith.maximumf %322, %323 : vector<1x128xf32>
    %325 = arith.mulf %299, %64 : vector<1x128xf32>
    %326 = arith.cmpf olt, %325, %324 : vector<1x128xf32>
    %327 = arith.mulf %15, %324 : vector<1x128xf32>
    %328 = arith.select %326, %327, %299 : vector<1x128xi1>, vector<1x128xf32>
    %329 = arith.subf %328, %299 : vector<1x128xf32>
    %330 = arith.subf %300, %329 : vector<1x128xf32>
    %cst_73 = arith.constant 0.000000e+00 : f32
    %331 = vector.broadcast %cst_73 : f32 to vector<1x128xf32>
    %332 = arith.maximumf %330, %331 : vector<1x128xf32>
    %333 = arith.select %326, %332, %305 : vector<1x128xi1>, vector<1x128xf32>
    %334 = arith.subf %328, %299 : vector<1x128xf32>
    %335 = arith.subf %334, %300 : vector<1x128xf32>
    %cst_74 = arith.constant 0.000000e+00 : f32
    %336 = vector.broadcast %cst_74 : f32 to vector<1x128xf32>
    %337 = arith.maximumf %335, %336 : vector<1x128xf32>
    %338 = arith.subf %301, %337 : vector<1x128xf32>
    %339 = arith.select %326, %338, %309 : vector<1x128xi1>, vector<1x128xf32>
    %340 = arith.addf %131, %133 : vector<1x128xf32>
    %341 = arith.addf %340, %135 : vector<1x128xf32>
    %342 = arith.addf %341, %137 : vector<1x128xf32>
    %343 = arith.addf %208, %209 : vector<1x128xf32>
    %344 = arith.mulf %343, %9 : vector<1x128xf32>
    %345 = arith.addf %156, %344 : vector<1x128xf32>
    %346 = arith.mulf %217, %48 : vector<1x128xf32>
    %347 = arith.addf %345, %346 : vector<1x128xf32>
    %cst_75 = arith.constant 1.000000e+03 : f32
    %348 = vector.broadcast %cst_75 : f32 to vector<1x128xf32>
    %349 = arith.mulf %347, %348 : vector<1x128xf32>
    %350 = arith.mulf %35, %133 : vector<1x128xf32>
    %351 = arith.mulf %79, %231 : vector<1x128xf32>
    %352 = arith.mulf %351, %50 : vector<1x128xf32>
    %353 = arith.addf %350, %352 : vector<1x128xf32>
    %cst_76 = arith.constant 0.000000e+00 : f32
    %354 = vector.broadcast %cst_76 : f32 to vector<1x128xf32>
    %355 = arith.maximumf %353, %354 : vector<1x128xf32>
    %356 = arith.mulf %37, %135 : vector<1x128xf32>
    %357 = arith.mulf %81, %302 : vector<1x128xf32>
    %358 = arith.mulf %357, %50 : vector<1x128xf32>
    %359 = arith.addf %356, %358 : vector<1x128xf32>
    %cst_77 = arith.constant 0.000000e+00 : f32
    %360 = vector.broadcast %cst_77 : f32 to vector<1x128xf32>
    %361 = arith.maximumf %359, %360 : vector<1x128xf32>
    %362 = arith.mulf %39, %137 : vector<1x128xf32>
    %363 = arith.mulf %83, %306 : vector<1x128xf32>
    %364 = arith.mulf %363, %50 : vector<1x128xf32>
    %365 = arith.addf %362, %364 : vector<1x128xf32>
    %cst_78 = arith.constant 0.000000e+00 : f32
    %366 = vector.broadcast %cst_78 : f32 to vector<1x128xf32>
    %367 = arith.maximumf %365, %366 : vector<1x128xf32>
    %368 = arith.addf %349, %355 : vector<1x128xf32>
    %369 = arith.addf %368, %361 : vector<1x128xf32>
    %370 = arith.addf %369, %367 : vector<1x128xf32>
    %371 = arith.mulf %114, %342 : vector<1x128xf32>
    %372 = arith.mulf %102, %370 : vector<1x128xf32>
    %373 = arith.addf %371, %372 : vector<1x128xf32>
    %374 = arith.mulf %110, %139 : vector<1x128xf32>
    %375 = arith.addf %373, %374 : vector<1x128xf32>
    %c1 = arith.constant 1 : index
    %c0_79 = arith.constant 0 : index
    %c0_80 = arith.constant 0 : index
    %376 = vector.load %arg2[%c1, %c0_79, %c0_80] : memref<8x1x128xf32, #tpu.memory_space<vmem>>, vector<1x1x128xf32>
    %377 = vector.shape_cast %376 : vector<1x1x128xf32> to vector<1x128xf32>
    %cst_81 = arith.constant 0.000000e+00 : f32
    %378 = vector.broadcast %cst_81 : f32 to vector<1x128xf32>
    %379 = arith.maximumf %377, %378 : vector<1x128xf32>
    %c1_82 = arith.constant 1 : index
    %c0_83 = arith.constant 0 : index
    %c0_84 = arith.constant 0 : index
    %380 = vector.load %arg3[%c1_82, %c0_83, %c0_84] : memref<8x1x128xf32, #tpu.memory_space<vmem>>, vector<1x1x128xf32>
    %381 = vector.shape_cast %380 : vector<1x1x128xf32> to vector<1x128xf32>
    %382 = arith.cmpf oeq, %381, %381 : vector<1x128xf32>
    %383 = math.absf %381 : vector<1x128xf32>
    %cst_85 = arith.constant 0x7F800000 : f32
    %384 = vector.broadcast %cst_85 : f32 to vector<1x128xf32>
    %385 = arith.cmpf olt, %383, %384 : vector<1x128xf32>
    %386 = arith.andi %382, %385 : vector<1x128xi1>
    %cst_86 = arith.constant 0.000000e+00 : f32
    %387 = vector.broadcast %cst_86 : f32 to vector<1x128xf32>
    %388 = arith.select %386, %381, %387 : vector<1x128xi1>, vector<1x128xf32>
    %cst_87 = arith.constant 0.000000e+00 : f32
    %389 = vector.broadcast %cst_87 : f32 to vector<1x128xf32>
    %390 = arith.maximumf %388, %389 : vector<1x128xf32>
    %391 = arith.mulf %5, %390 : vector<1x128xf32>
    %392 = arith.mulf %7, %379 : vector<1x128xf32>
    %393 = arith.mulf %185, %60 : vector<1x128xf32>
    %394 = arith.mulf %391, %393 : vector<1x128xf32>
    %395 = arith.minimumf %185, %394 : vector<1x128xf32>
    %396 = arith.subf %391, %395 : vector<1x128xf32>
    %397 = arith.mulf %191, %68 : vector<1x128xf32>
    %398 = arith.mulf %396, %397 : vector<1x128xf32>
    %cst_88 = arith.constant 0.000000e+00 : f32
    %399 = vector.broadcast %cst_88 : f32 to vector<1x128xf32>
    %400 = arith.maximumf %398, %399 : vector<1x128xf32>
    %401 = arith.subf %185, %395 : vector<1x128xf32>
    %402 = arith.subf %11, %401 : vector<1x128xf32>
    %403 = arith.subf %379, %402 : vector<1x128xf32>
    %cst_89 = arith.constant 0.000000e+00 : f32
    %404 = vector.broadcast %cst_89 : f32 to vector<1x128xf32>
    %405 = arith.maximumf %403, %404 : vector<1x128xf32>
    %406 = arith.subf %191, %400 : vector<1x128xf32>
    %407 = arith.mulf %406, %64 : vector<1x128xf32>
    %408 = arith.mulf %405, %407 : vector<1x128xf32>
    %cst_90 = arith.constant 0.000000e+00 : f32
    %409 = vector.broadcast %cst_90 : f32 to vector<1x128xf32>
    %410 = arith.maximumf %408, %409 : vector<1x128xf32>
    %411 = arith.subf %405, %410 : vector<1x128xf32>
    %412 = arith.subf %191, %400 : vector<1x128xf32>
    %413 = arith.addf %411, %412 : vector<1x128xf32>
    %414 = arith.subf %413, %15 : vector<1x128xf32>
    %cst_91 = arith.constant 0.000000e+00 : f32
    %415 = vector.broadcast %cst_91 : f32 to vector<1x128xf32>
    %416 = arith.maximumf %414, %415 : vector<1x128xf32>
    %417 = arith.subf %185, %395 : vector<1x128xf32>
    %418 = arith.addf %417, %379 : vector<1x128xf32>
    %419 = arith.minimumf %11, %418 : vector<1x128xf32>
    %cst_92 = arith.constant 0.000000e+00 : f32
    %420 = vector.broadcast %cst_92 : f32 to vector<1x128xf32>
    %421 = arith.maximumf %419, %420 : vector<1x128xf32>
    %422 = arith.subf %405, %410 : vector<1x128xf32>
    %423 = arith.subf %191, %400 : vector<1x128xf32>
    %424 = arith.addf %422, %423 : vector<1x128xf32>
    %425 = arith.minimumf %15, %424 : vector<1x128xf32>
    %cst_93 = arith.constant 0.000000e+00 : f32
    %426 = vector.broadcast %cst_93 : f32 to vector<1x128xf32>
    %427 = arith.maximumf %425, %426 : vector<1x128xf32>
    %428 = arith.mulf %316, %60 : vector<1x128xf32>
    %429 = arith.mulf %391, %428 : vector<1x128xf32>
    %430 = arith.minimumf %316, %429 : vector<1x128xf32>
    %431 = arith.subf %391, %430 : vector<1x128xf32>
    %432 = arith.minimumf %318, %431 : vector<1x128xf32>
    %cst_94 = arith.constant 0.000000e+00 : f32
    %433 = vector.broadcast %cst_94 : f32 to vector<1x128xf32>
    %434 = arith.maximumf %432, %433 : vector<1x128xf32>
    %435 = arith.subf %391, %430 : vector<1x128xf32>
    %436 = arith.subf %435, %434 : vector<1x128xf32>
    %437 = arith.mulf %328, %68 : vector<1x128xf32>
    %438 = arith.mulf %436, %437 : vector<1x128xf32>
    %cst_95 = arith.constant 0.000000e+00 : f32
    %439 = vector.broadcast %cst_95 : f32 to vector<1x128xf32>
    %440 = arith.maximumf %438, %439 : vector<1x128xf32>
    %441 = arith.subf %328, %440 : vector<1x128xf32>
    %cst_96 = arith.constant 0.000000e+00 : f32
    %442 = vector.broadcast %cst_96 : f32 to vector<1x128xf32>
    %443 = arith.maximumf %441, %442 : vector<1x128xf32>
    %444 = arith.mulf %410, %9 : vector<1x128xf32>
    %445 = arith.mulf %416, %9 : vector<1x128xf32>
    %446 = arith.addf %316, %318 : vector<1x128xf32>
    %447 = arith.subf %446, %430 : vector<1x128xf32>
    %448 = arith.subf %447, %434 : vector<1x128xf32>
    %449 = arith.addf %379, %448 : vector<1x128xf32>
    %450 = arith.subf %449, %55 : vector<1x128xf32>
    %cst_97 = arith.constant 0.000000e+00 : f32
    %451 = vector.broadcast %cst_97 : f32 to vector<1x128xf32>
    %452 = arith.maximumf %450, %451 : vector<1x128xf32>
    %453 = arith.mulf %452, %46 : vector<1x128xf32>
    %454 = arith.subf %316, %430 : vector<1x128xf32>
    %455 = arith.addf %454, %379 : vector<1x128xf32>
    %456 = arith.minimumf %11, %455 : vector<1x128xf32>
    %cst_98 = arith.constant 0.000000e+00 : f32
    %457 = vector.broadcast %cst_98 : f32 to vector<1x128xf32>
    %458 = arith.maximumf %456, %457 : vector<1x128xf32>
    %459 = arith.addf %316, %318 : vector<1x128xf32>
    %460 = arith.subf %459, %430 : vector<1x128xf32>
    %461 = arith.subf %460, %434 : vector<1x128xf32>
    %462 = arith.addf %379, %461 : vector<1x128xf32>
    %463 = arith.subf %462, %458 : vector<1x128xf32>
    %464 = arith.minimumf %13, %463 : vector<1x128xf32>
    %cst_99 = arith.constant 0.000000e+00 : f32
    %465 = vector.broadcast %cst_99 : f32 to vector<1x128xf32>
    %466 = arith.maximumf %464, %465 : vector<1x128xf32>
    %467 = arith.mulf %466, %29 : vector<1x128xf32>
    %468 = arith.subf %466, %467 : vector<1x128xf32>
    %cst_100 = arith.constant 0.000000e+00 : f32
    %469 = vector.broadcast %cst_100 : f32 to vector<1x128xf32>
    %470 = arith.maximumf %468, %469 : vector<1x128xf32>
    %471 = arith.addf %333, %339 : vector<1x128xf32>
    %472 = arith.addf %471, %443 : vector<1x128xf32>
    %473 = arith.mulf %472, %72 : vector<1x128xf32>
    %cst_101 = arith.constant 1.000000e+00 : f32
    %474 = vector.broadcast %cst_101 : f32 to vector<1x128xf32>
    %475 = arith.subf %474, %473 : vector<1x128xf32>
    %cst_102 = arith.constant 0.000000e+00 : f32
    %476 = vector.broadcast %cst_102 : f32 to vector<1x128xf32>
    %477 = arith.maximumf %475, %476 : vector<1x128xf32>
    %cst_103 = arith.constant 0.000000e+00 : f32
    %478 = vector.broadcast %cst_103 : f32 to vector<1x128xf32>
    %479 = arith.cmpf ogt, %477, %478 : vector<1x128xf32>
    %cst_104 = arith.constant 0.000000e+00 : f32
    %480 = vector.broadcast %cst_104 : f32 to vector<1x128xf32>
    %481 = arith.cmpf ogt, %477, %480 : vector<1x128xf32>
    %cst_105 = arith.constant 1.000000e+00 : f32
    %482 = vector.broadcast %cst_105 : f32 to vector<1x128xf32>
    %483 = arith.select %481, %477, %482 : vector<1x128xi1>, vector<1x128xf32>
    %484 = math.log %483 : vector<1x128xf32>
    %485 = arith.mulf %27, %484 : vector<1x128xf32>
    %486 = math.exp %485 : vector<1x128xf32>
    %cst_106 = arith.constant 0.000000e+00 : f32
    %487 = vector.broadcast %cst_106 : f32 to vector<1x128xf32>
    %488 = arith.select %479, %486, %487 : vector<1x128xi1>, vector<1x128xf32>
    %489 = arith.mulf %25, %488 : vector<1x128xf32>
    %cst_107 = arith.constant 1.000000e+00 : f32
    %490 = vector.broadcast %cst_107 : f32 to vector<1x128xf32>
    %491 = arith.addf %490, %489 : vector<1x128xf32>
    %492 = arith.mulf %53, %491 : vector<1x128xf32>
    %493 = arith.mulf %492, %470 : vector<1x128xf32>
    %494 = arith.mulf %493, %62 : vector<1x128xf32>
    %495 = arith.addf %333, %339 : vector<1x128xf32>
    %496 = arith.addf %495, %443 : vector<1x128xf32>
    %497 = arith.subf %57, %496 : vector<1x128xf32>
    %498 = arith.minimumf %494, %497 : vector<1x128xf32>
    %cst_108 = arith.constant 0.000000e+00 : f32
    %499 = vector.broadcast %cst_108 : f32 to vector<1x128xf32>
    %500 = arith.maximumf %498, %499 : vector<1x128xf32>
    %501 = arith.addf %333, %339 : vector<1x128xf32>
    %502 = arith.subf %56, %501 : vector<1x128xf32>
    %503 = arith.subf %15, %443 : vector<1x128xf32>
    %504 = arith.subf %500, %503 : vector<1x128xf32>
    %505 = arith.mulf %500, %23 : vector<1x128xf32>
    %506 = arith.maximumf %504, %505 : vector<1x128xf32>
    %507 = arith.minimumf %502, %506 : vector<1x128xf32>
    %cst_109 = arith.constant 0.000000e+00 : f32
    %508 = vector.broadcast %cst_109 : f32 to vector<1x128xf32>
    %509 = arith.maximumf %507, %508 : vector<1x128xf32>
    %510 = arith.subf %500, %509 : vector<1x128xf32>
    %cst_110 = arith.constant 0.000000e+00 : f32
    %511 = vector.broadcast %cst_110 : f32 to vector<1x128xf32>
    %512 = arith.maximumf %510, %511 : vector<1x128xf32>
    %513 = arith.mulf %339, %66 : vector<1x128xf32>
    %cst_111 = arith.constant 1.000000e+00 : f32
    %514 = vector.broadcast %cst_111 : f32 to vector<1x128xf32>
    %515 = arith.subf %514, %513 : vector<1x128xf32>
    %cst_112 = arith.constant 2.000000e+00 : f32
    %516 = vector.broadcast %cst_112 : f32 to vector<1x128xf32>
    %517 = arith.mulf %516, %515 : vector<1x128xf32>
    %518 = arith.divf %517, %515 : vector<1x128xf32>
    %519 = arith.mulf %77, %518 : vector<1x128xf32>
    %cst_113 = arith.constant 0.000000e+00 : f32
    %cst_114 = arith.constant 1.000000e+00 : f32
    %520 = vector.broadcast %cst_113 : f32 to vector<1x128xf32>
    %521 = arith.maximumf %520, %519 : vector<1x128xf32>
    %522 = vector.broadcast %cst_114 : f32 to vector<1x128xf32>
    %523 = arith.minimumf %522, %521 : vector<1x128xf32>
    %524 = arith.subf %19, %339 : vector<1x128xf32>
    %525 = arith.subf %17, %333 : vector<1x128xf32>
    %526 = arith.subf %509, %525 : vector<1x128xf32>
    %527 = arith.mulf %523, %509 : vector<1x128xf32>
    %528 = arith.maximumf %526, %527 : vector<1x128xf32>
    %529 = arith.minimumf %524, %528 : vector<1x128xf32>
    %cst_115 = arith.constant 0.000000e+00 : f32
    %530 = vector.broadcast %cst_115 : f32 to vector<1x128xf32>
    %531 = arith.maximumf %529, %530 : vector<1x128xf32>
    %532 = arith.subf %509, %531 : vector<1x128xf32>
    %cst_116 = arith.constant 0.000000e+00 : f32
    %533 = vector.broadcast %cst_116 : f32 to vector<1x128xf32>
    %534 = arith.maximumf %532, %533 : vector<1x128xf32>
    %535 = arith.addf %443, %512 : vector<1x128xf32>
    %536 = arith.addf %333, %534 : vector<1x128xf32>
    %537 = arith.addf %339, %531 : vector<1x128xf32>
    %538 = arith.mulf %536, %31 : vector<1x128xf32>
    %539 = arith.subf %536, %538 : vector<1x128xf32>
    %cst_117 = arith.constant 0.000000e+00 : f32
    %540 = vector.broadcast %cst_117 : f32 to vector<1x128xf32>
    %541 = arith.maximumf %539, %540 : vector<1x128xf32>
    %542 = arith.mulf %537, %33 : vector<1x128xf32>
    %543 = arith.subf %537, %542 : vector<1x128xf32>
    %cst_118 = arith.constant 0.000000e+00 : f32
    %544 = vector.broadcast %cst_118 : f32 to vector<1x128xf32>
    %545 = arith.maximumf %543, %544 : vector<1x128xf32>
    %546 = arith.mulf %458, %60 : vector<1x128xf32>
    %547 = arith.mulf %470, %62 : vector<1x128xf32>
    %548 = arith.addf %458, %470 : vector<1x128xf32>
    %549 = arith.mulf %548, %70 : vector<1x128xf32>
    %550 = arith.cmpf olt, %546, %547 : vector<1x128xf32>
    %551 = arith.mulf %11, %549 : vector<1x128xf32>
    %552 = arith.select %550, %551, %458 : vector<1x128xi1>, vector<1x128xf32>
    %553 = arith.mulf %13, %549 : vector<1x128xf32>
    %554 = arith.select %550, %553, %470 : vector<1x128xi1>, vector<1x128xf32>
    %555 = arith.addf %536, %537 : vector<1x128xf32>
    %556 = arith.subf %555, %58 : vector<1x128xf32>
    %557 = arith.addf %556, %535 : vector<1x128xf32>
    %558 = arith.mulf %557, %76 : vector<1x128xf32>
    %cst_119 = arith.constant 0.000000e+00 : f32
    %559 = vector.broadcast %cst_119 : f32 to vector<1x128xf32>
    %560 = arith.maximumf %558, %559 : vector<1x128xf32>
    %561 = arith.mulf %535, %64 : vector<1x128xf32>
    %562 = arith.cmpf olt, %561, %560 : vector<1x128xf32>
    %563 = arith.mulf %15, %560 : vector<1x128xf32>
    %564 = arith.select %562, %563, %535 : vector<1x128xi1>, vector<1x128xf32>
    %565 = arith.subf %564, %535 : vector<1x128xf32>
    %566 = arith.subf %536, %565 : vector<1x128xf32>
    %cst_120 = arith.constant 0.000000e+00 : f32
    %567 = vector.broadcast %cst_120 : f32 to vector<1x128xf32>
    %568 = arith.maximumf %566, %567 : vector<1x128xf32>
    %569 = arith.select %562, %568, %541 : vector<1x128xi1>, vector<1x128xf32>
    %570 = arith.subf %564, %535 : vector<1x128xf32>
    %571 = arith.subf %570, %536 : vector<1x128xf32>
    %cst_121 = arith.constant 0.000000e+00 : f32
    %572 = vector.broadcast %cst_121 : f32 to vector<1x128xf32>
    %573 = arith.maximumf %571, %572 : vector<1x128xf32>
    %574 = arith.subf %537, %573 : vector<1x128xf32>
    %575 = arith.select %562, %574, %545 : vector<1x128xi1>, vector<1x128xf32>
    %576 = arith.addf %349, %355 : vector<1x128xf32>
    %577 = arith.addf %576, %361 : vector<1x128xf32>
    %578 = arith.addf %577, %367 : vector<1x128xf32>
    %579 = arith.addf %444, %445 : vector<1x128xf32>
    %580 = arith.mulf %579, %9 : vector<1x128xf32>
    %581 = arith.addf %392, %580 : vector<1x128xf32>
    %582 = arith.mulf %453, %48 : vector<1x128xf32>
    %583 = arith.addf %581, %582 : vector<1x128xf32>
    %cst_122 = arith.constant 1.000000e+03 : f32
    %584 = vector.broadcast %cst_122 : f32 to vector<1x128xf32>
    %585 = arith.mulf %583, %584 : vector<1x128xf32>
    %586 = arith.mulf %35, %355 : vector<1x128xf32>
    %587 = arith.mulf %79, %467 : vector<1x128xf32>
    %588 = arith.mulf %587, %50 : vector<1x128xf32>
    %589 = arith.addf %586, %588 : vector<1x128xf32>
    %cst_123 = arith.constant 0.000000e+00 : f32
    %590 = vector.broadcast %cst_123 : f32 to vector<1x128xf32>
    %591 = arith.maximumf %589, %590 : vector<1x128xf32>
    %592 = arith.mulf %37, %361 : vector<1x128xf32>
    %593 = arith.mulf %81, %538 : vector<1x128xf32>
    %594 = arith.mulf %593, %50 : vector<1x128xf32>
    %595 = arith.addf %592, %594 : vector<1x128xf32>
    %cst_124 = arith.constant 0.000000e+00 : f32
    %596 = vector.broadcast %cst_124 : f32 to vector<1x128xf32>
    %597 = arith.maximumf %595, %596 : vector<1x128xf32>
    %598 = arith.mulf %39, %367 : vector<1x128xf32>
    %599 = arith.mulf %83, %542 : vector<1x128xf32>
    %600 = arith.mulf %599, %50 : vector<1x128xf32>
    %601 = arith.addf %598, %600 : vector<1x128xf32>
    %cst_125 = arith.constant 0.000000e+00 : f32
    %602 = vector.broadcast %cst_125 : f32 to vector<1x128xf32>
    %603 = arith.maximumf %601, %602 : vector<1x128xf32>
    %604 = arith.addf %585, %591 : vector<1x128xf32>
    %605 = arith.addf %604, %597 : vector<1x128xf32>
    %606 = arith.addf %605, %603 : vector<1x128xf32>
    %607 = arith.mulf %114, %578 : vector<1x128xf32>
    %608 = arith.mulf %102, %606 : vector<1x128xf32>
    %609 = arith.addf %607, %608 : vector<1x128xf32>
    %610 = arith.mulf %110, %375 : vector<1x128xf32>
    %611 = arith.addf %609, %610 : vector<1x128xf32>
    %c2 = arith.constant 2 : index
    %c0_126 = arith.constant 0 : index
    %c0_127 = arith.constant 0 : index
    %612 = vector.load %arg2[%c2, %c0_126, %c0_127] : memref<8x1x128xf32, #tpu.memory_space<vmem>>, vector<1x1x128xf32>
    %613 = vector.shape_cast %612 : vector<1x1x128xf32> to vector<1x128xf32>
    %cst_128 = arith.constant 0.000000e+00 : f32
    %614 = vector.broadcast %cst_128 : f32 to vector<1x128xf32>
    %615 = arith.maximumf %613, %614 : vector<1x128xf32>
    %c2_129 = arith.constant 2 : index
    %c0_130 = arith.constant 0 : index
    %c0_131 = arith.constant 0 : index
    %616 = vector.load %arg3[%c2_129, %c0_130, %c0_131] : memref<8x1x128xf32, #tpu.memory_space<vmem>>, vector<1x1x128xf32>
    %617 = vector.shape_cast %616 : vector<1x1x128xf32> to vector<1x128xf32>
    %618 = arith.cmpf oeq, %617, %617 : vector<1x128xf32>
    %619 = math.absf %617 : vector<1x128xf32>
    %cst_132 = arith.constant 0x7F800000 : f32
    %620 = vector.broadcast %cst_132 : f32 to vector<1x128xf32>
    %621 = arith.cmpf olt, %619, %620 : vector<1x128xf32>
    %622 = arith.andi %618, %621 : vector<1x128xi1>
    %cst_133 = arith.constant 0.000000e+00 : f32
    %623 = vector.broadcast %cst_133 : f32 to vector<1x128xf32>
    %624 = arith.select %622, %617, %623 : vector<1x128xi1>, vector<1x128xf32>
    %cst_134 = arith.constant 0.000000e+00 : f32
    %625 = vector.broadcast %cst_134 : f32 to vector<1x128xf32>
    %626 = arith.maximumf %624, %625 : vector<1x128xf32>
    %627 = arith.mulf %5, %626 : vector<1x128xf32>
    %628 = arith.mulf %7, %615 : vector<1x128xf32>
    %629 = arith.mulf %421, %60 : vector<1x128xf32>
    %630 = arith.mulf %627, %629 : vector<1x128xf32>
    %631 = arith.minimumf %421, %630 : vector<1x128xf32>
    %632 = arith.subf %627, %631 : vector<1x128xf32>
    %633 = arith.mulf %427, %68 : vector<1x128xf32>
    %634 = arith.mulf %632, %633 : vector<1x128xf32>
    %cst_135 = arith.constant 0.000000e+00 : f32
    %635 = vector.broadcast %cst_135 : f32 to vector<1x128xf32>
    %636 = arith.maximumf %634, %635 : vector<1x128xf32>
    %637 = arith.subf %421, %631 : vector<1x128xf32>
    %638 = arith.subf %11, %637 : vector<1x128xf32>
    %639 = arith.subf %615, %638 : vector<1x128xf32>
    %cst_136 = arith.constant 0.000000e+00 : f32
    %640 = vector.broadcast %cst_136 : f32 to vector<1x128xf32>
    %641 = arith.maximumf %639, %640 : vector<1x128xf32>
    %642 = arith.subf %427, %636 : vector<1x128xf32>
    %643 = arith.mulf %642, %64 : vector<1x128xf32>
    %644 = arith.mulf %641, %643 : vector<1x128xf32>
    %cst_137 = arith.constant 0.000000e+00 : f32
    %645 = vector.broadcast %cst_137 : f32 to vector<1x128xf32>
    %646 = arith.maximumf %644, %645 : vector<1x128xf32>
    %647 = arith.subf %641, %646 : vector<1x128xf32>
    %648 = arith.subf %427, %636 : vector<1x128xf32>
    %649 = arith.addf %647, %648 : vector<1x128xf32>
    %650 = arith.subf %649, %15 : vector<1x128xf32>
    %cst_138 = arith.constant 0.000000e+00 : f32
    %651 = vector.broadcast %cst_138 : f32 to vector<1x128xf32>
    %652 = arith.maximumf %650, %651 : vector<1x128xf32>
    %653 = arith.subf %421, %631 : vector<1x128xf32>
    %654 = arith.addf %653, %615 : vector<1x128xf32>
    %655 = arith.minimumf %11, %654 : vector<1x128xf32>
    %cst_139 = arith.constant 0.000000e+00 : f32
    %656 = vector.broadcast %cst_139 : f32 to vector<1x128xf32>
    %657 = arith.maximumf %655, %656 : vector<1x128xf32>
    %658 = arith.subf %641, %646 : vector<1x128xf32>
    %659 = arith.subf %427, %636 : vector<1x128xf32>
    %660 = arith.addf %658, %659 : vector<1x128xf32>
    %661 = arith.minimumf %15, %660 : vector<1x128xf32>
    %cst_140 = arith.constant 0.000000e+00 : f32
    %662 = vector.broadcast %cst_140 : f32 to vector<1x128xf32>
    %663 = arith.maximumf %661, %662 : vector<1x128xf32>
    %664 = arith.mulf %552, %60 : vector<1x128xf32>
    %665 = arith.mulf %627, %664 : vector<1x128xf32>
    %666 = arith.minimumf %552, %665 : vector<1x128xf32>
    %667 = arith.subf %627, %666 : vector<1x128xf32>
    %668 = arith.minimumf %554, %667 : vector<1x128xf32>
    %cst_141 = arith.constant 0.000000e+00 : f32
    %669 = vector.broadcast %cst_141 : f32 to vector<1x128xf32>
    %670 = arith.maximumf %668, %669 : vector<1x128xf32>
    %671 = arith.subf %627, %666 : vector<1x128xf32>
    %672 = arith.subf %671, %670 : vector<1x128xf32>
    %673 = arith.mulf %564, %68 : vector<1x128xf32>
    %674 = arith.mulf %672, %673 : vector<1x128xf32>
    %cst_142 = arith.constant 0.000000e+00 : f32
    %675 = vector.broadcast %cst_142 : f32 to vector<1x128xf32>
    %676 = arith.maximumf %674, %675 : vector<1x128xf32>
    %677 = arith.subf %564, %676 : vector<1x128xf32>
    %cst_143 = arith.constant 0.000000e+00 : f32
    %678 = vector.broadcast %cst_143 : f32 to vector<1x128xf32>
    %679 = arith.maximumf %677, %678 : vector<1x128xf32>
    %680 = arith.mulf %646, %9 : vector<1x128xf32>
    %681 = arith.mulf %652, %9 : vector<1x128xf32>
    %682 = arith.addf %552, %554 : vector<1x128xf32>
    %683 = arith.subf %682, %666 : vector<1x128xf32>
    %684 = arith.subf %683, %670 : vector<1x128xf32>
    %685 = arith.addf %615, %684 : vector<1x128xf32>
    %686 = arith.subf %685, %55 : vector<1x128xf32>
    %cst_144 = arith.constant 0.000000e+00 : f32
    %687 = vector.broadcast %cst_144 : f32 to vector<1x128xf32>
    %688 = arith.maximumf %686, %687 : vector<1x128xf32>
    %689 = arith.mulf %688, %46 : vector<1x128xf32>
    %690 = arith.subf %552, %666 : vector<1x128xf32>
    %691 = arith.addf %690, %615 : vector<1x128xf32>
    %692 = arith.minimumf %11, %691 : vector<1x128xf32>
    %cst_145 = arith.constant 0.000000e+00 : f32
    %693 = vector.broadcast %cst_145 : f32 to vector<1x128xf32>
    %694 = arith.maximumf %692, %693 : vector<1x128xf32>
    %695 = arith.addf %552, %554 : vector<1x128xf32>
    %696 = arith.subf %695, %666 : vector<1x128xf32>
    %697 = arith.subf %696, %670 : vector<1x128xf32>
    %698 = arith.addf %615, %697 : vector<1x128xf32>
    %699 = arith.subf %698, %694 : vector<1x128xf32>
    %700 = arith.minimumf %13, %699 : vector<1x128xf32>
    %cst_146 = arith.constant 0.000000e+00 : f32
    %701 = vector.broadcast %cst_146 : f32 to vector<1x128xf32>
    %702 = arith.maximumf %700, %701 : vector<1x128xf32>
    %703 = arith.mulf %702, %29 : vector<1x128xf32>
    %704 = arith.subf %702, %703 : vector<1x128xf32>
    %cst_147 = arith.constant 0.000000e+00 : f32
    %705 = vector.broadcast %cst_147 : f32 to vector<1x128xf32>
    %706 = arith.maximumf %704, %705 : vector<1x128xf32>
    %707 = arith.addf %569, %575 : vector<1x128xf32>
    %708 = arith.addf %707, %679 : vector<1x128xf32>
    %709 = arith.mulf %708, %72 : vector<1x128xf32>
    %cst_148 = arith.constant 1.000000e+00 : f32
    %710 = vector.broadcast %cst_148 : f32 to vector<1x128xf32>
    %711 = arith.subf %710, %709 : vector<1x128xf32>
    %cst_149 = arith.constant 0.000000e+00 : f32
    %712 = vector.broadcast %cst_149 : f32 to vector<1x128xf32>
    %713 = arith.maximumf %711, %712 : vector<1x128xf32>
    %cst_150 = arith.constant 0.000000e+00 : f32
    %714 = vector.broadcast %cst_150 : f32 to vector<1x128xf32>
    %715 = arith.cmpf ogt, %713, %714 : vector<1x128xf32>
    %cst_151 = arith.constant 0.000000e+00 : f32
    %716 = vector.broadcast %cst_151 : f32 to vector<1x128xf32>
    %717 = arith.cmpf ogt, %713, %716 : vector<1x128xf32>
    %cst_152 = arith.constant 1.000000e+00 : f32
    %718 = vector.broadcast %cst_152 : f32 to vector<1x128xf32>
    %719 = arith.select %717, %713, %718 : vector<1x128xi1>, vector<1x128xf32>
    %720 = math.log %719 : vector<1x128xf32>
    %721 = arith.mulf %27, %720 : vector<1x128xf32>
    %722 = math.exp %721 : vector<1x128xf32>
    %cst_153 = arith.constant 0.000000e+00 : f32
    %723 = vector.broadcast %cst_153 : f32 to vector<1x128xf32>
    %724 = arith.select %715, %722, %723 : vector<1x128xi1>, vector<1x128xf32>
    %725 = arith.mulf %25, %724 : vector<1x128xf32>
    %cst_154 = arith.constant 1.000000e+00 : f32
    %726 = vector.broadcast %cst_154 : f32 to vector<1x128xf32>
    %727 = arith.addf %726, %725 : vector<1x128xf32>
    %728 = arith.mulf %53, %727 : vector<1x128xf32>
    %729 = arith.mulf %728, %706 : vector<1x128xf32>
    %730 = arith.mulf %729, %62 : vector<1x128xf32>
    %731 = arith.addf %569, %575 : vector<1x128xf32>
    %732 = arith.addf %731, %679 : vector<1x128xf32>
    %733 = arith.subf %57, %732 : vector<1x128xf32>
    %734 = arith.minimumf %730, %733 : vector<1x128xf32>
    %cst_155 = arith.constant 0.000000e+00 : f32
    %735 = vector.broadcast %cst_155 : f32 to vector<1x128xf32>
    %736 = arith.maximumf %734, %735 : vector<1x128xf32>
    %737 = arith.addf %569, %575 : vector<1x128xf32>
    %738 = arith.subf %56, %737 : vector<1x128xf32>
    %739 = arith.subf %15, %679 : vector<1x128xf32>
    %740 = arith.subf %736, %739 : vector<1x128xf32>
    %741 = arith.mulf %736, %23 : vector<1x128xf32>
    %742 = arith.maximumf %740, %741 : vector<1x128xf32>
    %743 = arith.minimumf %738, %742 : vector<1x128xf32>
    %cst_156 = arith.constant 0.000000e+00 : f32
    %744 = vector.broadcast %cst_156 : f32 to vector<1x128xf32>
    %745 = arith.maximumf %743, %744 : vector<1x128xf32>
    %746 = arith.subf %736, %745 : vector<1x128xf32>
    %cst_157 = arith.constant 0.000000e+00 : f32
    %747 = vector.broadcast %cst_157 : f32 to vector<1x128xf32>
    %748 = arith.maximumf %746, %747 : vector<1x128xf32>
    %749 = arith.mulf %575, %66 : vector<1x128xf32>
    %cst_158 = arith.constant 1.000000e+00 : f32
    %750 = vector.broadcast %cst_158 : f32 to vector<1x128xf32>
    %751 = arith.subf %750, %749 : vector<1x128xf32>
    %cst_159 = arith.constant 2.000000e+00 : f32
    %752 = vector.broadcast %cst_159 : f32 to vector<1x128xf32>
    %753 = arith.mulf %752, %751 : vector<1x128xf32>
    %754 = arith.divf %753, %751 : vector<1x128xf32>
    %755 = arith.mulf %77, %754 : vector<1x128xf32>
    %cst_160 = arith.constant 0.000000e+00 : f32
    %cst_161 = arith.constant 1.000000e+00 : f32
    %756 = vector.broadcast %cst_160 : f32 to vector<1x128xf32>
    %757 = arith.maximumf %756, %755 : vector<1x128xf32>
    %758 = vector.broadcast %cst_161 : f32 to vector<1x128xf32>
    %759 = arith.minimumf %758, %757 : vector<1x128xf32>
    %760 = arith.subf %19, %575 : vector<1x128xf32>
    %761 = arith.subf %17, %569 : vector<1x128xf32>
    %762 = arith.subf %745, %761 : vector<1x128xf32>
    %763 = arith.mulf %759, %745 : vector<1x128xf32>
    %764 = arith.maximumf %762, %763 : vector<1x128xf32>
    %765 = arith.minimumf %760, %764 : vector<1x128xf32>
    %cst_162 = arith.constant 0.000000e+00 : f32
    %766 = vector.broadcast %cst_162 : f32 to vector<1x128xf32>
    %767 = arith.maximumf %765, %766 : vector<1x128xf32>
    %768 = arith.subf %745, %767 : vector<1x128xf32>
    %cst_163 = arith.constant 0.000000e+00 : f32
    %769 = vector.broadcast %cst_163 : f32 to vector<1x128xf32>
    %770 = arith.maximumf %768, %769 : vector<1x128xf32>
    %771 = arith.addf %679, %748 : vector<1x128xf32>
    %772 = arith.addf %569, %770 : vector<1x128xf32>
    %773 = arith.addf %575, %767 : vector<1x128xf32>
    %774 = arith.mulf %772, %31 : vector<1x128xf32>
    %775 = arith.subf %772, %774 : vector<1x128xf32>
    %cst_164 = arith.constant 0.000000e+00 : f32
    %776 = vector.broadcast %cst_164 : f32 to vector<1x128xf32>
    %777 = arith.maximumf %775, %776 : vector<1x128xf32>
    %778 = arith.mulf %773, %33 : vector<1x128xf32>
    %779 = arith.subf %773, %778 : vector<1x128xf32>
    %cst_165 = arith.constant 0.000000e+00 : f32
    %780 = vector.broadcast %cst_165 : f32 to vector<1x128xf32>
    %781 = arith.maximumf %779, %780 : vector<1x128xf32>
    %782 = arith.mulf %694, %60 : vector<1x128xf32>
    %783 = arith.mulf %706, %62 : vector<1x128xf32>
    %784 = arith.addf %694, %706 : vector<1x128xf32>
    %785 = arith.mulf %784, %70 : vector<1x128xf32>
    %786 = arith.cmpf olt, %782, %783 : vector<1x128xf32>
    %787 = arith.mulf %11, %785 : vector<1x128xf32>
    %788 = arith.select %786, %787, %694 : vector<1x128xi1>, vector<1x128xf32>
    %789 = arith.mulf %13, %785 : vector<1x128xf32>
    %790 = arith.select %786, %789, %706 : vector<1x128xi1>, vector<1x128xf32>
    %791 = arith.addf %772, %773 : vector<1x128xf32>
    %792 = arith.subf %791, %58 : vector<1x128xf32>
    %793 = arith.addf %792, %771 : vector<1x128xf32>
    %794 = arith.mulf %793, %76 : vector<1x128xf32>
    %cst_166 = arith.constant 0.000000e+00 : f32
    %795 = vector.broadcast %cst_166 : f32 to vector<1x128xf32>
    %796 = arith.maximumf %794, %795 : vector<1x128xf32>
    %797 = arith.mulf %771, %64 : vector<1x128xf32>
    %798 = arith.cmpf olt, %797, %796 : vector<1x128xf32>
    %799 = arith.mulf %15, %796 : vector<1x128xf32>
    %800 = arith.select %798, %799, %771 : vector<1x128xi1>, vector<1x128xf32>
    %801 = arith.subf %800, %771 : vector<1x128xf32>
    %802 = arith.subf %772, %801 : vector<1x128xf32>
    %cst_167 = arith.constant 0.000000e+00 : f32
    %803 = vector.broadcast %cst_167 : f32 to vector<1x128xf32>
    %804 = arith.maximumf %802, %803 : vector<1x128xf32>
    %805 = arith.select %798, %804, %777 : vector<1x128xi1>, vector<1x128xf32>
    %806 = arith.subf %800, %771 : vector<1x128xf32>
    %807 = arith.subf %806, %772 : vector<1x128xf32>
    %cst_168 = arith.constant 0.000000e+00 : f32
    %808 = vector.broadcast %cst_168 : f32 to vector<1x128xf32>
    %809 = arith.maximumf %807, %808 : vector<1x128xf32>
    %810 = arith.subf %773, %809 : vector<1x128xf32>
    %811 = arith.select %798, %810, %781 : vector<1x128xi1>, vector<1x128xf32>
    %812 = arith.addf %585, %591 : vector<1x128xf32>
    %813 = arith.addf %812, %597 : vector<1x128xf32>
    %814 = arith.addf %813, %603 : vector<1x128xf32>
    %815 = arith.addf %680, %681 : vector<1x128xf32>
    %816 = arith.mulf %815, %9 : vector<1x128xf32>
    %817 = arith.addf %628, %816 : vector<1x128xf32>
    %818 = arith.mulf %689, %48 : vector<1x128xf32>
    %819 = arith.addf %817, %818 : vector<1x128xf32>
    %cst_169 = arith.constant 1.000000e+03 : f32
    %820 = vector.broadcast %cst_169 : f32 to vector<1x128xf32>
    %821 = arith.mulf %819, %820 : vector<1x128xf32>
    %822 = arith.mulf %35, %591 : vector<1x128xf32>
    %823 = arith.mulf %79, %703 : vector<1x128xf32>
    %824 = arith.mulf %823, %50 : vector<1x128xf32>
    %825 = arith.addf %822, %824 : vector<1x128xf32>
    %cst_170 = arith.constant 0.000000e+00 : f32
    %826 = vector.broadcast %cst_170 : f32 to vector<1x128xf32>
    %827 = arith.maximumf %825, %826 : vector<1x128xf32>
    %828 = arith.mulf %37, %597 : vector<1x128xf32>
    %829 = arith.mulf %81, %774 : vector<1x128xf32>
    %830 = arith.mulf %829, %50 : vector<1x128xf32>
    %831 = arith.addf %828, %830 : vector<1x128xf32>
    %cst_171 = arith.constant 0.000000e+00 : f32
    %832 = vector.broadcast %cst_171 : f32 to vector<1x128xf32>
    %833 = arith.maximumf %831, %832 : vector<1x128xf32>
    %834 = arith.mulf %39, %603 : vector<1x128xf32>
    %835 = arith.mulf %83, %778 : vector<1x128xf32>
    %836 = arith.mulf %835, %50 : vector<1x128xf32>
    %837 = arith.addf %834, %836 : vector<1x128xf32>
    %cst_172 = arith.constant 0.000000e+00 : f32
    %838 = vector.broadcast %cst_172 : f32 to vector<1x128xf32>
    %839 = arith.maximumf %837, %838 : vector<1x128xf32>
    %840 = arith.addf %821, %827 : vector<1x128xf32>
    %841 = arith.addf %840, %833 : vector<1x128xf32>
    %842 = arith.addf %841, %839 : vector<1x128xf32>
    %843 = arith.mulf %114, %814 : vector<1x128xf32>
    %844 = arith.mulf %102, %842 : vector<1x128xf32>
    %845 = arith.addf %843, %844 : vector<1x128xf32>
    %846 = arith.mulf %110, %611 : vector<1x128xf32>
    %847 = arith.addf %845, %846 : vector<1x128xf32>
    %c3 = arith.constant 3 : index
    %c0_173 = arith.constant 0 : index
    %c0_174 = arith.constant 0 : index
    %848 = vector.load %arg2[%c3, %c0_173, %c0_174] : memref<8x1x128xf32, #tpu.memory_space<vmem>>, vector<1x1x128xf32>
    %849 = vector.shape_cast %848 : vector<1x1x128xf32> to vector<1x128xf32>
    %cst_175 = arith.constant 0.000000e+00 : f32
    %850 = vector.broadcast %cst_175 : f32 to vector<1x128xf32>
    %851 = arith.maximumf %849, %850 : vector<1x128xf32>
    %c3_176 = arith.constant 3 : index
    %c0_177 = arith.constant 0 : index
    %c0_178 = arith.constant 0 : index
    %852 = vector.load %arg3[%c3_176, %c0_177, %c0_178] : memref<8x1x128xf32, #tpu.memory_space<vmem>>, vector<1x1x128xf32>
    %853 = vector.shape_cast %852 : vector<1x1x128xf32> to vector<1x128xf32>
    %854 = arith.cmpf oeq, %853, %853 : vector<1x128xf32>
    %855 = math.absf %853 : vector<1x128xf32>
    %cst_179 = arith.constant 0x7F800000 : f32
    %856 = vector.broadcast %cst_179 : f32 to vector<1x128xf32>
    %857 = arith.cmpf olt, %855, %856 : vector<1x128xf32>
    %858 = arith.andi %854, %857 : vector<1x128xi1>
    %cst_180 = arith.constant 0.000000e+00 : f32
    %859 = vector.broadcast %cst_180 : f32 to vector<1x128xf32>
    %860 = arith.select %858, %853, %859 : vector<1x128xi1>, vector<1x128xf32>
    %cst_181 = arith.constant 0.000000e+00 : f32
    %861 = vector.broadcast %cst_181 : f32 to vector<1x128xf32>
    %862 = arith.maximumf %860, %861 : vector<1x128xf32>
    %863 = arith.mulf %5, %862 : vector<1x128xf32>
    %864 = arith.mulf %7, %851 : vector<1x128xf32>
    %865 = arith.mulf %657, %60 : vector<1x128xf32>
    %866 = arith.mulf %863, %865 : vector<1x128xf32>
    %867 = arith.minimumf %657, %866 : vector<1x128xf32>
    %868 = arith.subf %863, %867 : vector<1x128xf32>
    %869 = arith.mulf %663, %68 : vector<1x128xf32>
    %870 = arith.mulf %868, %869 : vector<1x128xf32>
    %cst_182 = arith.constant 0.000000e+00 : f32
    %871 = vector.broadcast %cst_182 : f32 to vector<1x128xf32>
    %872 = arith.maximumf %870, %871 : vector<1x128xf32>
    %873 = arith.subf %657, %867 : vector<1x128xf32>
    %874 = arith.subf %11, %873 : vector<1x128xf32>
    %875 = arith.subf %851, %874 : vector<1x128xf32>
    %cst_183 = arith.constant 0.000000e+00 : f32
    %876 = vector.broadcast %cst_183 : f32 to vector<1x128xf32>
    %877 = arith.maximumf %875, %876 : vector<1x128xf32>
    %878 = arith.subf %663, %872 : vector<1x128xf32>
    %879 = arith.mulf %878, %64 : vector<1x128xf32>
    %880 = arith.mulf %877, %879 : vector<1x128xf32>
    %cst_184 = arith.constant 0.000000e+00 : f32
    %881 = vector.broadcast %cst_184 : f32 to vector<1x128xf32>
    %882 = arith.maximumf %880, %881 : vector<1x128xf32>
    %883 = arith.subf %877, %882 : vector<1x128xf32>
    %884 = arith.subf %663, %872 : vector<1x128xf32>
    %885 = arith.addf %883, %884 : vector<1x128xf32>
    %886 = arith.subf %885, %15 : vector<1x128xf32>
    %cst_185 = arith.constant 0.000000e+00 : f32
    %887 = vector.broadcast %cst_185 : f32 to vector<1x128xf32>
    %888 = arith.maximumf %886, %887 : vector<1x128xf32>
    %889 = arith.subf %657, %867 : vector<1x128xf32>
    %890 = arith.addf %889, %851 : vector<1x128xf32>
    %891 = arith.minimumf %11, %890 : vector<1x128xf32>
    %cst_186 = arith.constant 0.000000e+00 : f32
    %892 = vector.broadcast %cst_186 : f32 to vector<1x128xf32>
    %893 = arith.maximumf %891, %892 : vector<1x128xf32>
    %894 = arith.subf %877, %882 : vector<1x128xf32>
    %895 = arith.subf %663, %872 : vector<1x128xf32>
    %896 = arith.addf %894, %895 : vector<1x128xf32>
    %897 = arith.minimumf %15, %896 : vector<1x128xf32>
    %cst_187 = arith.constant 0.000000e+00 : f32
    %898 = vector.broadcast %cst_187 : f32 to vector<1x128xf32>
    %899 = arith.maximumf %897, %898 : vector<1x128xf32>
    %900 = arith.mulf %788, %60 : vector<1x128xf32>
    %901 = arith.mulf %863, %900 : vector<1x128xf32>
    %902 = arith.minimumf %788, %901 : vector<1x128xf32>
    %903 = arith.subf %863, %902 : vector<1x128xf32>
    %904 = arith.minimumf %790, %903 : vector<1x128xf32>
    %cst_188 = arith.constant 0.000000e+00 : f32
    %905 = vector.broadcast %cst_188 : f32 to vector<1x128xf32>
    %906 = arith.maximumf %904, %905 : vector<1x128xf32>
    %907 = arith.subf %863, %902 : vector<1x128xf32>
    %908 = arith.subf %907, %906 : vector<1x128xf32>
    %909 = arith.mulf %800, %68 : vector<1x128xf32>
    %910 = arith.mulf %908, %909 : vector<1x128xf32>
    %cst_189 = arith.constant 0.000000e+00 : f32
    %911 = vector.broadcast %cst_189 : f32 to vector<1x128xf32>
    %912 = arith.maximumf %910, %911 : vector<1x128xf32>
    %913 = arith.subf %800, %912 : vector<1x128xf32>
    %cst_190 = arith.constant 0.000000e+00 : f32
    %914 = vector.broadcast %cst_190 : f32 to vector<1x128xf32>
    %915 = arith.maximumf %913, %914 : vector<1x128xf32>
    %916 = arith.mulf %882, %9 : vector<1x128xf32>
    %917 = arith.mulf %888, %9 : vector<1x128xf32>
    %918 = arith.addf %788, %790 : vector<1x128xf32>
    %919 = arith.subf %918, %902 : vector<1x128xf32>
    %920 = arith.subf %919, %906 : vector<1x128xf32>
    %921 = arith.addf %851, %920 : vector<1x128xf32>
    %922 = arith.subf %921, %55 : vector<1x128xf32>
    %cst_191 = arith.constant 0.000000e+00 : f32
    %923 = vector.broadcast %cst_191 : f32 to vector<1x128xf32>
    %924 = arith.maximumf %922, %923 : vector<1x128xf32>
    %925 = arith.mulf %924, %46 : vector<1x128xf32>
    %926 = arith.subf %788, %902 : vector<1x128xf32>
    %927 = arith.addf %926, %851 : vector<1x128xf32>
    %928 = arith.minimumf %11, %927 : vector<1x128xf32>
    %cst_192 = arith.constant 0.000000e+00 : f32
    %929 = vector.broadcast %cst_192 : f32 to vector<1x128xf32>
    %930 = arith.maximumf %928, %929 : vector<1x128xf32>
    %931 = arith.addf %788, %790 : vector<1x128xf32>
    %932 = arith.subf %931, %902 : vector<1x128xf32>
    %933 = arith.subf %932, %906 : vector<1x128xf32>
    %934 = arith.addf %851, %933 : vector<1x128xf32>
    %935 = arith.subf %934, %930 : vector<1x128xf32>
    %936 = arith.minimumf %13, %935 : vector<1x128xf32>
    %cst_193 = arith.constant 0.000000e+00 : f32
    %937 = vector.broadcast %cst_193 : f32 to vector<1x128xf32>
    %938 = arith.maximumf %936, %937 : vector<1x128xf32>
    %939 = arith.mulf %938, %29 : vector<1x128xf32>
    %940 = arith.subf %938, %939 : vector<1x128xf32>
    %cst_194 = arith.constant 0.000000e+00 : f32
    %941 = vector.broadcast %cst_194 : f32 to vector<1x128xf32>
    %942 = arith.maximumf %940, %941 : vector<1x128xf32>
    %943 = arith.addf %805, %811 : vector<1x128xf32>
    %944 = arith.addf %943, %915 : vector<1x128xf32>
    %945 = arith.mulf %944, %72 : vector<1x128xf32>
    %cst_195 = arith.constant 1.000000e+00 : f32
    %946 = vector.broadcast %cst_195 : f32 to vector<1x128xf32>
    %947 = arith.subf %946, %945 : vector<1x128xf32>
    %cst_196 = arith.constant 0.000000e+00 : f32
    %948 = vector.broadcast %cst_196 : f32 to vector<1x128xf32>
    %949 = arith.maximumf %947, %948 : vector<1x128xf32>
    %cst_197 = arith.constant 0.000000e+00 : f32
    %950 = vector.broadcast %cst_197 : f32 to vector<1x128xf32>
    %951 = arith.cmpf ogt, %949, %950 : vector<1x128xf32>
    %cst_198 = arith.constant 0.000000e+00 : f32
    %952 = vector.broadcast %cst_198 : f32 to vector<1x128xf32>
    %953 = arith.cmpf ogt, %949, %952 : vector<1x128xf32>
    %cst_199 = arith.constant 1.000000e+00 : f32
    %954 = vector.broadcast %cst_199 : f32 to vector<1x128xf32>
    %955 = arith.select %953, %949, %954 : vector<1x128xi1>, vector<1x128xf32>
    %956 = math.log %955 : vector<1x128xf32>
    %957 = arith.mulf %27, %956 : vector<1x128xf32>
    %958 = math.exp %957 : vector<1x128xf32>
    %cst_200 = arith.constant 0.000000e+00 : f32
    %959 = vector.broadcast %cst_200 : f32 to vector<1x128xf32>
    %960 = arith.select %951, %958, %959 : vector<1x128xi1>, vector<1x128xf32>
    %961 = arith.mulf %25, %960 : vector<1x128xf32>
    %cst_201 = arith.constant 1.000000e+00 : f32
    %962 = vector.broadcast %cst_201 : f32 to vector<1x128xf32>
    %963 = arith.addf %962, %961 : vector<1x128xf32>
    %964 = arith.mulf %53, %963 : vector<1x128xf32>
    %965 = arith.mulf %964, %942 : vector<1x128xf32>
    %966 = arith.mulf %965, %62 : vector<1x128xf32>
    %967 = arith.addf %805, %811 : vector<1x128xf32>
    %968 = arith.addf %967, %915 : vector<1x128xf32>
    %969 = arith.subf %57, %968 : vector<1x128xf32>
    %970 = arith.minimumf %966, %969 : vector<1x128xf32>
    %cst_202 = arith.constant 0.000000e+00 : f32
    %971 = vector.broadcast %cst_202 : f32 to vector<1x128xf32>
    %972 = arith.maximumf %970, %971 : vector<1x128xf32>
    %973 = arith.addf %805, %811 : vector<1x128xf32>
    %974 = arith.subf %56, %973 : vector<1x128xf32>
    %975 = arith.subf %15, %915 : vector<1x128xf32>
    %976 = arith.subf %972, %975 : vector<1x128xf32>
    %977 = arith.mulf %972, %23 : vector<1x128xf32>
    %978 = arith.maximumf %976, %977 : vector<1x128xf32>
    %979 = arith.minimumf %974, %978 : vector<1x128xf32>
    %cst_203 = arith.constant 0.000000e+00 : f32
    %980 = vector.broadcast %cst_203 : f32 to vector<1x128xf32>
    %981 = arith.maximumf %979, %980 : vector<1x128xf32>
    %982 = arith.subf %972, %981 : vector<1x128xf32>
    %cst_204 = arith.constant 0.000000e+00 : f32
    %983 = vector.broadcast %cst_204 : f32 to vector<1x128xf32>
    %984 = arith.maximumf %982, %983 : vector<1x128xf32>
    %985 = arith.mulf %811, %66 : vector<1x128xf32>
    %cst_205 = arith.constant 1.000000e+00 : f32
    %986 = vector.broadcast %cst_205 : f32 to vector<1x128xf32>
    %987 = arith.subf %986, %985 : vector<1x128xf32>
    %cst_206 = arith.constant 2.000000e+00 : f32
    %988 = vector.broadcast %cst_206 : f32 to vector<1x128xf32>
    %989 = arith.mulf %988, %987 : vector<1x128xf32>
    %990 = arith.divf %989, %987 : vector<1x128xf32>
    %991 = arith.mulf %77, %990 : vector<1x128xf32>
    %cst_207 = arith.constant 0.000000e+00 : f32
    %cst_208 = arith.constant 1.000000e+00 : f32
    %992 = vector.broadcast %cst_207 : f32 to vector<1x128xf32>
    %993 = arith.maximumf %992, %991 : vector<1x128xf32>
    %994 = vector.broadcast %cst_208 : f32 to vector<1x128xf32>
    %995 = arith.minimumf %994, %993 : vector<1x128xf32>
    %996 = arith.subf %19, %811 : vector<1x128xf32>
    %997 = arith.subf %17, %805 : vector<1x128xf32>
    %998 = arith.subf %981, %997 : vector<1x128xf32>
    %999 = arith.mulf %995, %981 : vector<1x128xf32>
    %1000 = arith.maximumf %998, %999 : vector<1x128xf32>
    %1001 = arith.minimumf %996, %1000 : vector<1x128xf32>
    %cst_209 = arith.constant 0.000000e+00 : f32
    %1002 = vector.broadcast %cst_209 : f32 to vector<1x128xf32>
    %1003 = arith.maximumf %1001, %1002 : vector<1x128xf32>
    %1004 = arith.subf %981, %1003 : vector<1x128xf32>
    %cst_210 = arith.constant 0.000000e+00 : f32
    %1005 = vector.broadcast %cst_210 : f32 to vector<1x128xf32>
    %1006 = arith.maximumf %1004, %1005 : vector<1x128xf32>
    %1007 = arith.addf %915, %984 : vector<1x128xf32>
    %1008 = arith.addf %805, %1006 : vector<1x128xf32>
    %1009 = arith.addf %811, %1003 : vector<1x128xf32>
    %1010 = arith.mulf %1008, %31 : vector<1x128xf32>
    %1011 = arith.subf %1008, %1010 : vector<1x128xf32>
    %cst_211 = arith.constant 0.000000e+00 : f32
    %1012 = vector.broadcast %cst_211 : f32 to vector<1x128xf32>
    %1013 = arith.maximumf %1011, %1012 : vector<1x128xf32>
    %1014 = arith.mulf %1009, %33 : vector<1x128xf32>
    %1015 = arith.subf %1009, %1014 : vector<1x128xf32>
    %cst_212 = arith.constant 0.000000e+00 : f32
    %1016 = vector.broadcast %cst_212 : f32 to vector<1x128xf32>
    %1017 = arith.maximumf %1015, %1016 : vector<1x128xf32>
    %1018 = arith.mulf %930, %60 : vector<1x128xf32>
    %1019 = arith.mulf %942, %62 : vector<1x128xf32>
    %1020 = arith.addf %930, %942 : vector<1x128xf32>
    %1021 = arith.mulf %1020, %70 : vector<1x128xf32>
    %1022 = arith.cmpf olt, %1018, %1019 : vector<1x128xf32>
    %1023 = arith.mulf %11, %1021 : vector<1x128xf32>
    %1024 = arith.select %1022, %1023, %930 : vector<1x128xi1>, vector<1x128xf32>
    %1025 = arith.mulf %13, %1021 : vector<1x128xf32>
    %1026 = arith.select %1022, %1025, %942 : vector<1x128xi1>, vector<1x128xf32>
    %1027 = arith.addf %1008, %1009 : vector<1x128xf32>
    %1028 = arith.subf %1027, %58 : vector<1x128xf32>
    %1029 = arith.addf %1028, %1007 : vector<1x128xf32>
    %1030 = arith.mulf %1029, %76 : vector<1x128xf32>
    %cst_213 = arith.constant 0.000000e+00 : f32
    %1031 = vector.broadcast %cst_213 : f32 to vector<1x128xf32>
    %1032 = arith.maximumf %1030, %1031 : vector<1x128xf32>
    %1033 = arith.mulf %1007, %64 : vector<1x128xf32>
    %1034 = arith.cmpf olt, %1033, %1032 : vector<1x128xf32>
    %1035 = arith.mulf %15, %1032 : vector<1x128xf32>
    %1036 = arith.select %1034, %1035, %1007 : vector<1x128xi1>, vector<1x128xf32>
    %1037 = arith.subf %1036, %1007 : vector<1x128xf32>
    %1038 = arith.subf %1008, %1037 : vector<1x128xf32>
    %cst_214 = arith.constant 0.000000e+00 : f32
    %1039 = vector.broadcast %cst_214 : f32 to vector<1x128xf32>
    %1040 = arith.maximumf %1038, %1039 : vector<1x128xf32>
    %1041 = arith.select %1034, %1040, %1013 : vector<1x128xi1>, vector<1x128xf32>
    %1042 = arith.subf %1036, %1007 : vector<1x128xf32>
    %1043 = arith.subf %1042, %1008 : vector<1x128xf32>
    %cst_215 = arith.constant 0.000000e+00 : f32
    %1044 = vector.broadcast %cst_215 : f32 to vector<1x128xf32>
    %1045 = arith.maximumf %1043, %1044 : vector<1x128xf32>
    %1046 = arith.subf %1009, %1045 : vector<1x128xf32>
    %1047 = arith.select %1034, %1046, %1017 : vector<1x128xi1>, vector<1x128xf32>
    %1048 = arith.addf %821, %827 : vector<1x128xf32>
    %1049 = arith.addf %1048, %833 : vector<1x128xf32>
    %1050 = arith.addf %1049, %839 : vector<1x128xf32>
    %1051 = arith.addf %916, %917 : vector<1x128xf32>
    %1052 = arith.mulf %1051, %9 : vector<1x128xf32>
    %1053 = arith.addf %864, %1052 : vector<1x128xf32>
    %1054 = arith.mulf %925, %48 : vector<1x128xf32>
    %1055 = arith.addf %1053, %1054 : vector<1x128xf32>
    %cst_216 = arith.constant 1.000000e+03 : f32
    %1056 = vector.broadcast %cst_216 : f32 to vector<1x128xf32>
    %1057 = arith.mulf %1055, %1056 : vector<1x128xf32>
    %1058 = arith.mulf %35, %827 : vector<1x128xf32>
    %1059 = arith.mulf %79, %939 : vector<1x128xf32>
    %1060 = arith.mulf %1059, %50 : vector<1x128xf32>
    %1061 = arith.addf %1058, %1060 : vector<1x128xf32>
    %cst_217 = arith.constant 0.000000e+00 : f32
    %1062 = vector.broadcast %cst_217 : f32 to vector<1x128xf32>
    %1063 = arith.maximumf %1061, %1062 : vector<1x128xf32>
    %1064 = arith.mulf %37, %833 : vector<1x128xf32>
    %1065 = arith.mulf %81, %1010 : vector<1x128xf32>
    %1066 = arith.mulf %1065, %50 : vector<1x128xf32>
    %1067 = arith.addf %1064, %1066 : vector<1x128xf32>
    %cst_218 = arith.constant 0.000000e+00 : f32
    %1068 = vector.broadcast %cst_218 : f32 to vector<1x128xf32>
    %1069 = arith.maximumf %1067, %1068 : vector<1x128xf32>
    %1070 = arith.mulf %39, %839 : vector<1x128xf32>
    %1071 = arith.mulf %83, %1014 : vector<1x128xf32>
    %1072 = arith.mulf %1071, %50 : vector<1x128xf32>
    %1073 = arith.addf %1070, %1072 : vector<1x128xf32>
    %cst_219 = arith.constant 0.000000e+00 : f32
    %1074 = vector.broadcast %cst_219 : f32 to vector<1x128xf32>
    %1075 = arith.maximumf %1073, %1074 : vector<1x128xf32>
    %1076 = arith.addf %1057, %1063 : vector<1x128xf32>
    %1077 = arith.addf %1076, %1069 : vector<1x128xf32>
    %1078 = arith.addf %1077, %1075 : vector<1x128xf32>
    %1079 = arith.mulf %114, %1050 : vector<1x128xf32>
    %1080 = arith.mulf %102, %1078 : vector<1x128xf32>
    %1081 = arith.addf %1079, %1080 : vector<1x128xf32>
    %1082 = arith.mulf %110, %847 : vector<1x128xf32>
    %1083 = arith.addf %1081, %1082 : vector<1x128xf32>
    %c4 = arith.constant 4 : index
    %c0_220 = arith.constant 0 : index
    %c0_221 = arith.constant 0 : index
    %1084 = vector.load %arg2[%c4, %c0_220, %c0_221] : memref<8x1x128xf32, #tpu.memory_space<vmem>>, vector<1x1x128xf32>
    %1085 = vector.shape_cast %1084 : vector<1x1x128xf32> to vector<1x128xf32>
    %cst_222 = arith.constant 0.000000e+00 : f32
    %1086 = vector.broadcast %cst_222 : f32 to vector<1x128xf32>
    %1087 = arith.maximumf %1085, %1086 : vector<1x128xf32>
    %c4_223 = arith.constant 4 : index
    %c0_224 = arith.constant 0 : index
    %c0_225 = arith.constant 0 : index
    %1088 = vector.load %arg3[%c4_223, %c0_224, %c0_225] : memref<8x1x128xf32, #tpu.memory_space<vmem>>, vector<1x1x128xf32>
    %1089 = vector.shape_cast %1088 : vector<1x1x128xf32> to vector<1x128xf32>
    %1090 = arith.cmpf oeq, %1089, %1089 : vector<1x128xf32>
    %1091 = math.absf %1089 : vector<1x128xf32>
    %cst_226 = arith.constant 0x7F800000 : f32
    %1092 = vector.broadcast %cst_226 : f32 to vector<1x128xf32>
    %1093 = arith.cmpf olt, %1091, %1092 : vector<1x128xf32>
    %1094 = arith.andi %1090, %1093 : vector<1x128xi1>
    %cst_227 = arith.constant 0.000000e+00 : f32
    %1095 = vector.broadcast %cst_227 : f32 to vector<1x128xf32>
    %1096 = arith.select %1094, %1089, %1095 : vector<1x128xi1>, vector<1x128xf32>
    %cst_228 = arith.constant 0.000000e+00 : f32
    %1097 = vector.broadcast %cst_228 : f32 to vector<1x128xf32>
    %1098 = arith.maximumf %1096, %1097 : vector<1x128xf32>
    %1099 = arith.mulf %5, %1098 : vector<1x128xf32>
    %1100 = arith.mulf %7, %1087 : vector<1x128xf32>
    %1101 = arith.mulf %893, %60 : vector<1x128xf32>
    %1102 = arith.mulf %1099, %1101 : vector<1x128xf32>
    %1103 = arith.minimumf %893, %1102 : vector<1x128xf32>
    %1104 = arith.subf %1099, %1103 : vector<1x128xf32>
    %1105 = arith.mulf %899, %68 : vector<1x128xf32>
    %1106 = arith.mulf %1104, %1105 : vector<1x128xf32>
    %cst_229 = arith.constant 0.000000e+00 : f32
    %1107 = vector.broadcast %cst_229 : f32 to vector<1x128xf32>
    %1108 = arith.maximumf %1106, %1107 : vector<1x128xf32>
    %1109 = arith.subf %893, %1103 : vector<1x128xf32>
    %1110 = arith.subf %11, %1109 : vector<1x128xf32>
    %1111 = arith.subf %1087, %1110 : vector<1x128xf32>
    %cst_230 = arith.constant 0.000000e+00 : f32
    %1112 = vector.broadcast %cst_230 : f32 to vector<1x128xf32>
    %1113 = arith.maximumf %1111, %1112 : vector<1x128xf32>
    %1114 = arith.subf %899, %1108 : vector<1x128xf32>
    %1115 = arith.mulf %1114, %64 : vector<1x128xf32>
    %1116 = arith.mulf %1113, %1115 : vector<1x128xf32>
    %cst_231 = arith.constant 0.000000e+00 : f32
    %1117 = vector.broadcast %cst_231 : f32 to vector<1x128xf32>
    %1118 = arith.maximumf %1116, %1117 : vector<1x128xf32>
    %1119 = arith.subf %1113, %1118 : vector<1x128xf32>
    %1120 = arith.subf %899, %1108 : vector<1x128xf32>
    %1121 = arith.addf %1119, %1120 : vector<1x128xf32>
    %1122 = arith.subf %1121, %15 : vector<1x128xf32>
    %cst_232 = arith.constant 0.000000e+00 : f32
    %1123 = vector.broadcast %cst_232 : f32 to vector<1x128xf32>
    %1124 = arith.maximumf %1122, %1123 : vector<1x128xf32>
    %1125 = arith.subf %893, %1103 : vector<1x128xf32>
    %1126 = arith.addf %1125, %1087 : vector<1x128xf32>
    %1127 = arith.minimumf %11, %1126 : vector<1x128xf32>
    %cst_233 = arith.constant 0.000000e+00 : f32
    %1128 = vector.broadcast %cst_233 : f32 to vector<1x128xf32>
    %1129 = arith.maximumf %1127, %1128 : vector<1x128xf32>
    %1130 = arith.subf %1113, %1118 : vector<1x128xf32>
    %1131 = arith.subf %899, %1108 : vector<1x128xf32>
    %1132 = arith.addf %1130, %1131 : vector<1x128xf32>
    %1133 = arith.minimumf %15, %1132 : vector<1x128xf32>
    %cst_234 = arith.constant 0.000000e+00 : f32
    %1134 = vector.broadcast %cst_234 : f32 to vector<1x128xf32>
    %1135 = arith.maximumf %1133, %1134 : vector<1x128xf32>
    %1136 = arith.mulf %1024, %60 : vector<1x128xf32>
    %1137 = arith.mulf %1099, %1136 : vector<1x128xf32>
    %1138 = arith.minimumf %1024, %1137 : vector<1x128xf32>
    %1139 = arith.subf %1099, %1138 : vector<1x128xf32>
    %1140 = arith.minimumf %1026, %1139 : vector<1x128xf32>
    %cst_235 = arith.constant 0.000000e+00 : f32
    %1141 = vector.broadcast %cst_235 : f32 to vector<1x128xf32>
    %1142 = arith.maximumf %1140, %1141 : vector<1x128xf32>
    %1143 = arith.subf %1099, %1138 : vector<1x128xf32>
    %1144 = arith.subf %1143, %1142 : vector<1x128xf32>
    %1145 = arith.mulf %1036, %68 : vector<1x128xf32>
    %1146 = arith.mulf %1144, %1145 : vector<1x128xf32>
    %cst_236 = arith.constant 0.000000e+00 : f32
    %1147 = vector.broadcast %cst_236 : f32 to vector<1x128xf32>
    %1148 = arith.maximumf %1146, %1147 : vector<1x128xf32>
    %1149 = arith.subf %1036, %1148 : vector<1x128xf32>
    %cst_237 = arith.constant 0.000000e+00 : f32
    %1150 = vector.broadcast %cst_237 : f32 to vector<1x128xf32>
    %1151 = arith.maximumf %1149, %1150 : vector<1x128xf32>
    %1152 = arith.mulf %1118, %9 : vector<1x128xf32>
    %1153 = arith.mulf %1124, %9 : vector<1x128xf32>
    %1154 = arith.addf %1024, %1026 : vector<1x128xf32>
    %1155 = arith.subf %1154, %1138 : vector<1x128xf32>
    %1156 = arith.subf %1155, %1142 : vector<1x128xf32>
    %1157 = arith.addf %1087, %1156 : vector<1x128xf32>
    %1158 = arith.subf %1157, %55 : vector<1x128xf32>
    %cst_238 = arith.constant 0.000000e+00 : f32
    %1159 = vector.broadcast %cst_238 : f32 to vector<1x128xf32>
    %1160 = arith.maximumf %1158, %1159 : vector<1x128xf32>
    %1161 = arith.mulf %1160, %46 : vector<1x128xf32>
    %1162 = arith.subf %1024, %1138 : vector<1x128xf32>
    %1163 = arith.addf %1162, %1087 : vector<1x128xf32>
    %1164 = arith.minimumf %11, %1163 : vector<1x128xf32>
    %cst_239 = arith.constant 0.000000e+00 : f32
    %1165 = vector.broadcast %cst_239 : f32 to vector<1x128xf32>
    %1166 = arith.maximumf %1164, %1165 : vector<1x128xf32>
    %1167 = arith.addf %1024, %1026 : vector<1x128xf32>
    %1168 = arith.subf %1167, %1138 : vector<1x128xf32>
    %1169 = arith.subf %1168, %1142 : vector<1x128xf32>
    %1170 = arith.addf %1087, %1169 : vector<1x128xf32>
    %1171 = arith.subf %1170, %1166 : vector<1x128xf32>
    %1172 = arith.minimumf %13, %1171 : vector<1x128xf32>
    %cst_240 = arith.constant 0.000000e+00 : f32
    %1173 = vector.broadcast %cst_240 : f32 to vector<1x128xf32>
    %1174 = arith.maximumf %1172, %1173 : vector<1x128xf32>
    %1175 = arith.mulf %1174, %29 : vector<1x128xf32>
    %1176 = arith.subf %1174, %1175 : vector<1x128xf32>
    %cst_241 = arith.constant 0.000000e+00 : f32
    %1177 = vector.broadcast %cst_241 : f32 to vector<1x128xf32>
    %1178 = arith.maximumf %1176, %1177 : vector<1x128xf32>
    %1179 = arith.addf %1041, %1047 : vector<1x128xf32>
    %1180 = arith.addf %1179, %1151 : vector<1x128xf32>
    %1181 = arith.mulf %1180, %72 : vector<1x128xf32>
    %cst_242 = arith.constant 1.000000e+00 : f32
    %1182 = vector.broadcast %cst_242 : f32 to vector<1x128xf32>
    %1183 = arith.subf %1182, %1181 : vector<1x128xf32>
    %cst_243 = arith.constant 0.000000e+00 : f32
    %1184 = vector.broadcast %cst_243 : f32 to vector<1x128xf32>
    %1185 = arith.maximumf %1183, %1184 : vector<1x128xf32>
    %cst_244 = arith.constant 0.000000e+00 : f32
    %1186 = vector.broadcast %cst_244 : f32 to vector<1x128xf32>
    %1187 = arith.cmpf ogt, %1185, %1186 : vector<1x128xf32>
    %cst_245 = arith.constant 0.000000e+00 : f32
    %1188 = vector.broadcast %cst_245 : f32 to vector<1x128xf32>
    %1189 = arith.cmpf ogt, %1185, %1188 : vector<1x128xf32>
    %cst_246 = arith.constant 1.000000e+00 : f32
    %1190 = vector.broadcast %cst_246 : f32 to vector<1x128xf32>
    %1191 = arith.select %1189, %1185, %1190 : vector<1x128xi1>, vector<1x128xf32>
    %1192 = math.log %1191 : vector<1x128xf32>
    %1193 = arith.mulf %27, %1192 : vector<1x128xf32>
    %1194 = math.exp %1193 : vector<1x128xf32>
    %cst_247 = arith.constant 0.000000e+00 : f32
    %1195 = vector.broadcast %cst_247 : f32 to vector<1x128xf32>
    %1196 = arith.select %1187, %1194, %1195 : vector<1x128xi1>, vector<1x128xf32>
    %1197 = arith.mulf %25, %1196 : vector<1x128xf32>
    %cst_248 = arith.constant 1.000000e+00 : f32
    %1198 = vector.broadcast %cst_248 : f32 to vector<1x128xf32>
    %1199 = arith.addf %1198, %1197 : vector<1x128xf32>
    %1200 = arith.mulf %53, %1199 : vector<1x128xf32>
    %1201 = arith.mulf %1200, %1178 : vector<1x128xf32>
    %1202 = arith.mulf %1201, %62 : vector<1x128xf32>
    %1203 = arith.addf %1041, %1047 : vector<1x128xf32>
    %1204 = arith.addf %1203, %1151 : vector<1x128xf32>
    %1205 = arith.subf %57, %1204 : vector<1x128xf32>
    %1206 = arith.minimumf %1202, %1205 : vector<1x128xf32>
    %cst_249 = arith.constant 0.000000e+00 : f32
    %1207 = vector.broadcast %cst_249 : f32 to vector<1x128xf32>
    %1208 = arith.maximumf %1206, %1207 : vector<1x128xf32>
    %1209 = arith.addf %1041, %1047 : vector<1x128xf32>
    %1210 = arith.subf %56, %1209 : vector<1x128xf32>
    %1211 = arith.subf %15, %1151 : vector<1x128xf32>
    %1212 = arith.subf %1208, %1211 : vector<1x128xf32>
    %1213 = arith.mulf %1208, %23 : vector<1x128xf32>
    %1214 = arith.maximumf %1212, %1213 : vector<1x128xf32>
    %1215 = arith.minimumf %1210, %1214 : vector<1x128xf32>
    %cst_250 = arith.constant 0.000000e+00 : f32
    %1216 = vector.broadcast %cst_250 : f32 to vector<1x128xf32>
    %1217 = arith.maximumf %1215, %1216 : vector<1x128xf32>
    %1218 = arith.subf %1208, %1217 : vector<1x128xf32>
    %cst_251 = arith.constant 0.000000e+00 : f32
    %1219 = vector.broadcast %cst_251 : f32 to vector<1x128xf32>
    %1220 = arith.maximumf %1218, %1219 : vector<1x128xf32>
    %1221 = arith.mulf %1047, %66 : vector<1x128xf32>
    %cst_252 = arith.constant 1.000000e+00 : f32
    %1222 = vector.broadcast %cst_252 : f32 to vector<1x128xf32>
    %1223 = arith.subf %1222, %1221 : vector<1x128xf32>
    %cst_253 = arith.constant 2.000000e+00 : f32
    %1224 = vector.broadcast %cst_253 : f32 to vector<1x128xf32>
    %1225 = arith.mulf %1224, %1223 : vector<1x128xf32>
    %1226 = arith.divf %1225, %1223 : vector<1x128xf32>
    %1227 = arith.mulf %77, %1226 : vector<1x128xf32>
    %cst_254 = arith.constant 0.000000e+00 : f32
    %cst_255 = arith.constant 1.000000e+00 : f32
    %1228 = vector.broadcast %cst_254 : f32 to vector<1x128xf32>
    %1229 = arith.maximumf %1228, %1227 : vector<1x128xf32>
    %1230 = vector.broadcast %cst_255 : f32 to vector<1x128xf32>
    %1231 = arith.minimumf %1230, %1229 : vector<1x128xf32>
    %1232 = arith.subf %19, %1047 : vector<1x128xf32>
    %1233 = arith.subf %17, %1041 : vector<1x128xf32>
    %1234 = arith.subf %1217, %1233 : vector<1x128xf32>
    %1235 = arith.mulf %1231, %1217 : vector<1x128xf32>
    %1236 = arith.maximumf %1234, %1235 : vector<1x128xf32>
    %1237 = arith.minimumf %1232, %1236 : vector<1x128xf32>
    %cst_256 = arith.constant 0.000000e+00 : f32
    %1238 = vector.broadcast %cst_256 : f32 to vector<1x128xf32>
    %1239 = arith.maximumf %1237, %1238 : vector<1x128xf32>
    %1240 = arith.subf %1217, %1239 : vector<1x128xf32>
    %cst_257 = arith.constant 0.000000e+00 : f32
    %1241 = vector.broadcast %cst_257 : f32 to vector<1x128xf32>
    %1242 = arith.maximumf %1240, %1241 : vector<1x128xf32>
    %1243 = arith.addf %1151, %1220 : vector<1x128xf32>
    %1244 = arith.addf %1041, %1242 : vector<1x128xf32>
    %1245 = arith.addf %1047, %1239 : vector<1x128xf32>
    %1246 = arith.mulf %1244, %31 : vector<1x128xf32>
    %1247 = arith.subf %1244, %1246 : vector<1x128xf32>
    %cst_258 = arith.constant 0.000000e+00 : f32
    %1248 = vector.broadcast %cst_258 : f32 to vector<1x128xf32>
    %1249 = arith.maximumf %1247, %1248 : vector<1x128xf32>
    %1250 = arith.mulf %1245, %33 : vector<1x128xf32>
    %1251 = arith.subf %1245, %1250 : vector<1x128xf32>
    %cst_259 = arith.constant 0.000000e+00 : f32
    %1252 = vector.broadcast %cst_259 : f32 to vector<1x128xf32>
    %1253 = arith.maximumf %1251, %1252 : vector<1x128xf32>
    %1254 = arith.mulf %1166, %60 : vector<1x128xf32>
    %1255 = arith.mulf %1178, %62 : vector<1x128xf32>
    %1256 = arith.addf %1166, %1178 : vector<1x128xf32>
    %1257 = arith.mulf %1256, %70 : vector<1x128xf32>
    %1258 = arith.cmpf olt, %1254, %1255 : vector<1x128xf32>
    %1259 = arith.mulf %11, %1257 : vector<1x128xf32>
    %1260 = arith.select %1258, %1259, %1166 : vector<1x128xi1>, vector<1x128xf32>
    %1261 = arith.mulf %13, %1257 : vector<1x128xf32>
    %1262 = arith.select %1258, %1261, %1178 : vector<1x128xi1>, vector<1x128xf32>
    %1263 = arith.addf %1244, %1245 : vector<1x128xf32>
    %1264 = arith.subf %1263, %58 : vector<1x128xf32>
    %1265 = arith.addf %1264, %1243 : vector<1x128xf32>
    %1266 = arith.mulf %1265, %76 : vector<1x128xf32>
    %cst_260 = arith.constant 0.000000e+00 : f32
    %1267 = vector.broadcast %cst_260 : f32 to vector<1x128xf32>
    %1268 = arith.maximumf %1266, %1267 : vector<1x128xf32>
    %1269 = arith.mulf %1243, %64 : vector<1x128xf32>
    %1270 = arith.cmpf olt, %1269, %1268 : vector<1x128xf32>
    %1271 = arith.mulf %15, %1268 : vector<1x128xf32>
    %1272 = arith.select %1270, %1271, %1243 : vector<1x128xi1>, vector<1x128xf32>
    %1273 = arith.subf %1272, %1243 : vector<1x128xf32>
    %1274 = arith.subf %1244, %1273 : vector<1x128xf32>
    %cst_261 = arith.constant 0.000000e+00 : f32
    %1275 = vector.broadcast %cst_261 : f32 to vector<1x128xf32>
    %1276 = arith.maximumf %1274, %1275 : vector<1x128xf32>
    %1277 = arith.select %1270, %1276, %1249 : vector<1x128xi1>, vector<1x128xf32>
    %1278 = arith.subf %1272, %1243 : vector<1x128xf32>
    %1279 = arith.subf %1278, %1244 : vector<1x128xf32>
    %cst_262 = arith.constant 0.000000e+00 : f32
    %1280 = vector.broadcast %cst_262 : f32 to vector<1x128xf32>
    %1281 = arith.maximumf %1279, %1280 : vector<1x128xf32>
    %1282 = arith.subf %1245, %1281 : vector<1x128xf32>
    %1283 = arith.select %1270, %1282, %1253 : vector<1x128xi1>, vector<1x128xf32>
    %1284 = arith.addf %1057, %1063 : vector<1x128xf32>
    %1285 = arith.addf %1284, %1069 : vector<1x128xf32>
    %1286 = arith.addf %1285, %1075 : vector<1x128xf32>
    %1287 = arith.addf %1152, %1153 : vector<1x128xf32>
    %1288 = arith.mulf %1287, %9 : vector<1x128xf32>
    %1289 = arith.addf %1100, %1288 : vector<1x128xf32>
    %1290 = arith.mulf %1161, %48 : vector<1x128xf32>
    %1291 = arith.addf %1289, %1290 : vector<1x128xf32>
    %cst_263 = arith.constant 1.000000e+03 : f32
    %1292 = vector.broadcast %cst_263 : f32 to vector<1x128xf32>
    %1293 = arith.mulf %1291, %1292 : vector<1x128xf32>
    %1294 = arith.mulf %35, %1063 : vector<1x128xf32>
    %1295 = arith.mulf %79, %1175 : vector<1x128xf32>
    %1296 = arith.mulf %1295, %50 : vector<1x128xf32>
    %1297 = arith.addf %1294, %1296 : vector<1x128xf32>
    %cst_264 = arith.constant 0.000000e+00 : f32
    %1298 = vector.broadcast %cst_264 : f32 to vector<1x128xf32>
    %1299 = arith.maximumf %1297, %1298 : vector<1x128xf32>
    %1300 = arith.mulf %37, %1069 : vector<1x128xf32>
    %1301 = arith.mulf %81, %1246 : vector<1x128xf32>
    %1302 = arith.mulf %1301, %50 : vector<1x128xf32>
    %1303 = arith.addf %1300, %1302 : vector<1x128xf32>
    %cst_265 = arith.constant 0.000000e+00 : f32
    %1304 = vector.broadcast %cst_265 : f32 to vector<1x128xf32>
    %1305 = arith.maximumf %1303, %1304 : vector<1x128xf32>
    %1306 = arith.mulf %39, %1075 : vector<1x128xf32>
    %1307 = arith.mulf %83, %1250 : vector<1x128xf32>
    %1308 = arith.mulf %1307, %50 : vector<1x128xf32>
    %1309 = arith.addf %1306, %1308 : vector<1x128xf32>
    %cst_266 = arith.constant 0.000000e+00 : f32
    %1310 = vector.broadcast %cst_266 : f32 to vector<1x128xf32>
    %1311 = arith.maximumf %1309, %1310 : vector<1x128xf32>
    %1312 = arith.addf %1293, %1299 : vector<1x128xf32>
    %1313 = arith.addf %1312, %1305 : vector<1x128xf32>
    %1314 = arith.addf %1313, %1311 : vector<1x128xf32>
    %1315 = arith.mulf %114, %1286 : vector<1x128xf32>
    %1316 = arith.mulf %102, %1314 : vector<1x128xf32>
    %1317 = arith.addf %1315, %1316 : vector<1x128xf32>
    %1318 = arith.mulf %110, %1083 : vector<1x128xf32>
    %1319 = arith.addf %1317, %1318 : vector<1x128xf32>
    %c5 = arith.constant 5 : index
    %c0_267 = arith.constant 0 : index
    %c0_268 = arith.constant 0 : index
    %1320 = vector.load %arg2[%c5, %c0_267, %c0_268] : memref<8x1x128xf32, #tpu.memory_space<vmem>>, vector<1x1x128xf32>
    %1321 = vector.shape_cast %1320 : vector<1x1x128xf32> to vector<1x128xf32>
    %cst_269 = arith.constant 0.000000e+00 : f32
    %1322 = vector.broadcast %cst_269 : f32 to vector<1x128xf32>
    %1323 = arith.maximumf %1321, %1322 : vector<1x128xf32>
    %c5_270 = arith.constant 5 : index
    %c0_271 = arith.constant 0 : index
    %c0_272 = arith.constant 0 : index
    %1324 = vector.load %arg3[%c5_270, %c0_271, %c0_272] : memref<8x1x128xf32, #tpu.memory_space<vmem>>, vector<1x1x128xf32>
    %1325 = vector.shape_cast %1324 : vector<1x1x128xf32> to vector<1x128xf32>
    %1326 = arith.cmpf oeq, %1325, %1325 : vector<1x128xf32>
    %1327 = math.absf %1325 : vector<1x128xf32>
    %cst_273 = arith.constant 0x7F800000 : f32
    %1328 = vector.broadcast %cst_273 : f32 to vector<1x128xf32>
    %1329 = arith.cmpf olt, %1327, %1328 : vector<1x128xf32>
    %1330 = arith.andi %1326, %1329 : vector<1x128xi1>
    %cst_274 = arith.constant 0.000000e+00 : f32
    %1331 = vector.broadcast %cst_274 : f32 to vector<1x128xf32>
    %1332 = arith.select %1330, %1325, %1331 : vector<1x128xi1>, vector<1x128xf32>
    %cst_275 = arith.constant 0.000000e+00 : f32
    %1333 = vector.broadcast %cst_275 : f32 to vector<1x128xf32>
    %1334 = arith.maximumf %1332, %1333 : vector<1x128xf32>
    %1335 = arith.mulf %5, %1334 : vector<1x128xf32>
    %1336 = arith.mulf %7, %1323 : vector<1x128xf32>
    %1337 = arith.mulf %1129, %60 : vector<1x128xf32>
    %1338 = arith.mulf %1335, %1337 : vector<1x128xf32>
    %1339 = arith.minimumf %1129, %1338 : vector<1x128xf32>
    %1340 = arith.subf %1335, %1339 : vector<1x128xf32>
    %1341 = arith.mulf %1135, %68 : vector<1x128xf32>
    %1342 = arith.mulf %1340, %1341 : vector<1x128xf32>
    %cst_276 = arith.constant 0.000000e+00 : f32
    %1343 = vector.broadcast %cst_276 : f32 to vector<1x128xf32>
    %1344 = arith.maximumf %1342, %1343 : vector<1x128xf32>
    %1345 = arith.subf %1129, %1339 : vector<1x128xf32>
    %1346 = arith.subf %11, %1345 : vector<1x128xf32>
    %1347 = arith.subf %1323, %1346 : vector<1x128xf32>
    %cst_277 = arith.constant 0.000000e+00 : f32
    %1348 = vector.broadcast %cst_277 : f32 to vector<1x128xf32>
    %1349 = arith.maximumf %1347, %1348 : vector<1x128xf32>
    %1350 = arith.subf %1135, %1344 : vector<1x128xf32>
    %1351 = arith.mulf %1350, %64 : vector<1x128xf32>
    %1352 = arith.mulf %1349, %1351 : vector<1x128xf32>
    %cst_278 = arith.constant 0.000000e+00 : f32
    %1353 = vector.broadcast %cst_278 : f32 to vector<1x128xf32>
    %1354 = arith.maximumf %1352, %1353 : vector<1x128xf32>
    %1355 = arith.subf %1349, %1354 : vector<1x128xf32>
    %1356 = arith.subf %1135, %1344 : vector<1x128xf32>
    %1357 = arith.addf %1355, %1356 : vector<1x128xf32>
    %1358 = arith.subf %1357, %15 : vector<1x128xf32>
    %cst_279 = arith.constant 0.000000e+00 : f32
    %1359 = vector.broadcast %cst_279 : f32 to vector<1x128xf32>
    %1360 = arith.maximumf %1358, %1359 : vector<1x128xf32>
    %1361 = arith.subf %1129, %1339 : vector<1x128xf32>
    %1362 = arith.addf %1361, %1323 : vector<1x128xf32>
    %1363 = arith.minimumf %11, %1362 : vector<1x128xf32>
    %cst_280 = arith.constant 0.000000e+00 : f32
    %1364 = vector.broadcast %cst_280 : f32 to vector<1x128xf32>
    %1365 = arith.maximumf %1363, %1364 : vector<1x128xf32>
    %1366 = arith.subf %1349, %1354 : vector<1x128xf32>
    %1367 = arith.subf %1135, %1344 : vector<1x128xf32>
    %1368 = arith.addf %1366, %1367 : vector<1x128xf32>
    %1369 = arith.minimumf %15, %1368 : vector<1x128xf32>
    %cst_281 = arith.constant 0.000000e+00 : f32
    %1370 = vector.broadcast %cst_281 : f32 to vector<1x128xf32>
    %1371 = arith.maximumf %1369, %1370 : vector<1x128xf32>
    %1372 = arith.mulf %1260, %60 : vector<1x128xf32>
    %1373 = arith.mulf %1335, %1372 : vector<1x128xf32>
    %1374 = arith.minimumf %1260, %1373 : vector<1x128xf32>
    %1375 = arith.subf %1335, %1374 : vector<1x128xf32>
    %1376 = arith.minimumf %1262, %1375 : vector<1x128xf32>
    %cst_282 = arith.constant 0.000000e+00 : f32
    %1377 = vector.broadcast %cst_282 : f32 to vector<1x128xf32>
    %1378 = arith.maximumf %1376, %1377 : vector<1x128xf32>
    %1379 = arith.subf %1335, %1374 : vector<1x128xf32>
    %1380 = arith.subf %1379, %1378 : vector<1x128xf32>
    %1381 = arith.mulf %1272, %68 : vector<1x128xf32>
    %1382 = arith.mulf %1380, %1381 : vector<1x128xf32>
    %cst_283 = arith.constant 0.000000e+00 : f32
    %1383 = vector.broadcast %cst_283 : f32 to vector<1x128xf32>
    %1384 = arith.maximumf %1382, %1383 : vector<1x128xf32>
    %1385 = arith.subf %1272, %1384 : vector<1x128xf32>
    %cst_284 = arith.constant 0.000000e+00 : f32
    %1386 = vector.broadcast %cst_284 : f32 to vector<1x128xf32>
    %1387 = arith.maximumf %1385, %1386 : vector<1x128xf32>
    %1388 = arith.mulf %1354, %9 : vector<1x128xf32>
    %1389 = arith.mulf %1360, %9 : vector<1x128xf32>
    %1390 = arith.addf %1260, %1262 : vector<1x128xf32>
    %1391 = arith.subf %1390, %1374 : vector<1x128xf32>
    %1392 = arith.subf %1391, %1378 : vector<1x128xf32>
    %1393 = arith.addf %1323, %1392 : vector<1x128xf32>
    %1394 = arith.subf %1393, %55 : vector<1x128xf32>
    %cst_285 = arith.constant 0.000000e+00 : f32
    %1395 = vector.broadcast %cst_285 : f32 to vector<1x128xf32>
    %1396 = arith.maximumf %1394, %1395 : vector<1x128xf32>
    %1397 = arith.mulf %1396, %46 : vector<1x128xf32>
    %1398 = arith.subf %1260, %1374 : vector<1x128xf32>
    %1399 = arith.addf %1398, %1323 : vector<1x128xf32>
    %1400 = arith.minimumf %11, %1399 : vector<1x128xf32>
    %cst_286 = arith.constant 0.000000e+00 : f32
    %1401 = vector.broadcast %cst_286 : f32 to vector<1x128xf32>
    %1402 = arith.maximumf %1400, %1401 : vector<1x128xf32>
    %1403 = arith.addf %1260, %1262 : vector<1x128xf32>
    %1404 = arith.subf %1403, %1374 : vector<1x128xf32>
    %1405 = arith.subf %1404, %1378 : vector<1x128xf32>
    %1406 = arith.addf %1323, %1405 : vector<1x128xf32>
    %1407 = arith.subf %1406, %1402 : vector<1x128xf32>
    %1408 = arith.minimumf %13, %1407 : vector<1x128xf32>
    %cst_287 = arith.constant 0.000000e+00 : f32
    %1409 = vector.broadcast %cst_287 : f32 to vector<1x128xf32>
    %1410 = arith.maximumf %1408, %1409 : vector<1x128xf32>
    %1411 = arith.mulf %1410, %29 : vector<1x128xf32>
    %1412 = arith.subf %1410, %1411 : vector<1x128xf32>
    %cst_288 = arith.constant 0.000000e+00 : f32
    %1413 = vector.broadcast %cst_288 : f32 to vector<1x128xf32>
    %1414 = arith.maximumf %1412, %1413 : vector<1x128xf32>
    %1415 = arith.addf %1277, %1283 : vector<1x128xf32>
    %1416 = arith.addf %1415, %1387 : vector<1x128xf32>
    %1417 = arith.mulf %1416, %72 : vector<1x128xf32>
    %cst_289 = arith.constant 1.000000e+00 : f32
    %1418 = vector.broadcast %cst_289 : f32 to vector<1x128xf32>
    %1419 = arith.subf %1418, %1417 : vector<1x128xf32>
    %cst_290 = arith.constant 0.000000e+00 : f32
    %1420 = vector.broadcast %cst_290 : f32 to vector<1x128xf32>
    %1421 = arith.maximumf %1419, %1420 : vector<1x128xf32>
    %cst_291 = arith.constant 0.000000e+00 : f32
    %1422 = vector.broadcast %cst_291 : f32 to vector<1x128xf32>
    %1423 = arith.cmpf ogt, %1421, %1422 : vector<1x128xf32>
    %cst_292 = arith.constant 0.000000e+00 : f32
    %1424 = vector.broadcast %cst_292 : f32 to vector<1x128xf32>
    %1425 = arith.cmpf ogt, %1421, %1424 : vector<1x128xf32>
    %cst_293 = arith.constant 1.000000e+00 : f32
    %1426 = vector.broadcast %cst_293 : f32 to vector<1x128xf32>
    %1427 = arith.select %1425, %1421, %1426 : vector<1x128xi1>, vector<1x128xf32>
    %1428 = math.log %1427 : vector<1x128xf32>
    %1429 = arith.mulf %27, %1428 : vector<1x128xf32>
    %1430 = math.exp %1429 : vector<1x128xf32>
    %cst_294 = arith.constant 0.000000e+00 : f32
    %1431 = vector.broadcast %cst_294 : f32 to vector<1x128xf32>
    %1432 = arith.select %1423, %1430, %1431 : vector<1x128xi1>, vector<1x128xf32>
    %1433 = arith.mulf %25, %1432 : vector<1x128xf32>
    %cst_295 = arith.constant 1.000000e+00 : f32
    %1434 = vector.broadcast %cst_295 : f32 to vector<1x128xf32>
    %1435 = arith.addf %1434, %1433 : vector<1x128xf32>
    %1436 = arith.mulf %53, %1435 : vector<1x128xf32>
    %1437 = arith.mulf %1436, %1414 : vector<1x128xf32>
    %1438 = arith.mulf %1437, %62 : vector<1x128xf32>
    %1439 = arith.addf %1277, %1283 : vector<1x128xf32>
    %1440 = arith.addf %1439, %1387 : vector<1x128xf32>
    %1441 = arith.subf %57, %1440 : vector<1x128xf32>
    %1442 = arith.minimumf %1438, %1441 : vector<1x128xf32>
    %cst_296 = arith.constant 0.000000e+00 : f32
    %1443 = vector.broadcast %cst_296 : f32 to vector<1x128xf32>
    %1444 = arith.maximumf %1442, %1443 : vector<1x128xf32>
    %1445 = arith.addf %1277, %1283 : vector<1x128xf32>
    %1446 = arith.subf %56, %1445 : vector<1x128xf32>
    %1447 = arith.subf %15, %1387 : vector<1x128xf32>
    %1448 = arith.subf %1444, %1447 : vector<1x128xf32>
    %1449 = arith.mulf %1444, %23 : vector<1x128xf32>
    %1450 = arith.maximumf %1448, %1449 : vector<1x128xf32>
    %1451 = arith.minimumf %1446, %1450 : vector<1x128xf32>
    %cst_297 = arith.constant 0.000000e+00 : f32
    %1452 = vector.broadcast %cst_297 : f32 to vector<1x128xf32>
    %1453 = arith.maximumf %1451, %1452 : vector<1x128xf32>
    %1454 = arith.subf %1444, %1453 : vector<1x128xf32>
    %cst_298 = arith.constant 0.000000e+00 : f32
    %1455 = vector.broadcast %cst_298 : f32 to vector<1x128xf32>
    %1456 = arith.maximumf %1454, %1455 : vector<1x128xf32>
    %1457 = arith.mulf %1283, %66 : vector<1x128xf32>
    %cst_299 = arith.constant 1.000000e+00 : f32
    %1458 = vector.broadcast %cst_299 : f32 to vector<1x128xf32>
    %1459 = arith.subf %1458, %1457 : vector<1x128xf32>
    %cst_300 = arith.constant 2.000000e+00 : f32
    %1460 = vector.broadcast %cst_300 : f32 to vector<1x128xf32>
    %1461 = arith.mulf %1460, %1459 : vector<1x128xf32>
    %1462 = arith.divf %1461, %1459 : vector<1x128xf32>
    %1463 = arith.mulf %77, %1462 : vector<1x128xf32>
    %cst_301 = arith.constant 0.000000e+00 : f32
    %cst_302 = arith.constant 1.000000e+00 : f32
    %1464 = vector.broadcast %cst_301 : f32 to vector<1x128xf32>
    %1465 = arith.maximumf %1464, %1463 : vector<1x128xf32>
    %1466 = vector.broadcast %cst_302 : f32 to vector<1x128xf32>
    %1467 = arith.minimumf %1466, %1465 : vector<1x128xf32>
    %1468 = arith.subf %19, %1283 : vector<1x128xf32>
    %1469 = arith.subf %17, %1277 : vector<1x128xf32>
    %1470 = arith.subf %1453, %1469 : vector<1x128xf32>
    %1471 = arith.mulf %1467, %1453 : vector<1x128xf32>
    %1472 = arith.maximumf %1470, %1471 : vector<1x128xf32>
    %1473 = arith.minimumf %1468, %1472 : vector<1x128xf32>
    %cst_303 = arith.constant 0.000000e+00 : f32
    %1474 = vector.broadcast %cst_303 : f32 to vector<1x128xf32>
    %1475 = arith.maximumf %1473, %1474 : vector<1x128xf32>
    %1476 = arith.subf %1453, %1475 : vector<1x128xf32>
    %cst_304 = arith.constant 0.000000e+00 : f32
    %1477 = vector.broadcast %cst_304 : f32 to vector<1x128xf32>
    %1478 = arith.maximumf %1476, %1477 : vector<1x128xf32>
    %1479 = arith.addf %1387, %1456 : vector<1x128xf32>
    %1480 = arith.addf %1277, %1478 : vector<1x128xf32>
    %1481 = arith.addf %1283, %1475 : vector<1x128xf32>
    %1482 = arith.mulf %1480, %31 : vector<1x128xf32>
    %1483 = arith.subf %1480, %1482 : vector<1x128xf32>
    %cst_305 = arith.constant 0.000000e+00 : f32
    %1484 = vector.broadcast %cst_305 : f32 to vector<1x128xf32>
    %1485 = arith.maximumf %1483, %1484 : vector<1x128xf32>
    %1486 = arith.mulf %1481, %33 : vector<1x128xf32>
    %1487 = arith.subf %1481, %1486 : vector<1x128xf32>
    %cst_306 = arith.constant 0.000000e+00 : f32
    %1488 = vector.broadcast %cst_306 : f32 to vector<1x128xf32>
    %1489 = arith.maximumf %1487, %1488 : vector<1x128xf32>
    %1490 = arith.mulf %1402, %60 : vector<1x128xf32>
    %1491 = arith.mulf %1414, %62 : vector<1x128xf32>
    %1492 = arith.addf %1402, %1414 : vector<1x128xf32>
    %1493 = arith.mulf %1492, %70 : vector<1x128xf32>
    %1494 = arith.cmpf olt, %1490, %1491 : vector<1x128xf32>
    %1495 = arith.mulf %11, %1493 : vector<1x128xf32>
    %1496 = arith.select %1494, %1495, %1402 : vector<1x128xi1>, vector<1x128xf32>
    %1497 = arith.mulf %13, %1493 : vector<1x128xf32>
    %1498 = arith.select %1494, %1497, %1414 : vector<1x128xi1>, vector<1x128xf32>
    %1499 = arith.addf %1480, %1481 : vector<1x128xf32>
    %1500 = arith.subf %1499, %58 : vector<1x128xf32>
    %1501 = arith.addf %1500, %1479 : vector<1x128xf32>
    %1502 = arith.mulf %1501, %76 : vector<1x128xf32>
    %cst_307 = arith.constant 0.000000e+00 : f32
    %1503 = vector.broadcast %cst_307 : f32 to vector<1x128xf32>
    %1504 = arith.maximumf %1502, %1503 : vector<1x128xf32>
    %1505 = arith.mulf %1479, %64 : vector<1x128xf32>
    %1506 = arith.cmpf olt, %1505, %1504 : vector<1x128xf32>
    %1507 = arith.mulf %15, %1504 : vector<1x128xf32>
    %1508 = arith.select %1506, %1507, %1479 : vector<1x128xi1>, vector<1x128xf32>
    %1509 = arith.subf %1508, %1479 : vector<1x128xf32>
    %1510 = arith.subf %1480, %1509 : vector<1x128xf32>
    %cst_308 = arith.constant 0.000000e+00 : f32
    %1511 = vector.broadcast %cst_308 : f32 to vector<1x128xf32>
    %1512 = arith.maximumf %1510, %1511 : vector<1x128xf32>
    %1513 = arith.select %1506, %1512, %1485 : vector<1x128xi1>, vector<1x128xf32>
    %1514 = arith.subf %1508, %1479 : vector<1x128xf32>
    %1515 = arith.subf %1514, %1480 : vector<1x128xf32>
    %cst_309 = arith.constant 0.000000e+00 : f32
    %1516 = vector.broadcast %cst_309 : f32 to vector<1x128xf32>
    %1517 = arith.maximumf %1515, %1516 : vector<1x128xf32>
    %1518 = arith.subf %1481, %1517 : vector<1x128xf32>
    %1519 = arith.select %1506, %1518, %1489 : vector<1x128xi1>, vector<1x128xf32>
    %1520 = arith.addf %1293, %1299 : vector<1x128xf32>
    %1521 = arith.addf %1520, %1305 : vector<1x128xf32>
    %1522 = arith.addf %1521, %1311 : vector<1x128xf32>
    %1523 = arith.addf %1388, %1389 : vector<1x128xf32>
    %1524 = arith.mulf %1523, %9 : vector<1x128xf32>
    %1525 = arith.addf %1336, %1524 : vector<1x128xf32>
    %1526 = arith.mulf %1397, %48 : vector<1x128xf32>
    %1527 = arith.addf %1525, %1526 : vector<1x128xf32>
    %cst_310 = arith.constant 1.000000e+03 : f32
    %1528 = vector.broadcast %cst_310 : f32 to vector<1x128xf32>
    %1529 = arith.mulf %1527, %1528 : vector<1x128xf32>
    %1530 = arith.mulf %35, %1299 : vector<1x128xf32>
    %1531 = arith.mulf %79, %1411 : vector<1x128xf32>
    %1532 = arith.mulf %1531, %50 : vector<1x128xf32>
    %1533 = arith.addf %1530, %1532 : vector<1x128xf32>
    %cst_311 = arith.constant 0.000000e+00 : f32
    %1534 = vector.broadcast %cst_311 : f32 to vector<1x128xf32>
    %1535 = arith.maximumf %1533, %1534 : vector<1x128xf32>
    %1536 = arith.mulf %37, %1305 : vector<1x128xf32>
    %1537 = arith.mulf %81, %1482 : vector<1x128xf32>
    %1538 = arith.mulf %1537, %50 : vector<1x128xf32>
    %1539 = arith.addf %1536, %1538 : vector<1x128xf32>
    %cst_312 = arith.constant 0.000000e+00 : f32
    %1540 = vector.broadcast %cst_312 : f32 to vector<1x128xf32>
    %1541 = arith.maximumf %1539, %1540 : vector<1x128xf32>
    %1542 = arith.mulf %39, %1311 : vector<1x128xf32>
    %1543 = arith.mulf %83, %1486 : vector<1x128xf32>
    %1544 = arith.mulf %1543, %50 : vector<1x128xf32>
    %1545 = arith.addf %1542, %1544 : vector<1x128xf32>
    %cst_313 = arith.constant 0.000000e+00 : f32
    %1546 = vector.broadcast %cst_313 : f32 to vector<1x128xf32>
    %1547 = arith.maximumf %1545, %1546 : vector<1x128xf32>
    %1548 = arith.addf %1529, %1535 : vector<1x128xf32>
    %1549 = arith.addf %1548, %1541 : vector<1x128xf32>
    %1550 = arith.addf %1549, %1547 : vector<1x128xf32>
    %1551 = arith.mulf %114, %1522 : vector<1x128xf32>
    %1552 = arith.mulf %102, %1550 : vector<1x128xf32>
    %1553 = arith.addf %1551, %1552 : vector<1x128xf32>
    %1554 = arith.mulf %110, %1319 : vector<1x128xf32>
    %1555 = arith.addf %1553, %1554 : vector<1x128xf32>
    %c6 = arith.constant 6 : index
    %c0_314 = arith.constant 0 : index
    %c0_315 = arith.constant 0 : index
    %1556 = vector.load %arg2[%c6, %c0_314, %c0_315] : memref<8x1x128xf32, #tpu.memory_space<vmem>>, vector<1x1x128xf32>
    %1557 = vector.shape_cast %1556 : vector<1x1x128xf32> to vector<1x128xf32>
    %cst_316 = arith.constant 0.000000e+00 : f32
    %1558 = vector.broadcast %cst_316 : f32 to vector<1x128xf32>
    %1559 = arith.maximumf %1557, %1558 : vector<1x128xf32>
    %c6_317 = arith.constant 6 : index
    %c0_318 = arith.constant 0 : index
    %c0_319 = arith.constant 0 : index
    %1560 = vector.load %arg3[%c6_317, %c0_318, %c0_319] : memref<8x1x128xf32, #tpu.memory_space<vmem>>, vector<1x1x128xf32>
    %1561 = vector.shape_cast %1560 : vector<1x1x128xf32> to vector<1x128xf32>
    %1562 = arith.cmpf oeq, %1561, %1561 : vector<1x128xf32>
    %1563 = math.absf %1561 : vector<1x128xf32>
    %cst_320 = arith.constant 0x7F800000 : f32
    %1564 = vector.broadcast %cst_320 : f32 to vector<1x128xf32>
    %1565 = arith.cmpf olt, %1563, %1564 : vector<1x128xf32>
    %1566 = arith.andi %1562, %1565 : vector<1x128xi1>
    %cst_321 = arith.constant 0.000000e+00 : f32
    %1567 = vector.broadcast %cst_321 : f32 to vector<1x128xf32>
    %1568 = arith.select %1566, %1561, %1567 : vector<1x128xi1>, vector<1x128xf32>
    %cst_322 = arith.constant 0.000000e+00 : f32
    %1569 = vector.broadcast %cst_322 : f32 to vector<1x128xf32>
    %1570 = arith.maximumf %1568, %1569 : vector<1x128xf32>
    %1571 = arith.mulf %5, %1570 : vector<1x128xf32>
    %1572 = arith.mulf %7, %1559 : vector<1x128xf32>
    %1573 = arith.mulf %1365, %60 : vector<1x128xf32>
    %1574 = arith.mulf %1571, %1573 : vector<1x128xf32>
    %1575 = arith.minimumf %1365, %1574 : vector<1x128xf32>
    %1576 = arith.subf %1571, %1575 : vector<1x128xf32>
    %1577 = arith.mulf %1371, %68 : vector<1x128xf32>
    %1578 = arith.mulf %1576, %1577 : vector<1x128xf32>
    %cst_323 = arith.constant 0.000000e+00 : f32
    %1579 = vector.broadcast %cst_323 : f32 to vector<1x128xf32>
    %1580 = arith.maximumf %1578, %1579 : vector<1x128xf32>
    %1581 = arith.subf %1365, %1575 : vector<1x128xf32>
    %1582 = arith.subf %11, %1581 : vector<1x128xf32>
    %1583 = arith.subf %1559, %1582 : vector<1x128xf32>
    %cst_324 = arith.constant 0.000000e+00 : f32
    %1584 = vector.broadcast %cst_324 : f32 to vector<1x128xf32>
    %1585 = arith.maximumf %1583, %1584 : vector<1x128xf32>
    %1586 = arith.subf %1371, %1580 : vector<1x128xf32>
    %1587 = arith.mulf %1586, %64 : vector<1x128xf32>
    %1588 = arith.mulf %1585, %1587 : vector<1x128xf32>
    %cst_325 = arith.constant 0.000000e+00 : f32
    %1589 = vector.broadcast %cst_325 : f32 to vector<1x128xf32>
    %1590 = arith.maximumf %1588, %1589 : vector<1x128xf32>
    %1591 = arith.subf %1585, %1590 : vector<1x128xf32>
    %1592 = arith.subf %1371, %1580 : vector<1x128xf32>
    %1593 = arith.addf %1591, %1592 : vector<1x128xf32>
    %1594 = arith.subf %1593, %15 : vector<1x128xf32>
    %cst_326 = arith.constant 0.000000e+00 : f32
    %1595 = vector.broadcast %cst_326 : f32 to vector<1x128xf32>
    %1596 = arith.maximumf %1594, %1595 : vector<1x128xf32>
    %1597 = arith.subf %1365, %1575 : vector<1x128xf32>
    %1598 = arith.addf %1597, %1559 : vector<1x128xf32>
    %1599 = arith.minimumf %11, %1598 : vector<1x128xf32>
    %cst_327 = arith.constant 0.000000e+00 : f32
    %1600 = vector.broadcast %cst_327 : f32 to vector<1x128xf32>
    %1601 = arith.maximumf %1599, %1600 : vector<1x128xf32>
    %1602 = arith.subf %1585, %1590 : vector<1x128xf32>
    %1603 = arith.subf %1371, %1580 : vector<1x128xf32>
    %1604 = arith.addf %1602, %1603 : vector<1x128xf32>
    %1605 = arith.minimumf %15, %1604 : vector<1x128xf32>
    %cst_328 = arith.constant 0.000000e+00 : f32
    %1606 = vector.broadcast %cst_328 : f32 to vector<1x128xf32>
    %1607 = arith.maximumf %1605, %1606 : vector<1x128xf32>
    %1608 = arith.mulf %1496, %60 : vector<1x128xf32>
    %1609 = arith.mulf %1571, %1608 : vector<1x128xf32>
    %1610 = arith.minimumf %1496, %1609 : vector<1x128xf32>
    %1611 = arith.subf %1571, %1610 : vector<1x128xf32>
    %1612 = arith.minimumf %1498, %1611 : vector<1x128xf32>
    %cst_329 = arith.constant 0.000000e+00 : f32
    %1613 = vector.broadcast %cst_329 : f32 to vector<1x128xf32>
    %1614 = arith.maximumf %1612, %1613 : vector<1x128xf32>
    %1615 = arith.subf %1571, %1610 : vector<1x128xf32>
    %1616 = arith.subf %1615, %1614 : vector<1x128xf32>
    %1617 = arith.mulf %1508, %68 : vector<1x128xf32>
    %1618 = arith.mulf %1616, %1617 : vector<1x128xf32>
    %cst_330 = arith.constant 0.000000e+00 : f32
    %1619 = vector.broadcast %cst_330 : f32 to vector<1x128xf32>
    %1620 = arith.maximumf %1618, %1619 : vector<1x128xf32>
    %1621 = arith.subf %1508, %1620 : vector<1x128xf32>
    %cst_331 = arith.constant 0.000000e+00 : f32
    %1622 = vector.broadcast %cst_331 : f32 to vector<1x128xf32>
    %1623 = arith.maximumf %1621, %1622 : vector<1x128xf32>
    %1624 = arith.mulf %1590, %9 : vector<1x128xf32>
    %1625 = arith.mulf %1596, %9 : vector<1x128xf32>
    %1626 = arith.addf %1496, %1498 : vector<1x128xf32>
    %1627 = arith.subf %1626, %1610 : vector<1x128xf32>
    %1628 = arith.subf %1627, %1614 : vector<1x128xf32>
    %1629 = arith.addf %1559, %1628 : vector<1x128xf32>
    %1630 = arith.subf %1629, %55 : vector<1x128xf32>
    %cst_332 = arith.constant 0.000000e+00 : f32
    %1631 = vector.broadcast %cst_332 : f32 to vector<1x128xf32>
    %1632 = arith.maximumf %1630, %1631 : vector<1x128xf32>
    %1633 = arith.mulf %1632, %46 : vector<1x128xf32>
    %1634 = arith.subf %1496, %1610 : vector<1x128xf32>
    %1635 = arith.addf %1634, %1559 : vector<1x128xf32>
    %1636 = arith.minimumf %11, %1635 : vector<1x128xf32>
    %cst_333 = arith.constant 0.000000e+00 : f32
    %1637 = vector.broadcast %cst_333 : f32 to vector<1x128xf32>
    %1638 = arith.maximumf %1636, %1637 : vector<1x128xf32>
    %1639 = arith.addf %1496, %1498 : vector<1x128xf32>
    %1640 = arith.subf %1639, %1610 : vector<1x128xf32>
    %1641 = arith.subf %1640, %1614 : vector<1x128xf32>
    %1642 = arith.addf %1559, %1641 : vector<1x128xf32>
    %1643 = arith.subf %1642, %1638 : vector<1x128xf32>
    %1644 = arith.minimumf %13, %1643 : vector<1x128xf32>
    %cst_334 = arith.constant 0.000000e+00 : f32
    %1645 = vector.broadcast %cst_334 : f32 to vector<1x128xf32>
    %1646 = arith.maximumf %1644, %1645 : vector<1x128xf32>
    %1647 = arith.mulf %1646, %29 : vector<1x128xf32>
    %1648 = arith.subf %1646, %1647 : vector<1x128xf32>
    %cst_335 = arith.constant 0.000000e+00 : f32
    %1649 = vector.broadcast %cst_335 : f32 to vector<1x128xf32>
    %1650 = arith.maximumf %1648, %1649 : vector<1x128xf32>
    %1651 = arith.addf %1513, %1519 : vector<1x128xf32>
    %1652 = arith.addf %1651, %1623 : vector<1x128xf32>
    %1653 = arith.mulf %1652, %72 : vector<1x128xf32>
    %cst_336 = arith.constant 1.000000e+00 : f32
    %1654 = vector.broadcast %cst_336 : f32 to vector<1x128xf32>
    %1655 = arith.subf %1654, %1653 : vector<1x128xf32>
    %cst_337 = arith.constant 0.000000e+00 : f32
    %1656 = vector.broadcast %cst_337 : f32 to vector<1x128xf32>
    %1657 = arith.maximumf %1655, %1656 : vector<1x128xf32>
    %cst_338 = arith.constant 0.000000e+00 : f32
    %1658 = vector.broadcast %cst_338 : f32 to vector<1x128xf32>
    %1659 = arith.cmpf ogt, %1657, %1658 : vector<1x128xf32>
    %cst_339 = arith.constant 0.000000e+00 : f32
    %1660 = vector.broadcast %cst_339 : f32 to vector<1x128xf32>
    %1661 = arith.cmpf ogt, %1657, %1660 : vector<1x128xf32>
    %cst_340 = arith.constant 1.000000e+00 : f32
    %1662 = vector.broadcast %cst_340 : f32 to vector<1x128xf32>
    %1663 = arith.select %1661, %1657, %1662 : vector<1x128xi1>, vector<1x128xf32>
    %1664 = math.log %1663 : vector<1x128xf32>
    %1665 = arith.mulf %27, %1664 : vector<1x128xf32>
    %1666 = math.exp %1665 : vector<1x128xf32>
    %cst_341 = arith.constant 0.000000e+00 : f32
    %1667 = vector.broadcast %cst_341 : f32 to vector<1x128xf32>
    %1668 = arith.select %1659, %1666, %1667 : vector<1x128xi1>, vector<1x128xf32>
    %1669 = arith.mulf %25, %1668 : vector<1x128xf32>
    %cst_342 = arith.constant 1.000000e+00 : f32
    %1670 = vector.broadcast %cst_342 : f32 to vector<1x128xf32>
    %1671 = arith.addf %1670, %1669 : vector<1x128xf32>
    %1672 = arith.mulf %53, %1671 : vector<1x128xf32>
    %1673 = arith.mulf %1672, %1650 : vector<1x128xf32>
    %1674 = arith.mulf %1673, %62 : vector<1x128xf32>
    %1675 = arith.addf %1513, %1519 : vector<1x128xf32>
    %1676 = arith.addf %1675, %1623 : vector<1x128xf32>
    %1677 = arith.subf %57, %1676 : vector<1x128xf32>
    %1678 = arith.minimumf %1674, %1677 : vector<1x128xf32>
    %cst_343 = arith.constant 0.000000e+00 : f32
    %1679 = vector.broadcast %cst_343 : f32 to vector<1x128xf32>
    %1680 = arith.maximumf %1678, %1679 : vector<1x128xf32>
    %1681 = arith.addf %1513, %1519 : vector<1x128xf32>
    %1682 = arith.subf %56, %1681 : vector<1x128xf32>
    %1683 = arith.subf %15, %1623 : vector<1x128xf32>
    %1684 = arith.subf %1680, %1683 : vector<1x128xf32>
    %1685 = arith.mulf %1680, %23 : vector<1x128xf32>
    %1686 = arith.maximumf %1684, %1685 : vector<1x128xf32>
    %1687 = arith.minimumf %1682, %1686 : vector<1x128xf32>
    %cst_344 = arith.constant 0.000000e+00 : f32
    %1688 = vector.broadcast %cst_344 : f32 to vector<1x128xf32>
    %1689 = arith.maximumf %1687, %1688 : vector<1x128xf32>
    %1690 = arith.subf %1680, %1689 : vector<1x128xf32>
    %cst_345 = arith.constant 0.000000e+00 : f32
    %1691 = vector.broadcast %cst_345 : f32 to vector<1x128xf32>
    %1692 = arith.maximumf %1690, %1691 : vector<1x128xf32>
    %1693 = arith.mulf %1519, %66 : vector<1x128xf32>
    %cst_346 = arith.constant 1.000000e+00 : f32
    %1694 = vector.broadcast %cst_346 : f32 to vector<1x128xf32>
    %1695 = arith.subf %1694, %1693 : vector<1x128xf32>
    %cst_347 = arith.constant 2.000000e+00 : f32
    %1696 = vector.broadcast %cst_347 : f32 to vector<1x128xf32>
    %1697 = arith.mulf %1696, %1695 : vector<1x128xf32>
    %1698 = arith.divf %1697, %1695 : vector<1x128xf32>
    %1699 = arith.mulf %77, %1698 : vector<1x128xf32>
    %cst_348 = arith.constant 0.000000e+00 : f32
    %cst_349 = arith.constant 1.000000e+00 : f32
    %1700 = vector.broadcast %cst_348 : f32 to vector<1x128xf32>
    %1701 = arith.maximumf %1700, %1699 : vector<1x128xf32>
    %1702 = vector.broadcast %cst_349 : f32 to vector<1x128xf32>
    %1703 = arith.minimumf %1702, %1701 : vector<1x128xf32>
    %1704 = arith.subf %19, %1519 : vector<1x128xf32>
    %1705 = arith.subf %17, %1513 : vector<1x128xf32>
    %1706 = arith.subf %1689, %1705 : vector<1x128xf32>
    %1707 = arith.mulf %1703, %1689 : vector<1x128xf32>
    %1708 = arith.maximumf %1706, %1707 : vector<1x128xf32>
    %1709 = arith.minimumf %1704, %1708 : vector<1x128xf32>
    %cst_350 = arith.constant 0.000000e+00 : f32
    %1710 = vector.broadcast %cst_350 : f32 to vector<1x128xf32>
    %1711 = arith.maximumf %1709, %1710 : vector<1x128xf32>
    %1712 = arith.subf %1689, %1711 : vector<1x128xf32>
    %cst_351 = arith.constant 0.000000e+00 : f32
    %1713 = vector.broadcast %cst_351 : f32 to vector<1x128xf32>
    %1714 = arith.maximumf %1712, %1713 : vector<1x128xf32>
    %1715 = arith.addf %1623, %1692 : vector<1x128xf32>
    %1716 = arith.addf %1513, %1714 : vector<1x128xf32>
    %1717 = arith.addf %1519, %1711 : vector<1x128xf32>
    %1718 = arith.mulf %1716, %31 : vector<1x128xf32>
    %1719 = arith.subf %1716, %1718 : vector<1x128xf32>
    %cst_352 = arith.constant 0.000000e+00 : f32
    %1720 = vector.broadcast %cst_352 : f32 to vector<1x128xf32>
    %1721 = arith.maximumf %1719, %1720 : vector<1x128xf32>
    %1722 = arith.mulf %1717, %33 : vector<1x128xf32>
    %1723 = arith.subf %1717, %1722 : vector<1x128xf32>
    %cst_353 = arith.constant 0.000000e+00 : f32
    %1724 = vector.broadcast %cst_353 : f32 to vector<1x128xf32>
    %1725 = arith.maximumf %1723, %1724 : vector<1x128xf32>
    %1726 = arith.mulf %1638, %60 : vector<1x128xf32>
    %1727 = arith.mulf %1650, %62 : vector<1x128xf32>
    %1728 = arith.addf %1638, %1650 : vector<1x128xf32>
    %1729 = arith.mulf %1728, %70 : vector<1x128xf32>
    %1730 = arith.cmpf olt, %1726, %1727 : vector<1x128xf32>
    %1731 = arith.mulf %11, %1729 : vector<1x128xf32>
    %1732 = arith.select %1730, %1731, %1638 : vector<1x128xi1>, vector<1x128xf32>
    %1733 = arith.mulf %13, %1729 : vector<1x128xf32>
    %1734 = arith.select %1730, %1733, %1650 : vector<1x128xi1>, vector<1x128xf32>
    %1735 = arith.addf %1716, %1717 : vector<1x128xf32>
    %1736 = arith.subf %1735, %58 : vector<1x128xf32>
    %1737 = arith.addf %1736, %1715 : vector<1x128xf32>
    %1738 = arith.mulf %1737, %76 : vector<1x128xf32>
    %cst_354 = arith.constant 0.000000e+00 : f32
    %1739 = vector.broadcast %cst_354 : f32 to vector<1x128xf32>
    %1740 = arith.maximumf %1738, %1739 : vector<1x128xf32>
    %1741 = arith.mulf %1715, %64 : vector<1x128xf32>
    %1742 = arith.cmpf olt, %1741, %1740 : vector<1x128xf32>
    %1743 = arith.mulf %15, %1740 : vector<1x128xf32>
    %1744 = arith.select %1742, %1743, %1715 : vector<1x128xi1>, vector<1x128xf32>
    %1745 = arith.subf %1744, %1715 : vector<1x128xf32>
    %1746 = arith.subf %1716, %1745 : vector<1x128xf32>
    %cst_355 = arith.constant 0.000000e+00 : f32
    %1747 = vector.broadcast %cst_355 : f32 to vector<1x128xf32>
    %1748 = arith.maximumf %1746, %1747 : vector<1x128xf32>
    %1749 = arith.select %1742, %1748, %1721 : vector<1x128xi1>, vector<1x128xf32>
    %1750 = arith.subf %1744, %1715 : vector<1x128xf32>
    %1751 = arith.subf %1750, %1716 : vector<1x128xf32>
    %cst_356 = arith.constant 0.000000e+00 : f32
    %1752 = vector.broadcast %cst_356 : f32 to vector<1x128xf32>
    %1753 = arith.maximumf %1751, %1752 : vector<1x128xf32>
    %1754 = arith.subf %1717, %1753 : vector<1x128xf32>
    %1755 = arith.select %1742, %1754, %1725 : vector<1x128xi1>, vector<1x128xf32>
    %1756 = arith.addf %1529, %1535 : vector<1x128xf32>
    %1757 = arith.addf %1756, %1541 : vector<1x128xf32>
    %1758 = arith.addf %1757, %1547 : vector<1x128xf32>
    %1759 = arith.addf %1624, %1625 : vector<1x128xf32>
    %1760 = arith.mulf %1759, %9 : vector<1x128xf32>
    %1761 = arith.addf %1572, %1760 : vector<1x128xf32>
    %1762 = arith.mulf %1633, %48 : vector<1x128xf32>
    %1763 = arith.addf %1761, %1762 : vector<1x128xf32>
    %cst_357 = arith.constant 1.000000e+03 : f32
    %1764 = vector.broadcast %cst_357 : f32 to vector<1x128xf32>
    %1765 = arith.mulf %1763, %1764 : vector<1x128xf32>
    %1766 = arith.mulf %35, %1535 : vector<1x128xf32>
    %1767 = arith.mulf %79, %1647 : vector<1x128xf32>
    %1768 = arith.mulf %1767, %50 : vector<1x128xf32>
    %1769 = arith.addf %1766, %1768 : vector<1x128xf32>
    %cst_358 = arith.constant 0.000000e+00 : f32
    %1770 = vector.broadcast %cst_358 : f32 to vector<1x128xf32>
    %1771 = arith.maximumf %1769, %1770 : vector<1x128xf32>
    %1772 = arith.mulf %37, %1541 : vector<1x128xf32>
    %1773 = arith.mulf %81, %1718 : vector<1x128xf32>
    %1774 = arith.mulf %1773, %50 : vector<1x128xf32>
    %1775 = arith.addf %1772, %1774 : vector<1x128xf32>
    %cst_359 = arith.constant 0.000000e+00 : f32
    %1776 = vector.broadcast %cst_359 : f32 to vector<1x128xf32>
    %1777 = arith.maximumf %1775, %1776 : vector<1x128xf32>
    %1778 = arith.mulf %39, %1547 : vector<1x128xf32>
    %1779 = arith.mulf %83, %1722 : vector<1x128xf32>
    %1780 = arith.mulf %1779, %50 : vector<1x128xf32>
    %1781 = arith.addf %1778, %1780 : vector<1x128xf32>
    %cst_360 = arith.constant 0.000000e+00 : f32
    %1782 = vector.broadcast %cst_360 : f32 to vector<1x128xf32>
    %1783 = arith.maximumf %1781, %1782 : vector<1x128xf32>
    %1784 = arith.addf %1765, %1771 : vector<1x128xf32>
    %1785 = arith.addf %1784, %1777 : vector<1x128xf32>
    %1786 = arith.addf %1785, %1783 : vector<1x128xf32>
    %1787 = arith.mulf %114, %1758 : vector<1x128xf32>
    %1788 = arith.mulf %102, %1786 : vector<1x128xf32>
    %1789 = arith.addf %1787, %1788 : vector<1x128xf32>
    %1790 = arith.mulf %110, %1555 : vector<1x128xf32>
    %1791 = arith.addf %1789, %1790 : vector<1x128xf32>
    %c7 = arith.constant 7 : index
    %c0_361 = arith.constant 0 : index
    %c0_362 = arith.constant 0 : index
    %1792 = vector.load %arg2[%c7, %c0_361, %c0_362] : memref<8x1x128xf32, #tpu.memory_space<vmem>>, vector<1x1x128xf32>
    %1793 = vector.shape_cast %1792 : vector<1x1x128xf32> to vector<1x128xf32>
    %cst_363 = arith.constant 0.000000e+00 : f32
    %1794 = vector.broadcast %cst_363 : f32 to vector<1x128xf32>
    %1795 = arith.maximumf %1793, %1794 : vector<1x128xf32>
    %c7_364 = arith.constant 7 : index
    %c0_365 = arith.constant 0 : index
    %c0_366 = arith.constant 0 : index
    %1796 = vector.load %arg3[%c7_364, %c0_365, %c0_366] : memref<8x1x128xf32, #tpu.memory_space<vmem>>, vector<1x1x128xf32>
    %1797 = vector.shape_cast %1796 : vector<1x1x128xf32> to vector<1x128xf32>
    %1798 = arith.cmpf oeq, %1797, %1797 : vector<1x128xf32>
    %1799 = math.absf %1797 : vector<1x128xf32>
    %cst_367 = arith.constant 0x7F800000 : f32
    %1800 = vector.broadcast %cst_367 : f32 to vector<1x128xf32>
    %1801 = arith.cmpf olt, %1799, %1800 : vector<1x128xf32>
    %1802 = arith.andi %1798, %1801 : vector<1x128xi1>
    %cst_368 = arith.constant 0.000000e+00 : f32
    %1803 = vector.broadcast %cst_368 : f32 to vector<1x128xf32>
    %1804 = arith.select %1802, %1797, %1803 : vector<1x128xi1>, vector<1x128xf32>
    %cst_369 = arith.constant 0.000000e+00 : f32
    %1805 = vector.broadcast %cst_369 : f32 to vector<1x128xf32>
    %1806 = arith.maximumf %1804, %1805 : vector<1x128xf32>
    %1807 = arith.mulf %5, %1806 : vector<1x128xf32>
    %1808 = arith.mulf %7, %1795 : vector<1x128xf32>
    %1809 = arith.mulf %1601, %60 : vector<1x128xf32>
    %1810 = arith.mulf %1807, %1809 : vector<1x128xf32>
    %1811 = arith.minimumf %1601, %1810 : vector<1x128xf32>
    %1812 = arith.subf %1807, %1811 : vector<1x128xf32>
    %1813 = arith.mulf %1607, %68 : vector<1x128xf32>
    %1814 = arith.mulf %1812, %1813 : vector<1x128xf32>
    %cst_370 = arith.constant 0.000000e+00 : f32
    %1815 = vector.broadcast %cst_370 : f32 to vector<1x128xf32>
    %1816 = arith.maximumf %1814, %1815 : vector<1x128xf32>
    %1817 = arith.subf %1601, %1811 : vector<1x128xf32>
    %1818 = arith.subf %11, %1817 : vector<1x128xf32>
    %1819 = arith.subf %1795, %1818 : vector<1x128xf32>
    %cst_371 = arith.constant 0.000000e+00 : f32
    %1820 = vector.broadcast %cst_371 : f32 to vector<1x128xf32>
    %1821 = arith.maximumf %1819, %1820 : vector<1x128xf32>
    %1822 = arith.subf %1607, %1816 : vector<1x128xf32>
    %1823 = arith.mulf %1822, %64 : vector<1x128xf32>
    %1824 = arith.mulf %1821, %1823 : vector<1x128xf32>
    %cst_372 = arith.constant 0.000000e+00 : f32
    %1825 = vector.broadcast %cst_372 : f32 to vector<1x128xf32>
    %1826 = arith.maximumf %1824, %1825 : vector<1x128xf32>
    %1827 = arith.subf %1821, %1826 : vector<1x128xf32>
    %1828 = arith.subf %1607, %1816 : vector<1x128xf32>
    %1829 = arith.addf %1827, %1828 : vector<1x128xf32>
    %1830 = arith.subf %1829, %15 : vector<1x128xf32>
    %cst_373 = arith.constant 0.000000e+00 : f32
    %1831 = vector.broadcast %cst_373 : f32 to vector<1x128xf32>
    %1832 = arith.maximumf %1830, %1831 : vector<1x128xf32>
    %1833 = arith.subf %1601, %1811 : vector<1x128xf32>
    %1834 = arith.addf %1833, %1795 : vector<1x128xf32>
    %1835 = arith.minimumf %11, %1834 : vector<1x128xf32>
    %cst_374 = arith.constant 0.000000e+00 : f32
    %1836 = vector.broadcast %cst_374 : f32 to vector<1x128xf32>
    %1837 = arith.maximumf %1835, %1836 : vector<1x128xf32>
    %1838 = arith.subf %1821, %1826 : vector<1x128xf32>
    %1839 = arith.subf %1607, %1816 : vector<1x128xf32>
    %1840 = arith.addf %1838, %1839 : vector<1x128xf32>
    %1841 = arith.minimumf %15, %1840 : vector<1x128xf32>
    %cst_375 = arith.constant 0.000000e+00 : f32
    %1842 = vector.broadcast %cst_375 : f32 to vector<1x128xf32>
    %1843 = arith.maximumf %1841, %1842 : vector<1x128xf32>
    %1844 = arith.mulf %1732, %60 : vector<1x128xf32>
    %1845 = arith.mulf %1807, %1844 : vector<1x128xf32>
    %1846 = arith.minimumf %1732, %1845 : vector<1x128xf32>
    %1847 = arith.subf %1807, %1846 : vector<1x128xf32>
    %1848 = arith.minimumf %1734, %1847 : vector<1x128xf32>
    %cst_376 = arith.constant 0.000000e+00 : f32
    %1849 = vector.broadcast %cst_376 : f32 to vector<1x128xf32>
    %1850 = arith.maximumf %1848, %1849 : vector<1x128xf32>
    %1851 = arith.subf %1807, %1846 : vector<1x128xf32>
    %1852 = arith.subf %1851, %1850 : vector<1x128xf32>
    %1853 = arith.mulf %1744, %68 : vector<1x128xf32>
    %1854 = arith.mulf %1852, %1853 : vector<1x128xf32>
    %cst_377 = arith.constant 0.000000e+00 : f32
    %1855 = vector.broadcast %cst_377 : f32 to vector<1x128xf32>
    %1856 = arith.maximumf %1854, %1855 : vector<1x128xf32>
    %1857 = arith.subf %1744, %1856 : vector<1x128xf32>
    %cst_378 = arith.constant 0.000000e+00 : f32
    %1858 = vector.broadcast %cst_378 : f32 to vector<1x128xf32>
    %1859 = arith.maximumf %1857, %1858 : vector<1x128xf32>
    %1860 = arith.mulf %1826, %9 : vector<1x128xf32>
    %1861 = arith.mulf %1832, %9 : vector<1x128xf32>
    %1862 = arith.addf %1732, %1734 : vector<1x128xf32>
    %1863 = arith.subf %1862, %1846 : vector<1x128xf32>
    %1864 = arith.subf %1863, %1850 : vector<1x128xf32>
    %1865 = arith.addf %1795, %1864 : vector<1x128xf32>
    %1866 = arith.subf %1865, %55 : vector<1x128xf32>
    %cst_379 = arith.constant 0.000000e+00 : f32
    %1867 = vector.broadcast %cst_379 : f32 to vector<1x128xf32>
    %1868 = arith.maximumf %1866, %1867 : vector<1x128xf32>
    %1869 = arith.mulf %1868, %46 : vector<1x128xf32>
    %1870 = arith.subf %1732, %1846 : vector<1x128xf32>
    %1871 = arith.addf %1870, %1795 : vector<1x128xf32>
    %1872 = arith.minimumf %11, %1871 : vector<1x128xf32>
    %cst_380 = arith.constant 0.000000e+00 : f32
    %1873 = vector.broadcast %cst_380 : f32 to vector<1x128xf32>
    %1874 = arith.maximumf %1872, %1873 : vector<1x128xf32>
    %1875 = arith.addf %1732, %1734 : vector<1x128xf32>
    %1876 = arith.subf %1875, %1846 : vector<1x128xf32>
    %1877 = arith.subf %1876, %1850 : vector<1x128xf32>
    %1878 = arith.addf %1795, %1877 : vector<1x128xf32>
    %1879 = arith.subf %1878, %1874 : vector<1x128xf32>
    %1880 = arith.minimumf %13, %1879 : vector<1x128xf32>
    %cst_381 = arith.constant 0.000000e+00 : f32
    %1881 = vector.broadcast %cst_381 : f32 to vector<1x128xf32>
    %1882 = arith.maximumf %1880, %1881 : vector<1x128xf32>
    %1883 = arith.mulf %1882, %29 : vector<1x128xf32>
    %1884 = arith.subf %1882, %1883 : vector<1x128xf32>
    %cst_382 = arith.constant 0.000000e+00 : f32
    %1885 = vector.broadcast %cst_382 : f32 to vector<1x128xf32>
    %1886 = arith.maximumf %1884, %1885 : vector<1x128xf32>
    %1887 = arith.addf %1749, %1755 : vector<1x128xf32>
    %1888 = arith.addf %1887, %1859 : vector<1x128xf32>
    %1889 = arith.mulf %1888, %72 : vector<1x128xf32>
    %cst_383 = arith.constant 1.000000e+00 : f32
    %1890 = vector.broadcast %cst_383 : f32 to vector<1x128xf32>
    %1891 = arith.subf %1890, %1889 : vector<1x128xf32>
    %cst_384 = arith.constant 0.000000e+00 : f32
    %1892 = vector.broadcast %cst_384 : f32 to vector<1x128xf32>
    %1893 = arith.maximumf %1891, %1892 : vector<1x128xf32>
    %cst_385 = arith.constant 0.000000e+00 : f32
    %1894 = vector.broadcast %cst_385 : f32 to vector<1x128xf32>
    %1895 = arith.cmpf ogt, %1893, %1894 : vector<1x128xf32>
    %cst_386 = arith.constant 0.000000e+00 : f32
    %1896 = vector.broadcast %cst_386 : f32 to vector<1x128xf32>
    %1897 = arith.cmpf ogt, %1893, %1896 : vector<1x128xf32>
    %cst_387 = arith.constant 1.000000e+00 : f32
    %1898 = vector.broadcast %cst_387 : f32 to vector<1x128xf32>
    %1899 = arith.select %1897, %1893, %1898 : vector<1x128xi1>, vector<1x128xf32>
    %1900 = math.log %1899 : vector<1x128xf32>
    %1901 = arith.mulf %27, %1900 : vector<1x128xf32>
    %1902 = math.exp %1901 : vector<1x128xf32>
    %cst_388 = arith.constant 0.000000e+00 : f32
    %1903 = vector.broadcast %cst_388 : f32 to vector<1x128xf32>
    %1904 = arith.select %1895, %1902, %1903 : vector<1x128xi1>, vector<1x128xf32>
    %1905 = arith.mulf %25, %1904 : vector<1x128xf32>
    %cst_389 = arith.constant 1.000000e+00 : f32
    %1906 = vector.broadcast %cst_389 : f32 to vector<1x128xf32>
    %1907 = arith.addf %1906, %1905 : vector<1x128xf32>
    %1908 = arith.mulf %53, %1907 : vector<1x128xf32>
    %1909 = arith.mulf %1908, %1886 : vector<1x128xf32>
    %1910 = arith.mulf %1909, %62 : vector<1x128xf32>
    %1911 = arith.addf %1749, %1755 : vector<1x128xf32>
    %1912 = arith.addf %1911, %1859 : vector<1x128xf32>
    %1913 = arith.subf %57, %1912 : vector<1x128xf32>
    %1914 = arith.minimumf %1910, %1913 : vector<1x128xf32>
    %cst_390 = arith.constant 0.000000e+00 : f32
    %1915 = vector.broadcast %cst_390 : f32 to vector<1x128xf32>
    %1916 = arith.maximumf %1914, %1915 : vector<1x128xf32>
    %1917 = arith.addf %1749, %1755 : vector<1x128xf32>
    %1918 = arith.subf %56, %1917 : vector<1x128xf32>
    %1919 = arith.subf %15, %1859 : vector<1x128xf32>
    %1920 = arith.subf %1916, %1919 : vector<1x128xf32>
    %1921 = arith.mulf %1916, %23 : vector<1x128xf32>
    %1922 = arith.maximumf %1920, %1921 : vector<1x128xf32>
    %1923 = arith.minimumf %1918, %1922 : vector<1x128xf32>
    %cst_391 = arith.constant 0.000000e+00 : f32
    %1924 = vector.broadcast %cst_391 : f32 to vector<1x128xf32>
    %1925 = arith.maximumf %1923, %1924 : vector<1x128xf32>
    %1926 = arith.subf %1916, %1925 : vector<1x128xf32>
    %cst_392 = arith.constant 0.000000e+00 : f32
    %1927 = vector.broadcast %cst_392 : f32 to vector<1x128xf32>
    %1928 = arith.maximumf %1926, %1927 : vector<1x128xf32>
    %1929 = arith.mulf %1755, %66 : vector<1x128xf32>
    %cst_393 = arith.constant 1.000000e+00 : f32
    %1930 = vector.broadcast %cst_393 : f32 to vector<1x128xf32>
    %1931 = arith.subf %1930, %1929 : vector<1x128xf32>
    %cst_394 = arith.constant 2.000000e+00 : f32
    %1932 = vector.broadcast %cst_394 : f32 to vector<1x128xf32>
    %1933 = arith.mulf %1932, %1931 : vector<1x128xf32>
    %1934 = arith.divf %1933, %1931 : vector<1x128xf32>
    %1935 = arith.mulf %77, %1934 : vector<1x128xf32>
    %cst_395 = arith.constant 0.000000e+00 : f32
    %cst_396 = arith.constant 1.000000e+00 : f32
    %1936 = vector.broadcast %cst_395 : f32 to vector<1x128xf32>
    %1937 = arith.maximumf %1936, %1935 : vector<1x128xf32>
    %1938 = vector.broadcast %cst_396 : f32 to vector<1x128xf32>
    %1939 = arith.minimumf %1938, %1937 : vector<1x128xf32>
    %1940 = arith.subf %19, %1755 : vector<1x128xf32>
    %1941 = arith.subf %17, %1749 : vector<1x128xf32>
    %1942 = arith.subf %1925, %1941 : vector<1x128xf32>
    %1943 = arith.mulf %1939, %1925 : vector<1x128xf32>
    %1944 = arith.maximumf %1942, %1943 : vector<1x128xf32>
    %1945 = arith.minimumf %1940, %1944 : vector<1x128xf32>
    %cst_397 = arith.constant 0.000000e+00 : f32
    %1946 = vector.broadcast %cst_397 : f32 to vector<1x128xf32>
    %1947 = arith.maximumf %1945, %1946 : vector<1x128xf32>
    %1948 = arith.subf %1925, %1947 : vector<1x128xf32>
    %cst_398 = arith.constant 0.000000e+00 : f32
    %1949 = vector.broadcast %cst_398 : f32 to vector<1x128xf32>
    %1950 = arith.maximumf %1948, %1949 : vector<1x128xf32>
    %1951 = arith.addf %1859, %1928 : vector<1x128xf32>
    %1952 = arith.addf %1749, %1950 : vector<1x128xf32>
    %1953 = arith.addf %1755, %1947 : vector<1x128xf32>
    %1954 = arith.mulf %1952, %31 : vector<1x128xf32>
    %1955 = arith.subf %1952, %1954 : vector<1x128xf32>
    %cst_399 = arith.constant 0.000000e+00 : f32
    %1956 = vector.broadcast %cst_399 : f32 to vector<1x128xf32>
    %1957 = arith.maximumf %1955, %1956 : vector<1x128xf32>
    %1958 = arith.mulf %1953, %33 : vector<1x128xf32>
    %1959 = arith.subf %1953, %1958 : vector<1x128xf32>
    %cst_400 = arith.constant 0.000000e+00 : f32
    %1960 = vector.broadcast %cst_400 : f32 to vector<1x128xf32>
    %1961 = arith.maximumf %1959, %1960 : vector<1x128xf32>
    %1962 = arith.mulf %1874, %60 : vector<1x128xf32>
    %1963 = arith.mulf %1886, %62 : vector<1x128xf32>
    %1964 = arith.addf %1874, %1886 : vector<1x128xf32>
    %1965 = arith.mulf %1964, %70 : vector<1x128xf32>
    %1966 = arith.cmpf olt, %1962, %1963 : vector<1x128xf32>
    %1967 = arith.mulf %11, %1965 : vector<1x128xf32>
    %1968 = arith.select %1966, %1967, %1874 : vector<1x128xi1>, vector<1x128xf32>
    %1969 = arith.mulf %13, %1965 : vector<1x128xf32>
    %1970 = arith.select %1966, %1969, %1886 : vector<1x128xi1>, vector<1x128xf32>
    %1971 = arith.addf %1952, %1953 : vector<1x128xf32>
    %1972 = arith.subf %1971, %58 : vector<1x128xf32>
    %1973 = arith.addf %1972, %1951 : vector<1x128xf32>
    %1974 = arith.mulf %1973, %76 : vector<1x128xf32>
    %cst_401 = arith.constant 0.000000e+00 : f32
    %1975 = vector.broadcast %cst_401 : f32 to vector<1x128xf32>
    %1976 = arith.maximumf %1974, %1975 : vector<1x128xf32>
    %1977 = arith.mulf %1951, %64 : vector<1x128xf32>
    %1978 = arith.cmpf olt, %1977, %1976 : vector<1x128xf32>
    %1979 = arith.mulf %15, %1976 : vector<1x128xf32>
    %1980 = arith.select %1978, %1979, %1951 : vector<1x128xi1>, vector<1x128xf32>
    %1981 = arith.subf %1980, %1951 : vector<1x128xf32>
    %1982 = arith.subf %1952, %1981 : vector<1x128xf32>
    %cst_402 = arith.constant 0.000000e+00 : f32
    %1983 = vector.broadcast %cst_402 : f32 to vector<1x128xf32>
    %1984 = arith.maximumf %1982, %1983 : vector<1x128xf32>
    %1985 = arith.select %1978, %1984, %1957 : vector<1x128xi1>, vector<1x128xf32>
    %1986 = arith.subf %1980, %1951 : vector<1x128xf32>
    %1987 = arith.subf %1986, %1952 : vector<1x128xf32>
    %cst_403 = arith.constant 0.000000e+00 : f32
    %1988 = vector.broadcast %cst_403 : f32 to vector<1x128xf32>
    %1989 = arith.maximumf %1987, %1988 : vector<1x128xf32>
    %1990 = arith.subf %1953, %1989 : vector<1x128xf32>
    %1991 = arith.select %1978, %1990, %1961 : vector<1x128xi1>, vector<1x128xf32>
    %1992 = arith.addf %1765, %1771 : vector<1x128xf32>
    %1993 = arith.addf %1992, %1777 : vector<1x128xf32>
    %1994 = arith.addf %1993, %1783 : vector<1x128xf32>
    %1995 = arith.addf %1860, %1861 : vector<1x128xf32>
    %1996 = arith.mulf %1995, %9 : vector<1x128xf32>
    %1997 = arith.addf %1808, %1996 : vector<1x128xf32>
    %1998 = arith.mulf %1869, %48 : vector<1x128xf32>
    %1999 = arith.addf %1997, %1998 : vector<1x128xf32>
    %cst_404 = arith.constant 1.000000e+03 : f32
    %2000 = vector.broadcast %cst_404 : f32 to vector<1x128xf32>
    %2001 = arith.mulf %1999, %2000 : vector<1x128xf32>
    %2002 = arith.mulf %35, %1771 : vector<1x128xf32>
    %2003 = arith.mulf %79, %1883 : vector<1x128xf32>
    %2004 = arith.mulf %2003, %50 : vector<1x128xf32>
    %2005 = arith.addf %2002, %2004 : vector<1x128xf32>
    %cst_405 = arith.constant 0.000000e+00 : f32
    %2006 = vector.broadcast %cst_405 : f32 to vector<1x128xf32>
    %2007 = arith.maximumf %2005, %2006 : vector<1x128xf32>
    %2008 = arith.mulf %37, %1777 : vector<1x128xf32>
    %2009 = arith.mulf %81, %1954 : vector<1x128xf32>
    %2010 = arith.mulf %2009, %50 : vector<1x128xf32>
    %2011 = arith.addf %2008, %2010 : vector<1x128xf32>
    %cst_406 = arith.constant 0.000000e+00 : f32
    %2012 = vector.broadcast %cst_406 : f32 to vector<1x128xf32>
    %2013 = arith.maximumf %2011, %2012 : vector<1x128xf32>
    %2014 = arith.mulf %39, %1783 : vector<1x128xf32>
    %2015 = arith.mulf %83, %1958 : vector<1x128xf32>
    %2016 = arith.mulf %2015, %50 : vector<1x128xf32>
    %2017 = arith.addf %2014, %2016 : vector<1x128xf32>
    %cst_407 = arith.constant 0.000000e+00 : f32
    %2018 = vector.broadcast %cst_407 : f32 to vector<1x128xf32>
    %2019 = arith.maximumf %2017, %2018 : vector<1x128xf32>
    %2020 = arith.addf %2001, %2007 : vector<1x128xf32>
    %2021 = arith.addf %2020, %2013 : vector<1x128xf32>
    %2022 = arith.addf %2021, %2019 : vector<1x128xf32>
    %2023 = arith.mulf %114, %1994 : vector<1x128xf32>
    %2024 = arith.mulf %102, %2022 : vector<1x128xf32>
    %2025 = arith.addf %2023, %2024 : vector<1x128xf32>
    %2026 = arith.mulf %110, %1791 : vector<1x128xf32>
    %2027 = arith.addf %2025, %2026 : vector<1x128xf32>
    %2028 = vector.shape_cast %375 : vector<1x128xf32> to vector<1x1x128xf32>
    %2029 = vector.shape_cast %611 : vector<1x128xf32> to vector<1x1x128xf32>
    %2030 = vector.shape_cast %847 : vector<1x128xf32> to vector<1x1x128xf32>
    %2031 = vector.shape_cast %1083 : vector<1x128xf32> to vector<1x1x128xf32>
    %2032 = vector.shape_cast %1319 : vector<1x128xf32> to vector<1x1x128xf32>
    %2033 = vector.shape_cast %1555 : vector<1x128xf32> to vector<1x1x128xf32>
    %2034 = vector.shape_cast %1791 : vector<1x128xf32> to vector<1x1x128xf32>
    %2035 = vector.shape_cast %2027 : vector<1x128xf32> to vector<1x1x128xf32>
    %2036 = tpu.concatenate %2028, %2029, %2030, %2031, %2032, %2033, %2034, %2035 in 0 : vector<1x1x128xf32>, vector<1x1x128xf32>, vector<1x1x128xf32>, vector<1x1x128xf32>, vector<1x1x128xf32>, vector<1x1x128xf32>, vector<1x1x128xf32>, vector<1x1x128xf32> -> vector<8x1x128xf32>
    %c0_408 = arith.constant 0 : index
    %c0_409 = arith.constant 0 : index
    %c0_410 = arith.constant 0 : index
    %2037 = vector.load %arg5[%c0_408, %c0_409, %c0_410] : memref<8x1x128xf32, #tpu.memory_space<vmem>>, vector<8x1x128xf32>
    tpu.vector_store %arg5[%c0_408, %c0_409, %c0_410], %2036 {strides = array<i32>} : memref<8x1x128xf32, #tpu.memory_space<vmem>>, vector<8x1x128xf32>,
    %2038 = vector.shape_cast %1837 : vector<1x128xf32> to vector<1x1x128xf32>
    %2039 = vector.shape_cast %1843 : vector<1x128xf32> to vector<1x1x128xf32>
    %2040 = vector.shape_cast %1968 : vector<1x128xf32> to vector<1x1x128xf32>
    %2041 = vector.shape_cast %1970 : vector<1x128xf32> to vector<1x1x128xf32>
    %2042 = vector.shape_cast %1980 : vector<1x128xf32> to vector<1x1x128xf32>
    %2043 = vector.shape_cast %1985 : vector<1x128xf32> to vector<1x1x128xf32>
    %2044 = vector.shape_cast %1991 : vector<1x128xf32> to vector<1x1x128xf32>
    %2045 = vector.shape_cast %2001 : vector<1x128xf32> to vector<1x1x128xf32>
    %2046 = vector.shape_cast %2007 : vector<1x128xf32> to vector<1x1x128xf32>
    %2047 = vector.shape_cast %2013 : vector<1x128xf32> to vector<1x1x128xf32>
    %2048 = vector.shape_cast %2019 : vector<1x128xf32> to vector<1x1x128xf32>
    %2049 = vector.shape_cast %2027 : vector<1x128xf32> to vector<1x1x128xf32>
    %2050 = tpu.concatenate %2038, %2039, %2040, %2041, %2042, %2043, %2044, %2045, %2046, %2047, %2048, %2049 in 0 : vector<1x1x128xf32>, vector<1x1x128xf32>, vector<1x1x128xf32>, vector<1x1x128xf32>, vector<1x1x128xf32>, vector<1x1x128xf32>, vector<1x1x128xf32>, vector<1x1x128xf32>, vector<1x1x128xf32>, vector<1x1x128xf32>, vector<1x1x128xf32>, vector<1x1x128xf32> -> vector<12x1x128xf32>
    %c0_411 = arith.constant 0 : index
    %c0_412 = arith.constant 0 : index
    %c0_413 = arith.constant 0 : index
    %2051 = vector.load %arg6[%c0_411, %c0_412, %c0_413] : memref<12x1x128xf32, #tpu.memory_space<vmem>>, vector<12x1x128xf32>
    tpu.vector_store %arg6[%c0_411, %c0_412, %c0_413], %2050 {strides = array<i32>} : memref<12x1x128xf32, #tpu.memory_space<vmem>>, vector<12x1x128xf32>,
    return
  }
  func.func @transform_0(%arg0: i32, %arg1: i32) -> (i32, i32, i32) {
    %c0_i32 = arith.constant 0 : i32
    %c0_i32_0 = arith.constant 0 : i32
    return %arg1, %arg0, %c0_i32 : i32, i32, i32
  }
  func.func @transform_1(%arg0: i32, %arg1: i32) -> (i32, i32, i32) {
    %c0_i32 = arith.constant 0 : i32
    %c0_i32_0 = arith.constant 0 : i32
    return %arg1, %arg0, %c0_i32 : i32, i32, i32
  }
  func.func @transform_2(%arg0: i32, %arg1: i32) -> (i32, i32, i32) {
    %c0_i32 = arith.constant 0 : i32
    %c0_i32_0 = arith.constant 0 : i32
    %c0_i32_1 = arith.constant 0 : i32
    return %c0_i32, %arg0, %c0_i32_0 : i32, i32, i32
  }
  func.func @transform_3(%arg0: i32, %arg1: i32) -> (i32, i32, i32) {
    %c0_i32 = arith.constant 0 : i32
    %c0_i32_0 = arith.constant 0 : i32
    return %arg1, %arg0, %c0_i32 : i32, i32, i32
  }
}

</mosaic_0001>

<llo_original>
// kernel: dpl_ann_sac_forward.2
$region0: #{dpl_ann_sac_forward.2}
  #allocation0 [shape = 'u32[]', space=smem, size = 0x4, offset = 0x4, fixed_abs, tag = 'smem constant byte address 0x4 - core index']
  #allocation1 [shape = 'u32[144,128]{1,0:T(1,128)}', space=vmem, size = 0x12000, scoped, tag = 'internal scratch']
  %s0 = inlined_call_operand.vmem [shape: f32[8,16], index: 0, kind: input, shape index: {}]
  %s1 = inlined_call_operand.vmem [shape: f32[16,32], index: 1, kind: input, shape index: {}]
  %s2 = inlined_call_operand.vmem [shape: f32[1,32], index: 2, kind: input, shape index: {}]
  %s3 = inlined_call_operand.vmem [shape: f32[32,21], index: 3, kind: input, shape index: {}]
  %s4 = inlined_call_operand.vmem [shape: f32[1,21], index: 4, kind: input, shape index: {}]
  %s5 = inlined_call_operand.vmem [shape: f32[1,21], index: 5, kind: input, shape index: {}]
  %s6 = inlined_call_operand.vmem [shape: f32[1,21], index: 6, kind: input, shape index: {}]
  %s7 = inlined_call_operand.vmem [shape: f32[8,21], index: 7, kind: output, shape index: {}]
  %s8 = sld [smem:[#allocation0]]
  $region38: #{dpl_ann_sac_forward.2} parent=0
    _
  %s10 = ssub.s32 1, %s8
  %s11 = scalar_select 0, %s10, %s8
  // Predicated region
  $region2: #{dpl_ann_sac_forward.2} parent=0 // pred_check
    _
  $region3: #{dpl_ann_sac_forward.2} parent=0 // pred_check_branch
    %13 = sbr.rel (0) target = $region5
  $region4: #{dpl_ann_sac_forward.2} parent=0 // pred_region
    _
  $region5: #{dpl_ann_sac_forward.2} parent=0 // pred_fallthru
    _
  // Predicated region
  $region6: #{dpl_ann_sac_forward.2} parent=0 // pred_check
    _
  $region7: #{dpl_ann_sac_forward.2} parent=0 // pred_check_branch
    %15 = sbr.rel (0) target = $region9
  $region8: #{dpl_ann_sac_forward.2} parent=0 // pred_region
    _
  $region9: #{dpl_ann_sac_forward.2} parent=0 // pred_fallthru
    _
  // Predicated region
  $region10: #{dpl_ann_sac_forward.2} parent=0 // pred_check
    _
  $region11: #{dpl_ann_sac_forward.2} parent=0 // pred_check_branch
    %17 = sbr.rel (0) target = $region13
  $region12: #{dpl_ann_sac_forward.2} parent=0 // pred_region
    _
  $region13: #{dpl_ann_sac_forward.2} parent=0 // pred_fallthru
    _
  // Predicated region
  $region14: #{dpl_ann_sac_forward.2} parent=0 // pred_check
    _
  $region15: #{dpl_ann_sac_forward.2} parent=0 // pred_check_branch
    %19 = sbr.rel (0) target = $region17
  $region16: #{dpl_ann_sac_forward.2} parent=0 // pred_region
    _
  $region17: #{dpl_ann_sac_forward.2} parent=0 // pred_fallthru
    _
  // Predicated region
  $region18: #{dpl_ann_sac_forward.2} parent=0 // pred_check
    _
  $region19: #{dpl_ann_sac_forward.2} parent=0 // pred_check_branch
    %21 = sbr.rel (0) target = $region21
  $region20: #{dpl_ann_sac_forward.2} parent=0 // pred_region
    _
  $region21: #{dpl_ann_sac_forward.2} parent=0 // pred_fallthru
    _
  // Predicated region
  $region22: #{dpl_ann_sac_forward.2} parent=0 // pred_check
    _
  $region23: #{dpl_ann_sac_forward.2} parent=0 // pred_check_branch
    %23 = sbr.rel (0) target = $region25
  $region24: #{dpl_ann_sac_forward.2} parent=0 // pred_region
    _
  $region25: #{dpl_ann_sac_forward.2} parent=0 // pred_fallthru
    _
  // Predicated region
  $region26: #{dpl_ann_sac_forward.2} parent=0 // pred_check
    _
  $region27: #{dpl_ann_sac_forward.2} parent=0 // pred_check_branch
    %25 = sbr.rel (0) target = $region29
  $region28: #{dpl_ann_sac_forward.2} parent=0 // pred_region
    _
  $region29: #{dpl_ann_sac_forward.2} parent=0 // pred_fallthru
    _
  %v26 = vld [vmem:[%s0] sm:$0xff]
  %v27 = vld [vmem:[%s1] sm:$0xff]
  %v28 = vld [vmem:[%s1 + $0x8] sm:$0xff]
  %v29 = vld [vmem:[%s2] sm:$0x1]
  %v31 = vlaneseq
  %v32 = vshrl.u32 %v31, 7
  %v33 = vsub.s32 0, %v32
  %v34 = vrot.slane %v29, %v33
  %vm36 = vcmask 130048
  %v38 = vsel %vm36, %v26, 0
  %40 = vmatprep.subr.mxu0 0.0
  %41 = vmatpush1.msra.mxu0 %v27
  %42 = vmatprep.subr.mxu0 0.0
  %43 = vmatpush1.msra.mxu0 %v28
  %44 = vmatprep.subr.mxu0 0.0
  %45 = vmatpush1.msra.mxu0 0.0
  %46 = vmatprep.subr.mxu0 0.0
  %47 = vmatpush1.msra.mxu0 0.0
  %48 = vmatprep.subr.mxu0 0.0
  %49 = vmatpush1.msra.mxu0 0.0
  %50 = vmatprep.subr.mxu0 0.0
  %51 = vmatpush1.msra.mxu0 0.0
  %52 = vmatprep.subr.mxu0 0.0
  %53 = vmatpush1.msra.mxu0 0.0
  %54 = vmatprep.subr.mxu0 0.0
  %55 = vmatpush1.msra.mxu0 0.0
  %56 = vmatprep.subr.mxu0 0.0
  %57 = vmatpush1.msra.mxu0 0.0
  %58 = vmatprep.subr.mxu0 0.0
  %59 = vmatpush1.msra.mxu0 0.0
  %60 = vmatprep.subr.mxu0 0.0
  %61 = vmatpush1.msra.mxu0 0.0
  %62 = vmatprep.subr.mxu0 0.0
  %63 = vmatpush1.msra.mxu0 0.0
  %64 = vmatprep.subr.mxu0 0.0
  %65 = vmatpush1.msra.mxu0 0.0
  %66 = vmatprep.subr.mxu0 0.0
  %67 = vmatpush1.msra.mxu0 0.0
  %68 = vmatprep.subr.mxu0 0.0
  %69 = vmatpush1.msra.mxu0 0.0
  %70 = vmatprep.subr.mxu0 0.0
  %71 = vmatpush1.msra.mxu0 0.0
  %72 = vmatprep.subr.mxu0 0.0
  %73 = vmatpush1.msra.mxu0 0.0
  %74 = vmatprep.subr.mxu0 0.0
  %75 = vmatpush1.msra.mxu0 0.0
  %76 = vmatprep.subr.mxu0 0.0
  %77 = vmatpush1.msra.mxu0 0.0
  %78 = vmatprep.subr.mxu0 0.0
  %79 = vmatpush1.msra.mxu0 0.0
  %80 = vmatprep.subr.mxu0 0.0
  %81 = vmatpush1.msra.mxu0 0.0
  %82 = vmatprep.subr.mxu0 0.0
  %83 = vmatpush1.msra.mxu0 0.0
  %84 = vmatprep.subr.mxu0 0.0
  %85 = vmatpush1.msra.mxu0 0.0
  %86 = vmatprep.subr.mxu0 0.0
  %87 = vmatpush1.msra.mxu0 0.0
  %88 = vmatprep.subr.mxu0 0.0
  %89 = vmatpush1.msra.mxu0 0.0
  %90 = vmatprep.subr.mxu0 0.0
  %91 = vmatpush1.msra.mxu0 0.0
  %92 = vmatprep.subr.mxu0 0.0
  %93 = vmatpush1.msra.mxu0 0.0
  %94 = vmatprep.subr.mxu0 0.0
  %95 = vmatpush1.msra.mxu0 0.0
  %96 = vmatprep.subr.mxu0 0.0
  %97 = vmatpush1.msra.mxu0 0.0
  %98 = vmatprep.subr.mxu0 0.0
  %99 = vmatpush1.msra.mxu0 0.0
  %100 = vmatprep.subr.mxu0 0.0
  %101 = vmatpush1.msra.mxu0 0.0
  %102 = vmatprep.subr.mxu0 0.0
  %103 = vmatpush1.msra.mxu0 0.0
  %104 = vmatprep.mubr.f32.mxu0 0.0
  %105 = vmatmul.mubr.f32.gmra.mrb[0].mxu0 %v38
  %v106 = vpop.f32.mrb[0].mxu0
  %v107 = vadd.f32 %v34, %v106
  %v108 = vpop.f32.mrb[0].mxu0
  %109 = vdwg.mxu0
  %v110 = vmax.f32 %v107, 0.0
  %v111 = vld [vmem:[%s3] sm:$0xff]
  %v112 = vld [vmem:[%s3 + $0x8] sm:$0xff]
  %v113 = vld [vmem:[%s3 + $0x10] sm:$0xff]
  %v114 = vld [vmem:[%s3 + $0x18] sm:$0xff]
  %v115 = vld [vmem:[%s4] sm:$0x1]
  %v117 = vlaneseq
  %v118 = vshrl.u32 %v117, 7
  %v119 = vsub.s32 0, %v118
  %v120 = vrot.slane %v115, %v119
  %vm122 = vcmask 261120
  %v124 = vsel %vm122, %v110, 0
  %126 = vmatprep.subr.mxu0 0.0
  %127 = vmatpush1.msra.mxu0 %v111
  %128 = vmatprep.subr.mxu0 0.0
  %129 = vmatpush1.msra.mxu0 %v112
  %130 = vmatprep.subr.mxu0 0.0
  %131 = vmatpush1.msra.mxu0 %v113
  %132 = vmatprep.subr.mxu0 0.0
  %133 = vmatpush1.msra.mxu0 %v114
  %134 = vmatprep.subr.mxu0 0.0
  %135 = vmatpush1.msra.mxu0 0.0
  %136 = vmatprep.subr.mxu0 0.0
  %137 = vmatpush1.msra.mxu0 0.0
  %138 = vmatprep.subr.mxu0 0.0
  %139 = vmatpush1.msra.mxu0 0.0
  %140 = vmatprep.subr.mxu0 0.0
  %141 = vmatpush1.msra.mxu0 0.0
  %142 = vmatprep.subr.mxu0 0.0
  %143 = vmatpush1.msra.mxu0 0.0
  %144 = vmatprep.subr.mxu0 0.0
  %145 = vmatpush1.msra.mxu0 0.0
  %146 = vmatprep.subr.mxu0 0.0
  %147 = vmatpush1.msra.mxu0 0.0
  %148 = vmatprep.subr.mxu0 0.0
  %149 = vmatpush1.msra.mxu0 0.0
  %150 = vmatprep.subr.mxu0 0.0
  %151 = vmatpush1.msra.mxu0 0.0
  %152 = vmatprep.subr.mxu0 0.0
  %153 = vmatpush1.msra.mxu0 0.0
  %154 = vmatprep.subr.mxu0 0.0
  %155 = vmatpush1.msra.mxu0 0.0
  %156 = vmatprep.subr.mxu0 0.0
  %157 = vmatpush1.msra.mxu0 0.0
  %158 = vmatprep.subr.mxu0 0.0
  %159 = vmatpush1.msra.mxu0 0.0
  %160 = vmatprep.subr.mxu0 0.0
  %161 = vmatpush1.msra.mxu0 0.0
  %162 = vmatprep.subr.mxu0 0.0
  %163 = vmatpush1.msra.mxu0 0.0
  %164 = vmatprep.subr.mxu0 0.0
  %165 = vmatpush1.msra.mxu0 0.0
  %166 = vmatprep.subr.mxu0 0.0
  %167 = vmatpush1.msra.mxu0 0.0
  %168 = vmatprep.subr.mxu0 0.0
  %169 = vmatpush1.msra.mxu0 0.0
  %170 = vmatprep.subr.mxu0 0.0
  %171 = vmatpush1.msra.mxu0 0.0
  %172 = vmatprep.subr.mxu0 0.0
  %173 = vmatpush1.msra.mxu0 0.0
  %174 = vmatprep.subr.mxu0 0.0
  %175 = vmatpush1.msra.mxu0 0.0
  %176 = vmatprep.subr.mxu0 0.0
  %177 = vmatpush1.msra.mxu0 0.0
  %178 = vmatprep.subr.mxu0 0.0
  %179 = vmatpush1.msra.mxu0 0.0
  %180 = vmatprep.subr.mxu0 0.0
  %181 = vmatpush1.msra.mxu0 0.0
  %182 = vmatprep.subr.mxu0 0.0
  %183 = vmatpush1.msra.mxu0 0.0
  %184 = vmatprep.subr.mxu0 0.0
  %185 = vmatpush1.msra.mxu0 0.0
  %186 = vmatprep.subr.mxu0 0.0
  %187 = vmatpush1.msra.mxu0 0.0
  %188 = vmatprep.subr.mxu0 0.0
  %189 = vmatpush1.msra.mxu0 0.0
  %190 = vmatprep.mubr.f32.mxu0 0.0
  %191 = vmatmul.mubr.f32.gmra.mrb[0].mxu0 %v124
  %v192 = vpop.f32.mrb[0].mxu0
  %v193 = vadd.f32 %v120, %v192
  %v194 = vpop.f32.mrb[0].mxu0
  %195 = vdwg.mxu0
  %v196 = vmax.f32 %v193, 0.0
  %v197 = vmin.f32 %v196, 1.0
  %v198 = vld [vmem:[%s5] sm:$0x1]
  %v199 = vld [vmem:[%s6] sm:$0x1]
  %v200 = vsub.f32 %v199, %v198
  %v202 = vlaneseq
  %v203 = vshrl.u32 %v202, 7
  %v204 = vsub.s32 0, %v203
  %v205 = vrot.slane %v200, %v204
  %v207 = vmul.f32 %v197, %v205
  %v209 = vlaneseq
  %v210 = vshrl.u32 %v209, 7
  %v211 = vsub.s32 0, %v210
  %v212 = vrot.slane %v198, %v211
  %v214 = vadd.f32 %v212, %v207
  %vm215 = vcmask 171008
  %216 = vst.msk [vmem:[%s7] sm:$0xff] %vm215, %v214
  // Predicated region
  $region30: #{dpl_ann_sac_forward.2} parent=0 // pred_check
    _
  $region31: #{dpl_ann_sac_forward.2} parent=0 // pred_check_branch
    %218 = sbr.rel (0) target = $region33
  $region32: #{dpl_ann_sac_forward.2} parent=0 // pred_region
    _
  $region33: #{dpl_ann_sac_forward.2} parent=0 // pred_fallthru
    _
  // Predicated region
  $region34: #{dpl_ann_sac_forward.2} parent=0 // pred_check
    _
  $region35: #{dpl_ann_sac_forward.2} parent=0 // pred_check_branch
    %220 = sbr.rel (0) target = $region37
  $region36: #{dpl_ann_sac_forward.2} parent=0 // pred_region
    _
  $region37: #{dpl_ann_sac_forward.2} parent=0 // pred_fallthru
    _

// kernel: dpl_ann_sac_forward.3
$region0: #{dpl_ann_sac_forward.3}
  #allocation0 [shape = 'u32[]', space=smem, size = 0x4, offset = 0x4, fixed_abs, tag = 'smem constant byte address 0x4 - core index']
  #allocation1 [shape = 'u32[144,128]{1,0:T(1,128)}', space=vmem, size = 0x12000, scoped, tag = 'internal scratch']
  #allocation2 [shape = 'f32[12,1,128]{2,1,0:T(1,128)}', space=vmem, size = 0x1800, scoped, tag = 'scratch operand']
  %s0 = inlined_call_operand.vmem [shape: f32[16,1,128], index: 0, kind: input, shape index: {}]
  %s1 = inlined_call_operand.vmem [shape: f32[16,1,128], index: 1, kind: input, shape index: {}]
  %s2 = inlined_call_operand.vmem [shape: f32[21,1,128], index: 2, kind: input, shape index: {}]
  %s3 = inlined_call_operand.vmem [shape: f32[16,1,128], index: 3, kind: output, shape index: {}]
  %s4 = sld [smem:[#allocation0]]
  $region49: #{dpl_ann_sac_forward.3} parent=0
    _
  %s6 = ssub.s32 1, %s4
  %s7 = scalar_select 0, %s6, %s4
  loop: start=0, step=1, limit=4
  $region2: #{dpl_ann_sac_forward.3} parent=0 // loop_pre_header
    _
  $region3: #{dpl_ann_sac_forward.3} parent=0 // loop_header
    %s9 = sphi 0, %s13
    %p10 = scmp.ge.s32.totalorder %s9, 4
    %s16 = sphi 0, %s28
    %s17 = sphi 0, %s24
    %s18 = sphi 0, %s16
    %s19 = sphi 0, %s17
    %s20 = sphi 0, %s18
    %s21 = sphi 0, %s19
    %s33 = sphi 0, %s35
    %s36 = sphi 0, %s33
    %s37 = sphi 0, %s36
    %s53 = sphi 0, %s37
    %s61 = sphi 0, %s63
    %s64 = sphi 0, %s61
    %s65 = sphi 0, %s64
    %s81 = sphi 0, %s65
    %s87 = sphi 0, %s89
    %s90 = sphi 0, %s87
    %s91 = sphi 0, %s90
    %s107 = sphi 0, %s91
    %s115 = sphi 0, %s117
    %s118 = sphi 0, %s115
    %s119 = sphi 0, %s118
    %s135 = sphi 0, %s119
  $region4: #{dpl_ann_sac_forward.3} parent=0 // loop_header_branch
    %12 = sbr.rel (%p10) target = $region8
  $region5: #{dpl_ann_sac_forward.3} parent=0 // loop_body
    %s14 = ssub.s32 %s9, 1
    %s15 = ssub.s32 %s9, 2
    %s22 = sadd.s32 1, %s17
    %p23 = scmp.ge.s32.totalorder %s22, 2
    %s24 = scalar_select %p23, 0, %s22
    %s25 = sadd.s32 1, %s16
    %s26 = scalar_select %p23, %s25, %s16
    %p27 = scmp.ge.s32.totalorder %s26, 1
    %s28 = scalar_select %p27, 0, %s26
    %s29 = ssub.s32 %s17, %s24
    %s30 = ssub.s32 %s16, %s28
    %s31 = sor.u32 %s29, %s30
    %p32 = scmp.eq.s32.totalorder %s31, 0
    %s34 = sadd.s32 %s33, 1
    %s35 = scalar_select %p32, %s33, %s34
    %p38 = pneg %p32
    %p39 = scmp.eq.s32.totalorder %s9, 1
    %p40 = por %p38, %p39
    %p41 = scmp.ne.s32.totalorder %s33, %s36
    %p42 = scmp.eq.s32.totalorder %s9, 0
    %p43 = por %p41, %p42
    %p44 = scmp.ne.s32.totalorder %s33, %s36
    %p45 = scmp.eq.s32.totalorder %s14, 1
    %p46 = por %p44, %p45
    %p47 = scmp.ne.s32.totalorder %s36, %s37
    %p48 = scmp.eq.s32.totalorder %s14, 0
    %p49 = por %p47, %p48
    %p50 = scmp.ne.s32.totalorder %s36, %s37
    %p51 = scmp.eq.s32.totalorder %s15, 1
    %p52 = por %p50, %p51
    %p54 = scmp.ne.s32.totalorder %s37, %s53
    %p55 = scmp.eq.s32.totalorder %s15, 0
    %p56 = por %p54, %p55
    %s57 = ssub.s32 %s17, %s24
    %s58 = ssub.s32 %s16, %s28
    %s59 = sor.u32 %s57, %s58
    %p60 = scmp.eq.s32.totalorder %s59, 0
    %s62 = sadd.s32 %s61, 1
    %s63 = scalar_select %p60, %s61, %s62
    %p66 = pneg %p60
    %p67 = scmp.eq.s32.totalorder %s9, 1
    %p68 = por %p66, %p67
    %p69 = scmp.ne.s32.totalorder %s61, %s64
    %p70 = scmp.eq.s32.totalorder %s9, 0
    %p71 = por %p69, %p70
    %p72 = scmp.ne.s32.totalorder %s61, %s64
    %p73 = scmp.eq.s32.totalorder %s14, 1
    %p74 = por %p72, %p73
    %p75 = scmp.ne.s32.totalorder %s64, %s65
    %p76 = scmp.eq.s32.totalorder %s14, 0
    %p77 = por %p75, %p76
    %p78 = scmp.ne.s32.totalorder %s64, %s65
    %p79 = scmp.eq.s32.totalorder %s15, 1
    %p80 = por %p78, %p79
    %p82 = scmp.ne.s32.totalorder %s65, %s81
    %p83 = scmp.eq.s32.totalorder %s15, 0
    %p84 = por %p82, %p83
    %s85 = ssub.s32 %s16, %s28
    %p86 = scmp.eq.s32.totalorder %s85, 0
    %s88 = sadd.s32 %s87, 1
    %s89 = scalar_select %p86, %s87, %s88
    %p92 = pneg %p86
    %p93 = scmp.eq.s32.totalorder %s9, 1
    %p94 = por %p92, %p93
    %p95 = scmp.ne.s32.totalorder %s87, %s90
    %p96 = scmp.eq.s32.totalorder %s9, 0
    %p97 = por %p95, %p96
    %p98 = scmp.ne.s32.totalorder %s87, %s90
    %p99 = scmp.eq.s32.totalorder %s14, 1
    %p100 = por %p98, %p99
    %p101 = scmp.ne.s32.totalorder %s90, %s91
    %p102 = scmp.eq.s32.totalorder %s14, 0
    %p103 = por %p101, %p102
    %p104 = scmp.ne.s32.totalorder %s90, %s91
    %p105 = scmp.eq.s32.totalorder %s15, 1
    %p106 = por %p104, %p105
    %p108 = scmp.ne.s32.totalorder %s91, %s107
    %p109 = scmp.eq.s32.totalorder %s15, 0
    %p110 = por %p108, %p109
    %s111 = ssub.s32 %s17, %s24
    %s112 = ssub.s32 %s16, %s28
    %s113 = sor.u32 %s111, %s112
    %p114 = scmp.eq.s32.totalorder %s113, 0
    %s116 = sadd.s32 %s115, 1
    %s117 = scalar_select %p114, %s115, %s116
    %p120 = pneg %p114
    %p121 = scmp.eq.s32.totalorder %s9, 1
    %p122 = por %p120, %p121
    %p123 = scmp.ne.s32.totalorder %s115, %s118
    %p124 = scmp.eq.s32.totalorder %s9, 0
    %p125 = por %p123, %p124
    %p126 = scmp.ne.s32.totalorder %s115, %s118
    %p127 = scmp.eq.s32.totalorder %s14, 1
    %p128 = por %p126, %p127
    %p129 = scmp.ne.s32.totalorder %s118, %s119
    %p130 = scmp.eq.s32.totalorder %s14, 0
    %p131 = por %p129, %p130
    %p132 = scmp.ne.s32.totalorder %s118, %s119
    %p133 = scmp.eq.s32.totalorder %s15, 1
    %p134 = por %p132, %p133
    %p136 = scmp.ne.s32.totalorder %s119, %s135
    %p137 = scmp.eq.s32.totalorder %s15, 0
    %p138 = por %p136, %p137
    %p139 = scmp.le.s32.totalorder 1, %s9
    %p140 = scmp.lt.s32.totalorder %s9, 3
    %p141 = pnand %p139, %p140
    %p142 = pneg %p141
    // Predicated region
    $region9: #{dpl_ann_sac_forward.3} parent=5 // pred_check
      _
    $region10: #{dpl_ann_sac_forward.3} parent=5 // pred_check_branch
      %144 = sbr.rel (%p141) target = $region12
    $region11: #{dpl_ann_sac_forward.3} parent=5 // pred_region
      %s145 = ssub.s32 %s9, 1
      // Predicated region
      $region13: #{dpl_ann_sac_forward.3} parent=11 // pred_check
        %p146 = pneg %p103
      $region14: #{dpl_ann_sac_forward.3} parent=11 // pred_check_branch
        %148 = sbr.rel (%p146) target = $region16
      $region15: #{dpl_ann_sac_forward.3} parent=11 // pred_region
        %p149 = scmp.lt.s32.totalorder %s18, 0
        %s150 = scalar_select %p149, %s18, 0
        %s151 = scalar_lea.vmem %s2, %s150
      $region16: #{dpl_ann_sac_forward.3} parent=11 // pred_fallthru
        _
    $region12: #{dpl_ann_sac_forward.3} parent=5 // pred_fallthru
      _
    %p152 = scmp.lt.s32.totalorder %s9, 2
    // Predicated region
    $region17: #{dpl_ann_sac_forward.3} parent=5 // pred_check
      %p153 = pneg %p152
    $region18: #{dpl_ann_sac_forward.3} parent=5 // pred_check_branch
      %155 = sbr.rel (%p153) target = $region20
    $region19: #{dpl_ann_sac_forward.3} parent=5 // pred_region
      // Predicated region
      $region21: #{dpl_ann_sac_forward.3} parent=19 // pred_check
        %p156 = pneg %p43
      $region22: #{dpl_ann_sac_forward.3} parent=19 // pred_check_branch
        %158 = sbr.rel (%p156) target = $region24
      $region23: #{dpl_ann_sac_forward.3} parent=19 // pred_region
        %s159 = smul.u32 8, %s17
        %p160 = scmp.lt.s32.totalorder %s159, 15
        %s161 = scalar_select %p160, %s159, 15
        %p162 = scmp.lt.s32.totalorder %s16, 0
        %s163 = scalar_select %p162, %s16, 0
        %s164 = sadd.s32 %s163, %s161
        %s165 = scalar_lea.vmem %s0, %s164
        %s166 = smul.u32 8, %s17
      $region24: #{dpl_ann_sac_forward.3} parent=19 // pred_fallthru
        _
      // Predicated region
      $region25: #{dpl_ann_sac_forward.3} parent=19 // pred_check
        %p167 = pneg %p71
      $region26: #{dpl_ann_sac_forward.3} parent=19 // pred_check_branch
        %169 = sbr.rel (%p167) target = $region28
      $region27: #{dpl_ann_sac_forward.3} parent=19 // pred_region
        %s170 = smul.u32 8, %s17
        %p171 = scmp.lt.s32.totalorder %s170, 15
        %s172 = scalar_select %p171, %s170, 15
        %p173 = scmp.lt.s32.totalorder %s16, 0
        %s174 = scalar_select %p173, %s16, 0
        %s175 = sadd.s32 %s174, %s172
        %s176 = scalar_lea.vmem %s1, %s175
        %s177 = smul.u32 8, %s17
      $region28: #{dpl_ann_sac_forward.3} parent=19 // pred_fallthru
        _
    $region20: #{dpl_ann_sac_forward.3} parent=5 // pred_fallthru
      _
    %p178 = scmp.le.s32.totalorder 1, %s9
    %p179 = scmp.lt.s32.totalorder %s9, 3
    %p180 = pnand %p178, %p179
    %p181 = pneg %p180
    // Predicated region
    $region29: #{dpl_ann_sac_forward.3} parent=5 // pred_check
      _
    $region30: #{dpl_ann_sac_forward.3} parent=5 // pred_check_branch
      %183 = sbr.rel (%p180) target = $region32
    $region31: #{dpl_ann_sac_forward.3} parent=5 // pred_region
      %s184 = ssub.s32 %s9, 1
      %s185 = smul.u32 8, %s19
      %p186 = scmp.lt.s32.totalorder %s185, 15
      %s187 = scalar_select %p186, %s185, 15
      %p188 = scmp.lt.s32.totalorder %s18, 0
      %s189 = scalar_select %p188, %s18, 0
      %s190 = sadd.s32 %s189, %s187
      %s191 = scalar_lea.vmem %s0, %s190
      %p192 = pneg %p49
      %p193 = pneg %p46
      %s194 = smul.u32 8, %s19
      %p195 = scmp.lt.s32.totalorder %s194, 15
      %s196 = scalar_select %p195, %s194, 15
      %p197 = scmp.lt.s32.totalorder %s18, 0
      %s198 = scalar_select %p197, %s18, 0
      %s199 = sadd.s32 %s198, %s196
      %s200 = scalar_lea.vmem %s1, %s199
      %p201 = pneg %p77
      %p202 = pneg %p74
      %p203 = scmp.lt.s32.totalorder %s18, 0
      %s204 = scalar_select %p203, %s18, 0
      %s205 = scalar_lea.vmem %s2, %s204
      %p206 = pneg %p103
      %p207 = pneg %p100
      %p208 = pneg %p131
      %p209 = pneg %p128
      %s210 = smul.u32 8, %s19
      %p211 = scmp.lt.s32.totalorder %s210, 15
      %s212 = scalar_select %p211, %s210, 15
      %p213 = scmp.lt.s32.totalorder %s18, 0
      %s214 = scalar_select %p213, %s18, 0
      %s215 = sadd.s32 %s214, %s212
      %s216 = scalar_lea.vmem %s3, %s215
      %s217 = smul.u32 8, %s19
      %p218 = scmp.lt.s32.totalorder %s217, 15
      %s219 = scalar_select %p218, %s217, 15
      %p220 = scmp.lt.s32.totalorder %s18, 0
      %s221 = scalar_select %p220, %s18, 0
      %s222 = sadd.s32 %s221, %s219
      %s223 = scalar_lea.vmem %s0, %s222
      %s224 = smul.u32 8, %s19
      %s225 = smul.u32 8, %s19
      %p226 = scmp.lt.s32.totalorder %s225, 15
      %s227 = scalar_select %p226, %s225, 15
      %p228 = scmp.lt.s32.totalorder %s18, 0
      %s229 = scalar_select %p228, %s18, 0
      %s230 = sadd.s32 %s229, %s227
      %s231 = scalar_lea.vmem %s1, %s230
      %s232 = smul.u32 8, %s19
      %p233 = scmp.lt.s32.totalorder %s18, 0
      %s234 = scalar_select %p233, %s18, 0
      %s235 = scalar_lea.vmem %s2, %s234
      %s236 = smul.u32 8, %s19
      %p237 = scmp.lt.s32.totalorder %s236, 15
      %s238 = scalar_select %p237, %s236, 15
      %p239 = scmp.lt.s32.totalorder %s18, 0
      %s240 = scalar_select %p239, %s18, 0
      %s241 = sadd.s32 %s240, %s238
      %s242 = scalar_lea.vmem %s3, %s241
      %s243 = smul.u32 8, %s19
      %p244 = scmp.eq.s32.totalorder %s19, 0
      // Predicated region
      $region33: #{dpl_ann_sac_forward.3} parent=31 // pred_check
        %p245 = pneg %p244
      $region34: #{dpl_ann_sac_forward.3} parent=31 // pred_check_branch
        %247 = sbr.rel (%p245) target = $region36
      $region35: #{dpl_ann_sac_forward.3} parent=31 // pred_region
        %248 = vst [vmem:[#allocation2] sm:$0x1] 0.01
        %249 = vst [vmem:[#allocation2 + $0x1] sm:$0x1] 0.01
        %250 = vst [vmem:[#allocation2 + $0x2] sm:$0x1] 0.01
        %251 = vst [vmem:[#allocation2 + $0x3] sm:$0x1] 0.01
        %252 = vst [vmem:[#allocation2 + $0x4] sm:$0x1] 0.01
        %253 = vst [vmem:[#allocation2 + $0x5] sm:$0x1] 0.01
        %254 = vst [vmem:[#allocation2 + $0x6] sm:$0x1] 0.01
        %255 = vst [vmem:[#allocation2 + $0x7] sm:$0x1] 0.01
        %256 = vst [vmem:[#allocation2 + $0x8] sm:$0x1] 0.01
        %257 = vst [vmem:[#allocation2 + $0x9] sm:$0x1] 0.01
        %258 = vst [vmem:[#allocation2 + $0xa] sm:$0x1] 0.01
        %259 = vst [vmem:[#allocation2 + $0xb] sm:$0x1] 0.01
      $region36: #{dpl_ann_sac_forward.3} parent=31 // pred_fallthru
        _
      %v260 = vld [vmem:[%s235] sm:$0x1]
      %v261 = vld [vmem:[%s235 + $0x1] sm:$0x1]
      %v262 = vld [vmem:[%s235 + $0x2] sm:$0x1]
      %v263 = vld [vmem:[%s235 + $0x3] sm:$0x1]
      %v264 = vld [vmem:[%s235 + $0x4] sm:$0x1]
      %v265 = vld [vmem:[%s235 + $0x5] sm:$0x1]
      %v266 = vld [vmem:[%s235 + $0x6] sm:$0x1]
      %v267 = vld [vmem:[%s235 + $0x7] sm:$0x1]
      %v268 = vld [vmem:[%s235 + $0x8] sm:$0x1]
      %v269 = vld [vmem:[%s235 + $0x9] sm:$0x1]
      %v270 = vld [vmem:[%s235 + $0xb] sm:$0x1]
      %v271 = vld [vmem:[%s235 + $0xc] sm:$0x1]
      %v272 = vld [vmem:[%s235 + $0xd] sm:$0x1]
      %v273 = vld [vmem:[%s235 + $0xe] sm:$0x1]
      %v274 = vld [vmem:[%s235 + $0xf] sm:$0x1]
      %v275 = vld [vmem:[%s235 + $0x10] sm:$0x1]
      %v276 = vld [vmem:[%s235 + $0x11] sm:$0x1]
      %v277 = vld [vmem:[%s235 + $0x12] sm:$0x1]
      %v278 = vld [vmem:[%s235 + $0x13] sm:$0x1]
      %v279 = vld [vmem:[%s235 + $0x14] sm:$0x1]
      %v280 = vsub.f32 1.0, %v261
      %v281 = vsub.f32 %v280, %v262
      %v282 = vmax.f32 %v281, 0.0
      %v283 = vmul.f32 %v281, 1000.0
      %v284 = vmul.f32 %v266, %v273
      %v285 = vmul.f32 %v267, %v274
      %v286 = vadd.f32 %v284, %v285
      %v287 = vadd.f32 %v263, %v265
      %v288 = vadd.f32 %v263, %v264
      %v289 = vadd.f32 %v266, %v267
      %v290 = vadd.f32 %v289, %v265
      %v291 = vmul.f32 %v268, %v289
      %v292 = vrcp.pop %v263
      %v293 = vmul.f32 1.0, %v292
      %v294 = vrcp.pop %v264
      %v295 = vmul.f32 1.0, %v294
      %v296 = vrcp.pop %v265
      %v297 = vmul.f32 1.0, %v296
      %v298 = vrcp.pop %v267
      %v299 = vmul.f32 1.0, %v298
      %v300 = vrcp.pop %v287
      %v301 = vmul.f32 1.0, %v300
      %v302 = vrcp.pop %v288
      %v303 = vmul.f32 1.0, %v302
      %v304 = vrcp.pop %v290
      %v305 = vmul.f32 1.0, %v304
      %v306 = vsub.f32 %v289, %v291
      %v307 = vadd.f32 %v306, %v265
      %v308 = vrcp.pop %v307
      %v309 = vmul.f32 1.0, %v308
      %v310 = vrcp.pop %v289
      %v311 = vmul.f32 %v267, %v310
      %v312 = vsub.f32 1.0, %v275
      %v313 = vsub.f32 1.0, %v276
      %v314 = vsub.f32 1.0, %v277
      %v315 = vmul.f32 %v278, 24.0
      %v316 = vsub.f32 1.0, %v279
      %v317 = vmul.f32 %v315, %v316
      %v318 = vadd.f32 %v317, 12.0
      %v319 = vmax.f32 %v318, 0.0
      %v320 = vrcp.pop %v319
      %v321 = vmul.f32 1.0, %v320
      %v322 = vsub.f32 0.0, %v315
      %v323 = vmul.f32 %v322, %v279
      %v324 = vadd.f32 %v323, 12.0
      %v325 = vmul.f32 %v324, %v321
      %v326 = vmax.f32 %v325, 0.0
      %v327 = vsub.f32 %v317, 12.0
      %v328 = vmul.f32 %v327, %v321
      %v329 = vmax.f32 %v328, 0.0
      %v330 = vmul.f32 %v315, %v279
      %v331 = vadd.f32 %v330, 12.0
      %v332 = vmul.f32 %v331, %v321
      %v333 = vld [vmem:[#allocation2] sm:$0x1]
      %v334 = vld [vmem:[#allocation2 + $0x1] sm:$0x1]
      %v335 = vld [vmem:[#allocation2 + $0x2] sm:$0x1]
      %v336 = vld [vmem:[#allocation2 + $0x3] sm:$0x1]
      %v337 = vld [vmem:[#allocation2 + $0x4] sm:$0x1]
      %v338 = vld [vmem:[#allocation2 + $0x5] sm:$0x1]
      %v339 = vld [vmem:[#allocation2 + $0x6] sm:$0x1]
      %v340 = vld [vmem:[#allocation2 + $0x7] sm:$0x1]
      %v341 = vld [vmem:[#allocation2 + $0x8] sm:$0x1]
      %v342 = vld [vmem:[#allocation2 + $0x9] sm:$0x1]
      %v343 = vld [vmem:[#allocation2 + $0xa] sm:$0x1]
      %v344 = vld [vmem:[#allocation2 + $0xb] sm:$0x1]
      %v345 = vld [vmem:[%s223] sm:$0x1]
      %v346 = vmax.f32 %v345, 0.0
      %v347 = vld [vmem:[%s231] sm:$0x1]
      %vm348 = vcmp.eq.f32.partialorder %v347, %v347
      %v349 = vand.u32 2147483647, %v347
      %vm350 = vcmp.lt.f32.partialorder %v349, inf
      %vm351 = vmand %vm348, %vm350
      %v352 = vsel %vm351, %v347, 0.0
      %v353 = vmax.f32 %v352, 0.0
      %v354 = vmul.f32 %v260, %v353
      %v355 = vmul.f32 %v261, %v346
      %v356 = vmul.f32 %v333, %v293
      %v357 = vmul.f32 %v354, %v356
      %v358 = vmin.f32 %v333, %v357
      %v359 = vsub.f32 %v354, %v358
      %v360 = vmul.f32 %v334, %v301
      %v361 = vmul.f32 %v359, %v360
      %v362 = vmax.f32 %v361, 0.0
      %v363 = vsub.f32 %v333, %v358
      %v364 = vsub.f32 %v263, %v363
      %v365 = vsub.f32 %v346, %v364
      %v366 = vmax.f32 %v365, 0.0
      %v367 = vsub.f32 %v334, %v362
      %v368 = vmul.f32 %v367, %v297
      %v369 = vmul.f32 %v366, %v368
      %v370 = vmax.f32 %v369, 0.0
      %v371 = vsub.f32 %v366, %v370
      %v372 = vadd.f32 %v371, %v367
      %v373 = vsub.f32 %v372, %v265
      %v374 = vmax.f32 %v373, 0.0
      %v375 = vadd.f32 %v363, %v346
      %v376 = vmin.f32 %v263, %v375
      %v377 = vmax.f32 %v376, 0.0
      %v378 = vmin.f32 %v265, %v372
      %v379 = vmax.f32 %v378, 0.0
      %v380 = vmul.f32 %v335, %v293
      %v381 = vmul.f32 %v354, %v380
      %v382 = vmin.f32 %v335, %v381
      %v383 = vsub.f32 %v354, %v382
      %v384 = vmin.f32 %v336, %v383
      %v385 = vmax.f32 %v384, 0.0
      %v386 = vsub.f32 %v383, %v385
      %v387 = vmul.f32 %v337, %v301
      %v388 = vmul.f32 %v386, %v387
      %v389 = vmax.f32 %v388, 0.0
      %v390 = vsub.f32 %v337, %v389
      %v391 = vmax.f32 %v390, 0.0
      %v392 = vmul.f32 %v370, %v262
      %v393 = vmul.f32 %v374, %v262
      %v394 = vadd.f32 %v335, %v336
      %v395 = vsub.f32 %v394, %v382
      %v396 = vsub.f32 %v395, %v385
      %v397 = vadd.f32 %v346, %v396
      %v398 = vsub.f32 %v397, %v288
      %v399 = vmax.f32 %v398, 0.0
      %v400 = vmul.f32 %v399, %v281
      %v401 = vsub.f32 %v335, %v382
      %v402 = vadd.f32 %v401, %v346
      %v403 = vmin.f32 %v263, %v402
      %v404 = vmax.f32 %v403, 0.0
      %v405 = vsub.f32 %v397, %v404
      %v406 = vmin.f32 %v264, %v405
      %v407 = vmax.f32 %v406, 0.0
      %v408 = vmul.f32 %v407, %v272
      %v409 = vsub.f32 %v407, %v408
      %v410 = vmax.f32 %v409, 0.0
      %v411 = vadd.f32 %v338, %v339
      %v412 = vadd.f32 %v411, %v391
      %v413 = vmul.f32 %v412, %v305
      %v414 = vsub.f32 1.0, %v413
      %v415 = vmax.f32 %v414, 0.0
      %vm416 = vcmp.gt.f32.partialorder %v415, 0.0
      %v417 = vsel %vm416, %v415, 1.0
      %v418 = vlog2.pop %v417
      %v419 = vmul.f32 %v418, 0.6931472
      %v420 = vmul.f32 %v271, %v419
      %v421 = vmul.f32 %v420, 1.442695
      %v422 = vpow.pop %v421
      %v423 = vsel %vm416, %v422, 0.0
      %v424 = vmul.f32 %v270, %v423
      %v425 = vadd.f32 %v424, 1.0
      %v426 = vmul.f32 %v286, %v425
      %v427 = vmul.f32 %v426, %v410
      %v428 = vmul.f32 %v427, %v295
      %v429 = vsub.f32 %v290, %v412
      %v430 = vmin.f32 %v428, %v429
      %v431 = vmax.f32 %v430, 0.0
      %v432 = vsub.f32 %v289, %v411
      %v433 = vsub.f32 %v265, %v391
      %v434 = vsub.f32 %v431, %v433
      %v435 = vmul.f32 %v431, %v269
      %v436 = vmax.f32 %v434, %v435
      %v437 = vmin.f32 %v432, %v436
      %v438 = vmax.f32 %v437, 0.0
      %v439 = vsub.f32 %v431, %v438
      %v440 = vmax.f32 %v439, 0.0
      %v441 = vmul.f32 %v339, %v299
      %v442 = vsub.f32 1.0, %v441
      %v443 = vmul.f32 %v442, 2.0
      %v444 = vrcp.pop %v442
      %v445 = vmul.f32 %v443, %v444
      %v446 = vmul.f32 %v311, %v445
      %v447 = vmax.f32 %v446, 0.0
      %v448 = vmin.f32 %v447, 1.0
      %v449 = vsub.f32 %v267, %v339
      %v450 = vsub.f32 %v266, %v338
      %v451 = vsub.f32 %v438, %v450
      %v452 = vmul.f32 %v448, %v438
      %v453 = vmax.f32 %v451, %v452
      %v454 = vmin.f32 %v449, %v453
      %v455 = vmax.f32 %v454, 0.0
      %v456 = vsub.f32 %v438, %v455
      %v457 = vmax.f32 %v456, 0.0
      %v458 = vadd.f32 %v391, %v440
      %v459 = vadd.f32 %v338, %v457
      %v460 = vadd.f32 %v339, %v455
      %v461 = vmul.f32 %v459, %v273
      %v462 = vsub.f32 %v459, %v461
      %v463 = vmax.f32 %v462, 0.0
      %v464 = vmul.f32 %v460, %v274
      %v465 = vsub.f32 %v460, %v464
      %v466 = vmax.f32 %v465, 0.0
      %v467 = vmul.f32 %v404, %v293
      %v468 = vmul.f32 %v410, %v295
      %v469 = vadd.f32 %v404, %v410
      %v470 = vmul.f32 %v469, %v303
      %vm471 = vcmp.lt.f32.partialorder %v467, %v468
      %v472 = vmul.f32 %v263, %v470
      %v473 = vsel %vm471, %v472, %v404
      %v474 = vmul.f32 %v264, %v470
      %v475 = vsel %vm471, %v474, %v410
      %v476 = vadd.f32 %v459, %v460
      %v477 = vsub.f32 %v476, %v291
      %v478 = vadd.f32 %v477, %v458
      %v479 = vmul.f32 %v478, %v309
      %v480 = vmax.f32 %v479, 0.0
      %v481 = vmul.f32 %v458, %v297
      %vm482 = vcmp.lt.f32.partialorder %v481, %v480
      %v483 = vmul.f32 %v265, %v480
      %v484 = vsel %vm482, %v483, %v458
      %v485 = vsub.f32 %v484, %v458
      %v486 = vsub.f32 %v459, %v485
      %v487 = vmax.f32 %v486, 0.0
      %v488 = vsel %vm482, %v487, %v463
      %v489 = vsub.f32 %v485, %v459
      %v490 = vmax.f32 %v489, 0.0
      %v491 = vsub.f32 %v460, %v490
      %v492 = vsel %vm482, %v491, %v466
      %v493 = vadd.f32 %v340, %v341
      %v494 = vadd.f32 %v493, %v342
      %v495 = vadd.f32 %v494, %v343
      %v496 = vadd.f32 %v392, %v393
      %v497 = vmul.f32 %v496, %v262
      %v498 = vadd.f32 %v355, %v497
      %v499 = vmul.f32 %v400, %v282
      %v500 = vadd.f32 %v498, %v499
      %v501 = vmul.f32 %v500, 1000.0
      %v502 = vmul.f32 %v275, %v341
      %v503 = vmul.f32 %v312, %v408
      %v504 = vmul.f32 %v503, %v283
      %v505 = vadd.f32 %v502, %v504
      %v506 = vmax.f32 %v505, 0.0
      %v507 = vmul.f32 %v276, %v342
      %v508 = vmul.f32 %v313, %v461
      %v509 = vmul.f32 %v508, %v283
      %v510 = vadd.f32 %v507, %v509
      %v511 = vmax.f32 %v510, 0.0
      %v512 = vmul.f32 %v277, %v343
      %v513 = vmul.f32 %v314, %v464
      %v514 = vmul.f32 %v513, %v283
      %v515 = vadd.f32 %v512, %v514
      %v516 = vmax.f32 %v515, 0.0
      %v517 = vadd.f32 %v501, %v506
      %v518 = vadd.f32 %v517, %v511
      %v519 = vadd.f32 %v518, %v516
      %v520 = vmul.f32 %v332, %v495
      %v521 = vmul.f32 %v326, %v519
      %v522 = vadd.f32 %v520, %v521
      %v523 = vmul.f32 %v329, %v344
      %v524 = vadd.f32 %v522, %v523
      %s525 = scalar_lea.vmem %s223, 1
      %v526 = vld [vmem:[%s525] sm:$0x1]
      %v527 = vmax.f32 %v526, 0.0
      %s528 = scalar_lea.vmem %s231, 1
      %v529 = vld [vmem:[%s528] sm:$0x1]
      %vm530 = vcmp.eq.f32.partialorder %v529, %v529
      %v531 = vand.u32 2147483647, %v529
      %vm532 = vcmp.lt.f32.partialorder %v531, inf
      %vm533 = vmand %vm530, %vm532
      %v534 = vsel %vm533, %v529, 0.0
      %v535 = vmax.f32 %v534, 0.0
      %v536 = vmul.f32 %v260, %v535
      %v537 = vmul.f32 %v261, %v527
      %v538 = vmul.f32 %v377, %v293
      %v539 = vmul.f32 %v536, %v538
      %v540 = vmin.f32 %v377, %v539
      %v541 = vsub.f32 %v536, %v540
      %v542 = vmul.f32 %v379, %v301
      %v543 = vmul.f32 %v541, %v542
      %v544 = vmax.f32 %v543, 0.0
      %v545 = vsub.f32 %v377, %v540
      %v546 = vsub.f32 %v263, %v545
      %v547 = vsub.f32 %v527, %v546
      %v548 = vmax.f32 %v547, 0.0
      %v549 = vsub.f32 %v379, %v544
      %v550 = vmul.f32 %v549, %v297
      %v551 = vmul.f32 %v548, %v550
      %v552 = vmax.f32 %v551, 0.0
      %v553 = vsub.f32 %v548, %v552
      %v554 = vadd.f32 %v553, %v549
      %v555 = vsub.f32 %v554, %v265
      %v556 = vmax.f32 %v555, 0.0
      %v557 = vadd.f32 %v545, %v527
      %v558 = vmin.f32 %v263, %v557
      %v559 = vmax.f32 %v558, 0.0
      %v560 = vmin.f32 %v265, %v554
      %v561 = vmax.f32 %v560, 0.0
      %v562 = vmul.f32 %v473, %v293
      %v563 = vmul.f32 %v536, %v562
      %v564 = vmin.f32 %v473, %v563
      %v565 = vsub.f32 %v536, %v564
      %v566 = vmin.f32 %v475, %v565
      %v567 = vmax.f32 %v566, 0.0
      %v568 = vsub.f32 %v565, %v567
      %v569 = vmul.f32 %v484, %v301
      %v570 = vmul.f32 %v568, %v569
      %v571 = vmax.f32 %v570, 0.0
      %v572 = vsub.f32 %v484, %v571
      %v573 = vmax.f32 %v572, 0.0
      %v574 = vmul.f32 %v552, %v262
      %v575 = vmul.f32 %v556, %v262
      %v576 = vadd.f32 %v473, %v475
      %v577 = vsub.f32 %v576, %v564
      %v578 = vsub.f32 %v577, %v567
      %v579 = vadd.f32 %v527, %v578
      %v580 = vsub.f32 %v579, %v288
      %v581 = vmax.f32 %v580, 0.0
      %v582 = vmul.f32 %v581, %v281
      %v583 = vsub.f32 %v473, %v564
      %v584 = vadd.f32 %v583, %v527
      %v585 = vmin.f32 %v263, %v584
      %v586 = vmax.f32 %v585, 0.0
      %v587 = vsub.f32 %v579, %v586
      %v588 = vmin.f32 %v264, %v587
      %v589 = vmax.f32 %v588, 0.0
      %v590 = vmul.f32 %v589, %v272
      %v591 = vsub.f32 %v589, %v590
      %v592 = vmax.f32 %v591, 0.0
      %v593 = vadd.f32 %v488, %v492
      %v594 = vadd.f32 %v593, %v573
      %v595 = vmul.f32 %v594, %v305
      %v596 = vsub.f32 1.0, %v595
      %v597 = vmax.f32 %v596, 0.0
      %vm598 = vcmp.gt.f32.partialorder %v597, 0.0
      %v599 = vsel %vm598, %v597, 1.0
      %v600 = vlog2.pop %v599
      %v601 = vmul.f32 %v600, 0.6931472
      %v602 = vmul.f32 %v271, %v601
      %v603 = vmul.f32 %v602, 1.442695
      %v604 = vpow.pop %v603
      %v605 = vsel %vm598, %v604, 0.0
      %v606 = vmul.f32 %v270, %v605
      %v607 = vadd.f32 %v606, 1.0
      %v608 = vmul.f32 %v286, %v607
      %v609 = vmul.f32 %v608, %v592
      %v610 = vmul.f32 %v609, %v295
      %v611 = vsub.f32 %v290, %v594
      %v612 = vmin.f32 %v610, %v611
      %v613 = vmax.f32 %v612, 0.0
      %v614 = vsub.f32 %v289, %v593
      %v615 = vsub.f32 %v265, %v573
      %v616 = vsub.f32 %v613, %v615
      %v617 = vmul.f32 %v613, %v269
      %v618 = vmax.f32 %v616, %v617
      %v619 = vmin.f32 %v614, %v618
      %v620 = vmax.f32 %v619, 0.0
      %v621 = vsub.f32 %v613, %v620
      %v622 = vmax.f32 %v621, 0.0
      %v623 = vmul.f32 %v492, %v299
      %v624 = vsub.f32 1.0, %v623
      %v625 = vmul.f32 %v624, 2.0
      %v626 = vrcp.pop %v624
      %v627 = vmul.f32 %v625, %v626
      %v628 = vmul.f32 %v311, %v627
      %v629 = vmax.f32 %v628, 0.0
      %v630 = vmin.f32 %v629, 1.0
      %v631 = vsub.f32 %v267, %v492
      %v632 = vsub.f32 %v266, %v488
      %v633 = vsub.f32 %v620, %v632
      %v634 = vmul.f32 %v630, %v620
      %v635 = vmax.f32 %v633, %v634
      %v636 = vmin.f32 %v631, %v635
      %v637 = vmax.f32 %v636, 0.0
      %v638 = vsub.f32 %v620, %v637
      %v639 = vmax.f32 %v638, 0.0
      %v640 = vadd.f32 %v573, %v622
      %v641 = vadd.f32 %v488, %v639
      %v642 = vadd.f32 %v492, %v637
      %v643 = vmul.f32 %v641, %v273
      %v644 = vsub.f32 %v641, %v643
      %v645 = vmax.f32 %v644, 0.0
      %v646 = vmul.f32 %v642, %v274
      %v647 = vsub.f32 %v642, %v646
      %v648 = vmax.f32 %v647, 0.0
      %v649 = vmul.f32 %v586, %v293
      %v650 = vmul.f32 %v592, %v295
      %v651 = vadd.f32 %v586, %v592
      %v652 = vmul.f32 %v651, %v303
      %vm653 = vcmp.lt.f32.partialorder %v649, %v650
      %v654 = vmul.f32 %v263, %v652
      %v655 = vsel %vm653, %v654, %v586
      %v656 = vmul.f32 %v264, %v652
      %v657 = vsel %vm653, %v656, %v592
      %v658 = vadd.f32 %v641, %v642
      %v659 = vsub.f32 %v658, %v291
      %v660 = vadd.f32 %v659, %v640
      %v661 = vmul.f32 %v660, %v309
      %v662 = vmax.f32 %v661, 0.0
      %v663 = vmul.f32 %v640, %v297
      %vm664 = vcmp.lt.f32.partialorder %v663, %v662
      %v665 = vmul.f32 %v265, %v662
      %v666 = vsel %vm664, %v665, %v640
      %v667 = vsub.f32 %v666, %v640
      %v668 = vsub.f32 %v641, %v667
      %v669 = vmax.f32 %v668, 0.0
      %v670 = vsel %vm664, %v669, %v645
      %v671 = vsub.f32 %v667, %v641
      %v672 = vmax.f32 %v671, 0.0
      %v673 = vsub.f32 %v642, %v672
      %v674 = vsel %vm664, %v673, %v648
      %v675 = vadd.f32 %v574, %v575
      %v676 = vmul.f32 %v675, %v262
      %v677 = vadd.f32 %v537, %v676
      %v678 = vmul.f32 %v582, %v282
      %v679 = vadd.f32 %v677, %v678
      %v680 = vmul.f32 %v679, 1000.0
      %v681 = vmul.f32 %v275, %v506
      %v682 = vmul.f32 %v312, %v590
      %v683 = vmul.f32 %v682, %v283
      %v684 = vadd.f32 %v681, %v683
      %v685 = vmax.f32 %v684, 0.0
      %v686 = vmul.f32 %v276, %v511
      %v687 = vmul.f32 %v313, %v643
      %v688 = vmul.f32 %v687, %v283
      %v689 = vadd.f32 %v686, %v688
      %v690 = vmax.f32 %v689, 0.0
      %v691 = vmul.f32 %v277, %v516
      %v692 = vmul.f32 %v314, %v646
      %v693 = vmul.f32 %v692, %v283
      %v694 = vadd.f32 %v691, %v693
      %v695 = vmax.f32 %v694, 0.0
      %v696 = vadd.f32 %v680, %v685
      %v697 = vadd.f32 %v696, %v690
      %v698 = vadd.f32 %v697, %v695
      %v699 = vmul.f32 %v332, %v519
      %v700 = vmul.f32 %v326, %v698
      %v701 = vadd.f32 %v699, %v700
      %v702 = vmul.f32 %v329, %v524
      %v703 = vadd.f32 %v701, %v702
      %s704 = scalar_lea.vmem %s223, 2
      %v705 = vld [vmem:[%s704] sm:$0x1]
      %v706 = vmax.f32 %v705, 0.0
      %s707 = scalar_lea.vmem %s231, 2
      %v708 = vld [vmem:[%s707] sm:$0x1]
      %vm709 = vcmp.eq.f32.partialorder %v708, %v708
      %v710 = vand.u32 2147483647, %v708
      %vm711 = vcmp.lt.f32.partialorder %v710, inf
      %vm712 = vmand %vm709, %vm711
      %v713 = vsel %vm712, %v708, 0.0
      %v714 = vmax.f32 %v713, 0.0
      %v715 = vmul.f32 %v260, %v714
      %v716 = vmul.f32 %v261, %v706
      %v717 = vmul.f32 %v559, %v293
      %v718 = vmul.f32 %v715, %v717
      %v719 = vmin.f32 %v559, %v718
      %v720 = vsub.f32 %v715, %v719
      %v721 = vmul.f32 %v561, %v301
      %v722 = vmul.f32 %v720, %v721
      %v723 = vmax.f32 %v722, 0.0
      %v724 = vsub.f32 %v559, %v719
      %v725 = vsub.f32 %v263, %v724
      %v726 = vsub.f32 %v706, %v725
      %v727 = vmax.f32 %v726, 0.0
      %v728 = vsub.f32 %v561, %v723
      %v729 = vmul.f32 %v728, %v297
      %v730 = vmul.f32 %v727, %v729
      %v731 = vmax.f32 %v730, 0.0
      %v732 = vsub.f32 %v727, %v731
      %v733 = vadd.f32 %v732, %v728
      %v734 = vsub.f32 %v733, %v265
      %v735 = vmax.f32 %v734, 0.0
      %v736 = vadd.f32 %v724, %v706
      %v737 = vmin.f32 %v263, %v736
      %v738 = vmax.f32 %v737, 0.0
      %v739 = vmin.f32 %v265, %v733
      %v740 = vmax.f32 %v739, 0.0
      %v741 = vmul.f32 %v655, %v293
      %v742 = vmul.f32 %v715, %v741
      %v743 = vmin.f32 %v655, %v742
      %v744 = vsub.f32 %v715, %v743
      %v745 = vmin.f32 %v657, %v744
      %v746 = vmax.f32 %v745, 0.0
      %v747 = vsub.f32 %v744, %v746
      %v748 = vmul.f32 %v666, %v301
      %v749 = vmul.f32 %v747, %v748
      %v750 = vmax.f32 %v749, 0.0
      %v751 = vsub.f32 %v666, %v750
      %v752 = vmax.f32 %v751, 0.0
      %v753 = vmul.f32 %v731, %v262
      %v754 = vmul.f32 %v735, %v262
      %v755 = vadd.f32 %v655, %v657
      %v756 = vsub.f32 %v755, %v743
      %v757 = vsub.f32 %v756, %v746
      %v758 = vadd.f32 %v706, %v757
      %v759 = vsub.f32 %v758, %v288
      %v760 = vmax.f32 %v759, 0.0
      %v761 = vmul.f32 %v760, %v281
      %v762 = vsub.f32 %v655, %v743
      %v763 = vadd.f32 %v762, %v706
      %v764 = vmin.f32 %v263, %v763
      %v765 = vmax.f32 %v764, 0.0
      %v766 = vsub.f32 %v758, %v765
      %v767 = vmin.f32 %v264, %v766
      %v768 = vmax.f32 %v767, 0.0
      %v769 = vmul.f32 %v768, %v272
      %v770 = vsub.f32 %v768, %v769
      %v771 = vmax.f32 %v770, 0.0
      %v772 = vadd.f32 %v670, %v674
      %v773 = vadd.f32 %v772, %v752
      %v774 = vmul.f32 %v773, %v305
      %v775 = vsub.f32 1.0, %v774
      %v776 = vmax.f32 %v775, 0.0
      %vm777 = vcmp.gt.f32.partialorder %v776, 0.0
      %v778 = vsel %vm777, %v776, 1.0
      %v779 = vlog2.pop %v778
      %v780 = vmul.f32 %v779, 0.6931472
      %v781 = vmul.f32 %v271, %v780
      %v782 = vmul.f32 %v781, 1.442695
      %v783 = vpow.pop %v782
      %v784 = vsel %vm777, %v783, 0.0
      %v785 = vmul.f32 %v270, %v784
      %v786 = vadd.f32 %v785, 1.0
      %v787 = vmul.f32 %v286, %v786
      %v788 = vmul.f32 %v787, %v771
      %v789 = vmul.f32 %v788, %v295
      %v790 = vsub.f32 %v290, %v773
      %v791 = vmin.f32 %v789, %v790
      %v792 = vmax.f32 %v791, 0.0
      %v793 = vsub.f32 %v289, %v772
      %v794 = vsub.f32 %v265, %v752
      %v795 = vsub.f32 %v792, %v794
      %v796 = vmul.f32 %v792, %v269
      %v797 = vmax.f32 %v795, %v796
      %v798 = vmin.f32 %v793, %v797
      %v799 = vmax.f32 %v798, 0.0
      %v800 = vsub.f32 %v792, %v799
      %v801 = vmax.f32 %v800, 0.0
      %v802 = vmul.f32 %v674, %v299
      %v803 = vsub.f32 1.0, %v802
      %v804 = vmul.f32 %v803, 2.0
      %v805 = vrcp.pop %v803
      %v806 = vmul.f32 %v804, %v805
      %v807 = vmul.f32 %v311, %v806
      %v808 = vmax.f32 %v807, 0.0
      %v809 = vmin.f32 %v808, 1.0
      %v810 = vsub.f32 %v267, %v674
      %v811 = vsub.f32 %v266, %v670
      %v812 = vsub.f32 %v799, %v811
      %v813 = vmul.f32 %v809, %v799
      %v814 = vmax.f32 %v812, %v813
      %v815 = vmin.f32 %v810, %v814
      %v816 = vmax.f32 %v815, 0.0
      %v817 = vsub.f32 %v799, %v816
      %v818 = vmax.f32 %v817, 0.0
      %v819 = vadd.f32 %v752, %v801
      %v820 = vadd.f32 %v670, %v818
      %v821 = vadd.f32 %v674, %v816
      %v822 = vmul.f32 %v820, %v273
      %v823 = vsub.f32 %v820, %v822
      %v824 = vmax.f32 %v823, 0.0
      %v825 = vmul.f32 %v821, %v274
      %v826 = vsub.f32 %v821, %v825
      %v827 = vmax.f32 %v826, 0.0
      %v828 = vmul.f32 %v765, %v293
      %v829 = vmul.f32 %v771, %v295
      %v830 = vadd.f32 %v765, %v771
      %v831 = vmul.f32 %v830, %v303
      %vm832 = vcmp.lt.f32.partialorder %v828, %v829
      %v833 = vmul.f32 %v263, %v831
      %v834 = vsel %vm832, %v833, %v765
      %v835 = vmul.f32 %v264, %v831
      %v836 = vsel %vm832, %v835, %v771
      %v837 = vadd.f32 %v820, %v821
      %v838 = vsub.f32 %v837, %v291
      %v839 = vadd.f32 %v838, %v819
      %v840 = vmul.f32 %v839, %v309
      %v841 = vmax.f32 %v840, 0.0
      %v842 = vmul.f32 %v819, %v297
      %vm843 = vcmp.lt.f32.partialorder %v842, %v841
      %v844 = vmul.f32 %v265, %v841
      %v845 = vsel %vm843, %v844, %v819
      %v846 = vsub.f32 %v845, %v819
      %v847 = vsub.f32 %v820, %v846
      %v848 = vmax.f32 %v847, 0.0
      %v849 = vsel %vm843, %v848, %v824
      %v850 = vsub.f32 %v846, %v820
      %v851 = vmax.f32 %v850, 0.0
      %v852 = vsub.f32 %v821, %v851
      %v853 = vsel %vm843, %v852, %v827
      %v854 = vadd.f32 %v753, %v754
      %v855 = vmul.f32 %v854, %v262
      %v856 = vadd.f32 %v716, %v855
      %v857 = vmul.f32 %v761, %v282
      %v858 = vadd.f32 %v856, %v857
      %v859 = vmul.f32 %v858, 1000.0
      %v860 = vmul.f32 %v275, %v685
      %v861 = vmul.f32 %v312, %v769
      %v862 = vmul.f32 %v861, %v283
      %v863 = vadd.f32 %v860, %v862
      %v864 = vmax.f32 %v863, 0.0
      %v865 = vmul.f32 %v276, %v690
      %v866 = vmul.f32 %v313, %v822
      %v867 = vmul.f32 %v866, %v283
      %v868 = vadd.f32 %v865, %v867
      %v869 = vmax.f32 %v868, 0.0
      %v870 = vmul.f32 %v277, %v695
      %v871 = vmul.f32 %v314, %v825
      %v872 = vmul.f32 %v871, %v283
      %v873 = vadd.f32 %v870, %v872
      %v874 = vmax.f32 %v873, 0.0
      %v875 = vadd.f32 %v859, %v864
      %v876 = vadd.f32 %v875, %v869
      %v877 = vadd.f32 %v876, %v874
      %v878 = vmul.f32 %v332, %v698
      %v879 = vmul.f32 %v326, %v877
      %v880 = vadd.f32 %v878, %v879
      %v881 = vmul.f32 %v329, %v703
      %v882 = vadd.f32 %v880, %v881
      %s883 = scalar_lea.vmem %s223, 3
      %v884 = vld [vmem:[%s883] sm:$0x1]
      %v885 = vmax.f32 %v884, 0.0
      %s886 = scalar_lea.vmem %s231, 3
      %v887 = vld [vmem:[%s886] sm:$0x1]
      %vm888 = vcmp.eq.f32.partialorder %v887, %v887
      %v889 = vand.u32 2147483647, %v887
      %vm890 = vcmp.lt.f32.partialorder %v889, inf
      %vm891 = vmand %vm888, %vm890
      %v892 = vsel %vm891, %v887, 0.0
      %v893 = vmax.f32 %v892, 0.0
      %v894 = vmul.f32 %v260, %v893
      %v895 = vmul.f32 %v261, %v885
      %v896 = vmul.f32 %v738, %v293
      %v897 = vmul.f32 %v894, %v896
      %v898 = vmin.f32 %v738, %v897
      %v899 = vsub.f32 %v894, %v898
      %v900 = vmul.f32 %v740, %v301
      %v901 = vmul.f32 %v899, %v900
      %v902 = vmax.f32 %v901, 0.0
      %v903 = vsub.f32 %v738, %v898
      %v904 = vsub.f32 %v263, %v903
      %v905 = vsub.f32 %v885, %v904
      %v906 = vmax.f32 %v905, 0.0
      %v907 = vsub.f32 %v740, %v902
      %v908 = vmul.f32 %v907, %v297
      %v909 = vmul.f32 %v906, %v908
      %v910 = vmax.f32 %v909, 0.0
      %v911 = vsub.f32 %v906, %v910
      %v912 = vadd.f32 %v911, %v907
      %v913 = vsub.f32 %v912, %v265
      %v914 = vmax.f32 %v913, 0.0
      %v915 = vadd.f32 %v903, %v885
      %v916 = vmin.f32 %v263, %v915
      %v917 = vmax.f32 %v916, 0.0
      %v918 = vmin.f32 %v265, %v912
      %v919 = vmax.f32 %v918, 0.0
      %v920 = vmul.f32 %v834, %v293
      %v921 = vmul.f32 %v894, %v920
      %v922 = vmin.f32 %v834, %v921
      %v923 = vsub.f32 %v894, %v922
      %v924 = vmin.f32 %v836, %v923
      %v925 = vmax.f32 %v924, 0.0
      %v926 = vsub.f32 %v923, %v925
      %v927 = vmul.f32 %v845, %v301
      %v928 = vmul.f32 %v926, %v927
      %v929 = vmax.f32 %v928, 0.0
      %v930 = vsub.f32 %v845, %v929
      %v931 = vmax.f32 %v930, 0.0
      %v932 = vmul.f32 %v910, %v262
      %v933 = vmul.f32 %v914, %v262
      %v934 = vadd.f32 %v834, %v836
      %v935 = vsub.f32 %v934, %v922
      %v936 = vsub.f32 %v935, %v925
      %v937 = vadd.f32 %v885, %v936
      %v938 = vsub.f32 %v937, %v288
      %v939 = vmax.f32 %v938, 0.0
      %v940 = vmul.f32 %v939, %v281
      %v941 = vsub.f32 %v834, %v922
      %v942 = vadd.f32 %v941, %v885
      %v943 = vmin.f32 %v263, %v942
      %v944 = vmax.f32 %v943, 0.0
      %v945 = vsub.f32 %v937, %v944
      %v946 = vmin.f32 %v264, %v945
      %v947 = vmax.f32 %v946, 0.0
      %v948 = vmul.f32 %v947, %v272
      %v949 = vsub.f32 %v947, %v948
      %v950 = vmax.f32 %v949, 0.0
      %v951 = vadd.f32 %v849, %v853
      %v952 = vadd.f32 %v951, %v931
      %v953 = vmul.f32 %v952, %v305
      %v954 = vsub.f32 1.0, %v953
      %v955 = vmax.f32 %v954, 0.0
      %vm956 = vcmp.gt.f32.partialorder %v955, 0.0
      %v957 = vsel %vm956, %v955, 1.0
      %v958 = vlog2.pop %v957
      %v959 = vmul.f32 %v958, 0.6931472
      %v960 = vmul.f32 %v271, %v959
      %v961 = vmul.f32 %v960, 1.442695
      %v962 = vpow.pop %v961
      %v963 = vsel %vm956, %v962, 0.0
      %v964 = vmul.f32 %v270, %v963
      %v965 = vadd.f32 %v964, 1.0
      %v966 = vmul.f32 %v286, %v965
      %v967 = vmul.f32 %v966, %v950
      %v968 = vmul.f32 %v967, %v295
      %v969 = vsub.f32 %v290, %v952
      %v970 = vmin.f32 %v968, %v969
      %v971 = vmax.f32 %v970, 0.0
      %v972 = vsub.f32 %v289, %v951
      %v973 = vsub.f32 %v265, %v931
      %v974 = vsub.f32 %v971, %v973
      %v975 = vmul.f32 %v971, %v269
      %v976 = vmax.f32 %v974, %v975
      %v977 = vmin.f32 %v972, %v976
      %v978 = vmax.f32 %v977, 0.0
      %v979 = vsub.f32 %v971, %v978
      %v980 = vmax.f32 %v979, 0.0
      %v981 = vmul.f32 %v853, %v299
      %v982 = vsub.f32 1.0, %v981
      %v983 = vmul.f32 %v982, 2.0
      %v984 = vrcp.pop %v982
      %v985 = vmul.f32 %v983, %v984
      %v986 = vmul.f32 %v311, %v985
      %v987 = vmax.f32 %v986, 0.0
      %v988 = vmin.f32 %v987, 1.0
      %v989 = vsub.f32 %v267, %v853
      %v990 = vsub.f32 %v266, %v849
      %v991 = vsub.f32 %v978, %v990
      %v992 = vmul.f32 %v988, %v978
      %v993 = vmax.f32 %v991, %v992
      %v994 = vmin.f32 %v989, %v993
      %v995 = vmax.f32 %v994, 0.0
      %v996 = vsub.f32 %v978, %v995
      %v997 = vmax.f32 %v996, 0.0
      %v998 = vadd.f32 %v931, %v980
      %v999 = vadd.f32 %v849, %v997
      %v1000 = vadd.f32 %v853, %v995
      %v1001 = vmul.f32 %v999, %v273
      %v1002 = vsub.f32 %v999, %v1001
      %v1003 = vmax.f32 %v1002, 0.0
      %v1004 = vmul.f32 %v1000, %v274
      %v1005 = vsub.f32 %v1000, %v1004
      %v1006 = vmax.f32 %v1005, 0.0
      %v1007 = vmul.f32 %v944, %v293
      %v1008 = vmul.f32 %v950, %v295
      %v1009 = vadd.f32 %v944, %v950
      %v1010 = vmul.f32 %v1009, %v303
      %vm1011 = vcmp.lt.f32.partialorder %v1007, %v1008
      %v1012 = vmul.f32 %v263, %v1010
      %v1013 = vsel %vm1011, %v1012, %v944
      %v1014 = vmul.f32 %v264, %v1010
      %v1015 = vsel %vm1011, %v1014, %v950
      %v1016 = vadd.f32 %v999, %v1000
      %v1017 = vsub.f32 %v1016, %v291
      %v1018 = vadd.f32 %v1017, %v998
      %v1019 = vmul.f32 %v1018, %v309
      %v1020 = vmax.f32 %v1019, 0.0
      %v1021 = vmul.f32 %v998, %v297
      %vm1022 = vcmp.lt.f32.partialorder %v1021, %v1020
      %v1023 = vmul.f32 %v265, %v1020
      %v1024 = vsel %vm1022, %v1023, %v998
      %v1025 = vsub.f32 %v1024, %v998
      %v1026 = vsub.f32 %v999, %v1025
      %v1027 = vmax.f32 %v1026, 0.0
      %v1028 = vsel %vm1022, %v1027, %v1003
      %v1029 = vsub.f32 %v1025, %v999
      %v1030 = vmax.f32 %v1029, 0.0
      %v1031 = vsub.f32 %v1000, %v1030
      %v1032 = vsel %vm1022, %v1031, %v1006
      %v1033 = vadd.f32 %v932, %v933
      %v1034 = vmul.f32 %v1033, %v262
      %v1035 = vadd.f32 %v895, %v1034
      %v1036 = vmul.f32 %v940, %v282
      %v1037 = vadd.f32 %v1035, %v1036
      %v1038 = vmul.f32 %v1037, 1000.0
      %v1039 = vmul.f32 %v275, %v864
      %v1040 = vmul.f32 %v312, %v948
      %v1041 = vmul.f32 %v1040, %v283
      %v1042 = vadd.f32 %v1039, %v1041
      %v1043 = vmax.f32 %v1042, 0.0
      %v1044 = vmul.f32 %v276, %v869
      %v1045 = vmul.f32 %v313, %v1001
      %v1046 = vmul.f32 %v1045, %v283
      %v1047 = vadd.f32 %v1044, %v1046
      %v1048 = vmax.f32 %v1047, 0.0
      %v1049 = vmul.f32 %v277, %v874
      %v1050 = vmul.f32 %v314, %v1004
      %v1051 = vmul.f32 %v1050, %v283
      %v1052 = vadd.f32 %v1049, %v1051
      %v1053 = vmax.f32 %v1052, 0.0
      %v1054 = vadd.f32 %v1038, %v1043
      %v1055 = vadd.f32 %v1054, %v1048
      %v1056 = vadd.f32 %v1055, %v1053
      %v1057 = vmul.f32 %v332, %v877
      %v1058 = vmul.f32 %v326, %v1056
      %v1059 = vadd.f32 %v1057, %v1058
      %v1060 = vmul.f32 %v329, %v882
      %v1061 = vadd.f32 %v1059, %v1060
      %s1062 = scalar_lea.vmem %s223, 4
      %v1063 = vld [vmem:[%s1062] sm:$0x1]
      %v1064 = vmax.f32 %v1063, 0.0
      %s1065 = scalar_lea.vmem %s231, 4
      %v1066 = vld [vmem:[%s1065] sm:$0x1]
      %vm1067 = vcmp.eq.f32.partialorder %v1066, %v1066
      %v1068 = vand.u32 2147483647, %v1066
      %vm1069 = vcmp.lt.f32.partialorder %v1068, inf
      %vm1070 = vmand %vm1067, %vm1069
      %v1071 = vsel %vm1070, %v1066, 0.0
      %v1072 = vmax.f32 %v1071, 0.0
      %v1073 = vmul.f32 %v260, %v1072
      %v1074 = vmul.f32 %v261, %v1064
      %v1075 = vmul.f32 %v917, %v293
      %v1076 = vmul.f32 %v1073, %v1075
      %v1077 = vmin.f32 %v917, %v1076
      %v1078 = vsub.f32 %v1073, %v1077
      %v1079 = vmul.f32 %v919, %v301
      %v1080 = vmul.f32 %v1078, %v1079
      %v1081 = vmax.f32 %v1080, 0.0
      %v1082 = vsub.f32 %v917, %v1077
      %v1083 = vsub.f32 %v263, %v1082
      %v1084 = vsub.f32 %v1064, %v1083
      %v1085 = vmax.f32 %v1084, 0.0
      %v1086 = vsub.f32 %v919, %v1081
      %v1087 = vmul.f32 %v1086, %v297
      %v1088 = vmul.f32 %v1085, %v1087
      %v1089 = vmax.f32 %v1088, 0.0
      %v1090 = vsub.f32 %v1085, %v1089
      %v1091 = vadd.f32 %v1090, %v1086
      %v1092 = vsub.f32 %v1091, %v265
      %v1093 = vmax.f32 %v1092, 0.0
      %v1094 = vadd.f32 %v1082, %v1064
      %v1095 = vmin.f32 %v263, %v1094
      %v1096 = vmax.f32 %v1095, 0.0
      %v1097 = vmin.f32 %v265, %v1091
      %v1098 = vmax.f32 %v1097, 0.0
      %v1099 = vmul.f32 %v1013, %v293
      %v1100 = vmul.f32 %v1073, %v1099
      %v1101 = vmin.f32 %v1013, %v1100
      %v1102 = vsub.f32 %v1073, %v1101
      %v1103 = vmin.f32 %v1015, %v1102
      %v1104 = vmax.f32 %v1103, 0.0
      %v1105 = vsub.f32 %v1102, %v1104
      %v1106 = vmul.f32 %v1024, %v301
      %v1107 = vmul.f32 %v1105, %v1106
      %v1108 = vmax.f32 %v1107, 0.0
      %v1109 = vsub.f32 %v1024, %v1108
      %v1110 = vmax.f32 %v1109, 0.0
      %v1111 = vmul.f32 %v1089, %v262
      %v1112 = vmul.f32 %v1093, %v262
      %v1113 = vadd.f32 %v1013, %v1015
      %v1114 = vsub.f32 %v1113, %v1101
      %v1115 = vsub.f32 %v1114, %v1104
      %v1116 = vadd.f32 %v1064, %v1115
      %v1117 = vsub.f32 %v1116, %v288
      %v1118 = vmax.f32 %v1117, 0.0
      %v1119 = vmul.f32 %v1118, %v281
      %v1120 = vsub.f32 %v1013, %v1101
      %v1121 = vadd.f32 %v1120, %v1064
      %v1122 = vmin.f32 %v263, %v1121
      %v1123 = vmax.f32 %v1122, 0.0
      %v1124 = vsub.f32 %v1116, %v1123
      %v1125 = vmin.f32 %v264, %v1124
      %v1126 = vmax.f32 %v1125, 0.0
      %v1127 = vmul.f32 %v1126, %v272
      %v1128 = vsub.f32 %v1126, %v1127
      %v1129 = vmax.f32 %v1128, 0.0
      %v1130 = vadd.f32 %v1028, %v1032
      %v1131 = vadd.f32 %v1130, %v1110
      %v1132 = vmul.f32 %v1131, %v305
      %v1133 = vsub.f32 1.0, %v1132
      %v1134 = vmax.f32 %v1133, 0.0
      %vm1135 = vcmp.gt.f32.partialorder %v1134, 0.0
      %v1136 = vsel %vm1135, %v1134, 1.0
      %v1137 = vlog2.pop %v1136
      %v1138 = vmul.f32 %v1137, 0.6931472
      %v1139 = vmul.f32 %v271, %v1138
      %v1140 = vmul.f32 %v1139, 1.442695
      %v1141 = vpow.pop %v1140
      %v1142 = vsel %vm1135, %v1141, 0.0
      %v1143 = vmul.f32 %v270, %v1142
      %v1144 = vadd.f32 %v1143, 1.0
      %v1145 = vmul.f32 %v286, %v1144
      %v1146 = vmul.f32 %v1145, %v1129
      %v1147 = vmul.f32 %v1146, %v295
      %v1148 = vsub.f32 %v290, %v1131
      %v1149 = vmin.f32 %v1147, %v1148
      %v1150 = vmax.f32 %v1149, 0.0
      %v1151 = vsub.f32 %v289, %v1130
      %v1152 = vsub.f32 %v265, %v1110
      %v1153 = vsub.f32 %v1150, %v1152
      %v1154 = vmul.f32 %v1150, %v269
      %v1155 = vmax.f32 %v1153, %v1154
      %v1156 = vmin.f32 %v1151, %v1155
      %v1157 = vmax.f32 %v1156, 0.0
      %v1158 = vsub.f32 %v1150, %v1157
      %v1159 = vmax.f32 %v1158, 0.0
      %v1160 = vmul.f32 %v1032, %v299
      %v1161 = vsub.f32 1.0, %v1160
      %v1162 = vmul.f32 %v1161, 2.0
      %v1163 = vrcp.pop %v1161
      %v1164 = vmul.f32 %v1162, %v1163
      %v1165 = vmul.f32 %v311, %v1164
      %v1166 = vmax.f32 %v1165, 0.0
      %v1167 = vmin.f32 %v1166, 1.0
      %v1168 = vsub.f32 %v267, %v1032
      %v1169 = vsub.f32 %v266, %v1028
      %v1170 = vsub.f32 %v1157, %v1169
      %v1171 = vmul.f32 %v1167, %v1157
      %v1172 = vmax.f32 %v1170, %v1171
      %v1173 = vmin.f32 %v1168, %v1172
      %v1174 = vmax.f32 %v1173, 0.0
      %v1175 = vsub.f32 %v1157, %v1174
      %v1176 = vmax.f32 %v1175, 0.0
      %v1177 = vadd.f32 %v1110, %v1159
      %v1178 = vadd.f32 %v1028, %v1176
      %v1179 = vadd.f32 %v1032, %v1174
      %v1180 = vmul.f32 %v1178, %v273
      %v1181 = vsub.f32 %v1178, %v1180
      %v1182 = vmax.f32 %v1181, 0.0
      %v1183 = vmul.f32 %v1179, %v274
      %v1184 = vsub.f32 %v1179, %v1183
      %v1185 = vmax.f32 %v1184, 0.0
      %v1186 = vmul.f32 %v1123, %v293
      %v1187 = vmul.f32 %v1129, %v295
      %v1188 = vadd.f32 %v1123, %v1129
      %v1189 = vmul.f32 %v1188, %v303
      %vm1190 = vcmp.lt.f32.partialorder %v1186, %v1187
      %v1191 = vmul.f32 %v263, %v1189
      %v1192 = vsel %vm1190, %v1191, %v1123
      %v1193 = vmul.f32 %v264, %v1189
      %v1194 = vsel %vm1190, %v1193, %v1129
      %v1195 = vadd.f32 %v1178, %v1179
      %v1196 = vsub.f32 %v1195, %v291
      %v1197 = vadd.f32 %v1196, %v1177
      %v1198 = vmul.f32 %v1197, %v309
      %v1199 = vmax.f32 %v1198, 0.0
      %v1200 = vmul.f32 %v1177, %v297
      %vm1201 = vcmp.lt.f32.partialorder %v1200, %v1199
      %v1202 = vmul.f32 %v265, %v1199
      %v1203 = vsel %vm1201, %v1202, %v1177
      %v1204 = vsub.f32 %v1203, %v1177
      %v1205 = vsub.f32 %v1178, %v1204
      %v1206 = vmax.f32 %v1205, 0.0
      %v1207 = vsel %vm1201, %v1206, %v1182
      %v1208 = vsub.f32 %v1204, %v1178
      %v1209 = vmax.f32 %v1208, 0.0
      %v1210 = vsub.f32 %v1179, %v1209
      %v1211 = vsel %vm1201, %v1210, %v1185
      %v1212 = vadd.f32 %v1111, %v1112
      %v1213 = vmul.f32 %v1212, %v262
      %v1214 = vadd.f32 %v1074, %v1213
      %v1215 = vmul.f32 %v1119, %v282
      %v1216 = vadd.f32 %v1214, %v1215
      %v1217 = vmul.f32 %v1216, 1000.0
      %v1218 = vmul.f32 %v275, %v1043
      %v1219 = vmul.f32 %v312, %v1127
      %v1220 = vmul.f32 %v1219, %v283
      %v1221 = vadd.f32 %v1218, %v1220
      %v1222 = vmax.f32 %v1221, 0.0
      %v1223 = vmul.f32 %v276, %v1048
      %v1224 = vmul.f32 %v313, %v1180
      %v1225 = vmul.f32 %v1224, %v283
      %v1226 = vadd.f32 %v1223, %v1225
      %v1227 = vmax.f32 %v1226, 0.0
      %v1228 = vmul.f32 %v277, %v1053
      %v1229 = vmul.f32 %v314, %v1183
      %v1230 = vmul.f32 %v1229, %v283
      %v1231 = vadd.f32 %v1228, %v1230
      %v1232 = vmax.f32 %v1231, 0.0
      %v1233 = vadd.f32 %v1217, %v1222
      %v1234 = vadd.f32 %v1233, %v1227
      %v1235 = vadd.f32 %v1234, %v1232
      %v1236 = vmul.f32 %v332, %v1056
      %v1237 = vmul.f32 %v326, %v1235
      %v1238 = vadd.f32 %v1236, %v1237
      %v1239 = vmul.f32 %v329, %v1061
      %v1240 = vadd.f32 %v1238, %v1239
      %s1241 = scalar_lea.vmem %s223, 5
      %v1242 = vld [vmem:[%s1241] sm:$0x1]
      %v1243 = vmax.f32 %v1242, 0.0
      %s1244 = scalar_lea.vmem %s231, 5
      %v1245 = vld [vmem:[%s1244] sm:$0x1]
      %vm1246 = vcmp.eq.f32.partialorder %v1245, %v1245
      %v1247 = vand.u32 2147483647, %v1245
      %vm1248 = vcmp.lt.f32.partialorder %v1247, inf
      %vm1249 = vmand %vm1246, %vm1248
      %v1250 = vsel %vm1249, %v1245, 0.0
      %v1251 = vmax.f32 %v1250, 0.0
      %v1252 = vmul.f32 %v260, %v1251
      %v1253 = vmul.f32 %v261, %v1243
      %v1254 = vmul.f32 %v1096, %v293
      %v1255 = vmul.f32 %v1252, %v1254
      %v1256 = vmin.f32 %v1096, %v1255
      %v1257 = vsub.f32 %v1252, %v1256
      %v1258 = vmul.f32 %v1098, %v301
      %v1259 = vmul.f32 %v1257, %v1258
      %v1260 = vmax.f32 %v1259, 0.0
      %v1261 = vsub.f32 %v1096, %v1256
      %v1262 = vsub.f32 %v263, %v1261
      %v1263 = vsub.f32 %v1243, %v1262
      %v1264 = vmax.f32 %v1263, 0.0
      %v1265 = vsub.f32 %v1098, %v1260
      %v1266 = vmul.f32 %v1265, %v297
      %v1267 = vmul.f32 %v1264, %v1266
      %v1268 = vmax.f32 %v1267, 0.0
      %v1269 = vsub.f32 %v1264, %v1268
      %v1270 = vadd.f32 %v1269, %v1265
      %v1271 = vsub.f32 %v1270, %v265
      %v1272 = vmax.f32 %v1271, 0.0
      %v1273 = vadd.f32 %v1261, %v1243
      %v1274 = vmin.f32 %v263, %v1273
      %v1275 = vmax.f32 %v1274, 0.0
      %v1276 = vmin.f32 %v265, %v1270
      %v1277 = vmax.f32 %v1276, 0.0
      %v1278 = vmul.f32 %v1192, %v293
      %v1279 = vmul.f32 %v1252, %v1278
      %v1280 = vmin.f32 %v1192, %v1279
      %v1281 = vsub.f32 %v1252, %v1280
      %v1282 = vmin.f32 %v1194, %v1281
      %v1283 = vmax.f32 %v1282, 0.0
      %v1284 = vsub.f32 %v1281, %v1283
      %v1285 = vmul.f32 %v1203, %v301
      %v1286 = vmul.f32 %v1284, %v1285
      %v1287 = vmax.f32 %v1286, 0.0
      %v1288 = vsub.f32 %v1203, %v1287
      %v1289 = vmax.f32 %v1288, 0.0
      %v1290 = vmul.f32 %v1268, %v262
      %v1291 = vmul.f32 %v1272, %v262
      %v1292 = vadd.f32 %v1192, %v1194
      %v1293 = vsub.f32 %v1292, %v1280
      %v1294 = vsub.f32 %v1293, %v1283
      %v1295 = vadd.f32 %v1243, %v1294
      %v1296 = vsub.f32 %v1295, %v288
      %v1297 = vmax.f32 %v1296, 0.0
      %v1298 = vmul.f32 %v1297, %v281
      %v1299 = vsub.f32 %v1192, %v1280
      %v1300 = vadd.f32 %v1299, %v1243
      %v1301 = vmin.f32 %v263, %v1300
      %v1302 = vmax.f32 %v1301, 0.0
      %v1303 = vsub.f32 %v1295, %v1302
      %v1304 = vmin.f32 %v264, %v1303
      %v1305 = vmax.f32 %v1304, 0.0
      %v1306 = vmul.f32 %v1305, %v272
      %v1307 = vsub.f32 %v1305, %v1306
      %v1308 = vmax.f32 %v1307, 0.0
      %v1309 = vadd.f32 %v1207, %v1211
      %v1310 = vadd.f32 %v1309, %v1289
      %v1311 = vmul.f32 %v1310, %v305
      %v1312 = vsub.f32 1.0, %v1311
      %v1313 = vmax.f32 %v1312, 0.0
      %vm1314 = vcmp.gt.f32.partialorder %v1313, 0.0
      %v1315 = vsel %vm1314, %v1313, 1.0
      %v1316 = vlog2.pop %v1315
      %v1317 = vmul.f32 %v1316, 0.6931472
      %v1318 = vmul.f32 %v271, %v1317
      %v1319 = vmul.f32 %v1318, 1.442695
      %v1320 = vpow.pop %v1319
      %v1321 = vsel %vm1314, %v1320, 0.0
      %v1322 = vmul.f32 %v270, %v1321
      %v1323 = vadd.f32 %v1322, 1.0
      %v1324 = vmul.f32 %v286, %v1323
      %v1325 = vmul.f32 %v1324, %v1308
      %v1326 = vmul.f32 %v1325, %v295
      %v1327 = vsub.f32 %v290, %v1310
      %v1328 = vmin.f32 %v1326, %v1327
      %v1329 = vmax.f32 %v1328, 0.0
      %v1330 = vsub.f32 %v289, %v1309
      %v1331 = vsub.f32 %v265, %v1289
      %v1332 = vsub.f32 %v1329, %v1331
      %v1333 = vmul.f32 %v1329, %v269
      %v1334 = vmax.f32 %v1332, %v1333
      %v1335 = vmin.f32 %v1330, %v1334
      %v1336 = vmax.f32 %v1335, 0.0
      %v1337 = vsub.f32 %v1329, %v1336
      %v1338 = vmax.f32 %v1337, 0.0
      %v1339 = vmul.f32 %v1211, %v299
      %v1340 = vsub.f32 1.0, %v1339
      %v1341 = vmul.f32 %v1340, 2.0
      %v1342 = vrcp.pop %v1340
      %v1343 = vmul.f32 %v1341, %v1342
      %v1344 = vmul.f32 %v311, %v1343
      %v1345 = vmax.f32 %v1344, 0.0
      %v1346 = vmin.f32 %v1345, 1.0
      %v1347 = vsub.f32 %v267, %v1211
      %v1348 = vsub.f32 %v266, %v1207
      %v1349 = vsub.f32 %v1336, %v1348
      %v1350 = vmul.f32 %v1346, %v1336
      %v1351 = vmax.f32 %v1349, %v1350
      %v1352 = vmin.f32 %v1347, %v1351
      %v1353 = vmax.f32 %v1352, 0.0
      %v1354 = vsub.f32 %v1336, %v1353
      %v1355 = vmax.f32 %v1354, 0.0
      %v1356 = vadd.f32 %v1289, %v1338
      %v1357 = vadd.f32 %v1207, %v1355
      %v1358 = vadd.f32 %v1211, %v1353
      %v1359 = vmul.f32 %v1357, %v273
      %v1360 = vsub.f32 %v1357, %v1359
      %v1361 = vmax.f32 %v1360, 0.0
      %v1362 = vmul.f32 %v1358, %v274
      %v1363 = vsub.f32 %v1358, %v1362
      %v1364 = vmax.f32 %v1363, 0.0
      %v1365 = vmul.f32 %v1302, %v293
      %v1366 = vmul.f32 %v1308, %v295
      %v1367 = vadd.f32 %v1302, %v1308
      %v1368 = vmul.f32 %v1367, %v303
      %vm1369 = vcmp.lt.f32.partialorder %v1365, %v1366
      %v1370 = vmul.f32 %v263, %v1368
      %v1371 = vsel %vm1369, %v1370, %v1302
      %v1372 = vmul.f32 %v264, %v1368
      %v1373 = vsel %vm1369, %v1372, %v1308
      %v1374 = vadd.f32 %v1357, %v1358
      %v1375 = vsub.f32 %v1374, %v291
      %v1376 = vadd.f32 %v1375, %v1356
      %v1377 = vmul.f32 %v1376, %v309
      %v1378 = vmax.f32 %v1377, 0.0
      %v1379 = vmul.f32 %v1356, %v297
      %vm1380 = vcmp.lt.f32.partialorder %v1379, %v1378
      %v1381 = vmul.f32 %v265, %v1378
      %v1382 = vsel %vm1380, %v1381, %v1356
      %v1383 = vsub.f32 %v1382, %v1356
      %v1384 = vsub.f32 %v1357, %v1383
      %v1385 = vmax.f32 %v1384, 0.0
      %v1386 = vsel %vm1380, %v1385, %v1361
      %v1387 = vsub.f32 %v1383, %v1357
      %v1388 = vmax.f32 %v1387, 0.0
      %v1389 = vsub.f32 %v1358, %v1388
      %v1390 = vsel %vm1380, %v1389, %v1364
      %v1391 = vadd.f32 %v1290, %v1291
      %v1392 = vmul.f32 %v1391, %v262
      %v1393 = vadd.f32 %v1253, %v1392
      %v1394 = vmul.f32 %v1298, %v282
      %v1395 = vadd.f32 %v1393, %v1394
      %v1396 = vmul.f32 %v1395, 1000.0
      %v1397 = vmul.f32 %v275, %v1222
      %v1398 = vmul.f32 %v312, %v1306
      %v1399 = vmul.f32 %v1398, %v283
      %v1400 = vadd.f32 %v1397, %v1399
      %v1401 = vmax.f32 %v1400, 0.0
      %v1402 = vmul.f32 %v276, %v1227
      %v1403 = vmul.f32 %v313, %v1359
      %v1404 = vmul.f32 %v1403, %v283
      %v1405 = vadd.f32 %v1402, %v1404
      %v1406 = vmax.f32 %v1405, 0.0
      %v1407 = vmul.f32 %v277, %v1232
      %v1408 = vmul.f32 %v314, %v1362
      %v1409 = vmul.f32 %v1408, %v283
      %v1410 = vadd.f32 %v1407, %v1409
      %v1411 = vmax.f32 %v1410, 0.0
      %v1412 = vadd.f32 %v1396, %v1401
      %v1413 = vadd.f32 %v1412, %v1406
      %v1414 = vadd.f32 %v1413, %v1411
      %v1415 = vmul.f32 %v332, %v1235
      %v1416 = vmul.f32 %v326, %v1414
      %v1417 = vadd.f32 %v1415, %v1416
      %v1418 = vmul.f32 %v329, %v1240
      %v1419 = vadd.f32 %v1417, %v1418
      %s1420 = scalar_lea.vmem %s223, 6
      %v1421 = vld [vmem:[%s1420] sm:$0x1]
      %v1422 = vmax.f32 %v1421, 0.0
      %s1423 = scalar_lea.vmem %s231, 6
      %v1424 = vld [vmem:[%s1423] sm:$0x1]
      %vm1425 = vcmp.eq.f32.partialorder %v1424, %v1424
      %v1426 = vand.u32 2147483647, %v1424
      %vm1427 = vcmp.lt.f32.partialorder %v1426, inf
      %vm1428 = vmand %vm1425, %vm1427
      %v1429 = vsel %vm1428, %v1424, 0.0
      %v1430 = vmax.f32 %v1429, 0.0
      %v1431 = vmul.f32 %v260, %v1430
      %v1432 = vmul.f32 %v261, %v1422
      %v1433 = vmul.f32 %v1275, %v293
      %v1434 = vmul.f32 %v1431, %v1433
      %v1435 = vmin.f32 %v1275, %v1434
      %v1436 = vsub.f32 %v1431, %v1435
      %v1437 = vmul.f32 %v1277, %v301
      %v1438 = vmul.f32 %v1436, %v1437
      %v1439 = vmax.f32 %v1438, 0.0
      %v1440 = vsub.f32 %v1275, %v1435
      %v1441 = vsub.f32 %v263, %v1440
      %v1442 = vsub.f32 %v1422, %v1441
      %v1443 = vmax.f32 %v1442, 0.0
      %v1444 = vsub.f32 %v1277, %v1439
      %v1445 = vmul.f32 %v1444, %v297
      %v1446 = vmul.f32 %v1443, %v1445
      %v1447 = vmax.f32 %v1446, 0.0
      %v1448 = vsub.f32 %v1443, %v1447
      %v1449 = vadd.f32 %v1448, %v1444
      %v1450 = vsub.f32 %v1449, %v265
      %v1451 = vmax.f32 %v1450, 0.0
      %v1452 = vadd.f32 %v1440, %v1422
      %v1453 = vmin.f32 %v263, %v1452
      %v1454 = vmax.f32 %v1453, 0.0
      %v1455 = vmin.f32 %v265, %v1449
      %v1456 = vmax.f32 %v1455, 0.0
      %v1457 = vmul.f32 %v1371, %v293
      %v1458 = vmul.f32 %v1431, %v1457
      %v1459 = vmin.f32 %v1371, %v1458
      %v1460 = vsub.f32 %v1431, %v1459
      %v1461 = vmin.f32 %v1373, %v1460
      %v1462 = vmax.f32 %v1461, 0.0
      %v1463 = vsub.f32 %v1460, %v1462
      %v1464 = vmul.f32 %v1382, %v301
      %v1465 = vmul.f32 %v1463, %v1464
      %v1466 = vmax.f32 %v1465, 0.0
      %v1467 = vsub.f32 %v1382, %v1466
      %v1468 = vmax.f32 %v1467, 0.0
      %v1469 = vmul.f32 %v1447, %v262
      %v1470 = vmul.f32 %v1451, %v262
      %v1471 = vadd.f32 %v1371, %v1373
      %v1472 = vsub.f32 %v1471, %v1459
      %v1473 = vsub.f32 %v1472, %v1462
      %v1474 = vadd.f32 %v1422, %v1473
      %v1475 = vsub.f32 %v1474, %v288
      %v1476 = vmax.f32 %v1475, 0.0
      %v1477 = vmul.f32 %v1476, %v281
      %v1478 = vsub.f32 %v1371, %v1459
      %v1479 = vadd.f32 %v1478, %v1422
      %v1480 = vmin.f32 %v263, %v1479
      %v1481 = vmax.f32 %v1480, 0.0
      %v1482 = vsub.f32 %v1474, %v1481
      %v1483 = vmin.f32 %v264, %v1482
      %v1484 = vmax.f32 %v1483, 0.0
      %v1485 = vmul.f32 %v1484, %v272
      %v1486 = vsub.f32 %v1484, %v1485
      %v1487 = vmax.f32 %v1486, 0.0
      %v1488 = vadd.f32 %v1386, %v1390
      %v1489 = vadd.f32 %v1488, %v1468
      %v1490 = vmul.f32 %v1489, %v305
      %v1491 = vsub.f32 1.0, %v1490
      %v1492 = vmax.f32 %v1491, 0.0
      %vm1493 = vcmp.gt.f32.partialorder %v1492, 0.0
      %v1494 = vsel %vm1493, %v1492, 1.0
      %v1495 = vlog2.pop %v1494
      %v1496 = vmul.f32 %v1495, 0.6931472
      %v1497 = vmul.f32 %v271, %v1496
      %v1498 = vmul.f32 %v1497, 1.442695
      %v1499 = vpow.pop %v1498
      %v1500 = vsel %vm1493, %v1499, 0.0
      %v1501 = vmul.f32 %v270, %v1500
      %v1502 = vadd.f32 %v1501, 1.0
      %v1503 = vmul.f32 %v286, %v1502
      %v1504 = vmul.f32 %v1503, %v1487
      %v1505 = vmul.f32 %v1504, %v295
      %v1506 = vsub.f32 %v290, %v1489
      %v1507 = vmin.f32 %v1505, %v1506
      %v1508 = vmax.f32 %v1507, 0.0
      %v1509 = vsub.f32 %v289, %v1488
      %v1510 = vsub.f32 %v265, %v1468
      %v1511 = vsub.f32 %v1508, %v1510
      %v1512 = vmul.f32 %v1508, %v269
      %v1513 = vmax.f32 %v1511, %v1512
      %v1514 = vmin.f32 %v1509, %v1513
      %v1515 = vmax.f32 %v1514, 0.0
      %v1516 = vsub.f32 %v1508, %v1515
      %v1517 = vmax.f32 %v1516, 0.0
      %v1518 = vmul.f32 %v1390, %v299
      %v1519 = vsub.f32 1.0, %v1518
      %v1520 = vmul.f32 %v1519, 2.0
      %v1521 = vrcp.pop %v1519
      %v1522 = vmul.f32 %v1520, %v1521
      %v1523 = vmul.f32 %v311, %v1522
      %v1524 = vmax.f32 %v1523, 0.0
      %v1525 = vmin.f32 %v1524, 1.0
      %v1526 = vsub.f32 %v267, %v1390
      %v1527 = vsub.f32 %v266, %v1386
      %v1528 = vsub.f32 %v1515, %v1527
      %v1529 = vmul.f32 %v1525, %v1515
      %v1530 = vmax.f32 %v1528, %v1529
      %v1531 = vmin.f32 %v1526, %v1530
      %v1532 = vmax.f32 %v1531, 0.0
      %v1533 = vsub.f32 %v1515, %v1532
      %v1534 = vmax.f32 %v1533, 0.0
      %v1535 = vadd.f32 %v1468, %v1517
      %v1536 = vadd.f32 %v1386, %v1534
      %v1537 = vadd.f32 %v1390, %v1532
      %v1538 = vmul.f32 %v1536, %v273
      %v1539 = vsub.f32 %v1536, %v1538
      %v1540 = vmax.f32 %v1539, 0.0
      %v1541 = vmul.f32 %v1537, %v274
      %v1542 = vsub.f32 %v1537, %v1541
      %v1543 = vmax.f32 %v1542, 0.0
      %v1544 = vmul.f32 %v1481, %v293
      %v1545 = vmul.f32 %v1487, %v295
      %v1546 = vadd.f32 %v1481, %v1487
      %v1547 = vmul.f32 %v1546, %v303
      %vm1548 = vcmp.lt.f32.partialorder %v1544, %v1545
      %v1549 = vmul.f32 %v263, %v1547
      %v1550 = vsel %vm1548, %v1549, %v1481
      %v1551 = vmul.f32 %v264, %v1547
      %v1552 = vsel %vm1548, %v1551, %v1487
      %v1553 = vadd.f32 %v1536, %v1537
      %v1554 = vsub.f32 %v1553, %v291
      %v1555 = vadd.f32 %v1554, %v1535
      %v1556 = vmul.f32 %v1555, %v309
      %v1557 = vmax.f32 %v1556, 0.0
      %v1558 = vmul.f32 %v1535, %v297
      %vm1559 = vcmp.lt.f32.partialorder %v1558, %v1557
      %v1560 = vmul.f32 %v265, %v1557
      %v1561 = vsel %vm1559, %v1560, %v1535
      %v1562 = vsub.f32 %v1561, %v1535
      %v1563 = vsub.f32 %v1536, %v1562
      %v1564 = vmax.f32 %v1563, 0.0
      %v1565 = vsel %vm1559, %v1564, %v1540
      %v1566 = vsub.f32 %v1562, %v1536
      %v1567 = vmax.f32 %v1566, 0.0
      %v1568 = vsub.f32 %v1537, %v1567
      %v1569 = vsel %vm1559, %v1568, %v1543
      %v1570 = vadd.f32 %v1469, %v1470
      %v1571 = vmul.f32 %v1570, %v262
      %v1572 = vadd.f32 %v1432, %v1571
      %v1573 = vmul.f32 %v1477, %v282
      %v1574 = vadd.f32 %v1572, %v1573
      %v1575 = vmul.f32 %v1574, 1000.0
      %v1576 = vmul.f32 %v275, %v1401
      %v1577 = vmul.f32 %v312, %v1485
      %v1578 = vmul.f32 %v1577, %v283
      %v1579 = vadd.f32 %v1576, %v1578
      %v1580 = vmax.f32 %v1579, 0.0
      %v1581 = vmul.f32 %v276, %v1406
      %v1582 = vmul.f32 %v313, %v1538
      %v1583 = vmul.f32 %v1582, %v283
      %v1584 = vadd.f32 %v1581, %v1583
      %v1585 = vmax.f32 %v1584, 0.0
      %v1586 = vmul.f32 %v277, %v1411
      %v1587 = vmul.f32 %v314, %v1541
      %v1588 = vmul.f32 %v1587, %v283
      %v1589 = vadd.f32 %v1586, %v1588
      %v1590 = vmax.f32 %v1589, 0.0
      %v1591 = vadd.f32 %v1575, %v1580
      %v1592 = vadd.f32 %v1591, %v1585
      %v1593 = vadd.f32 %v1592, %v1590
      %v1594 = vmul.f32 %v332, %v1414
      %v1595 = vmul.f32 %v326, %v1593
      %v1596 = vadd.f32 %v1594, %v1595
      %v1597 = vmul.f32 %v329, %v1419
      %v1598 = vadd.f32 %v1596, %v1597
      %s1599 = scalar_lea.vmem %s223, 7
      %v1600 = vld [vmem:[%s1599] sm:$0x1]
      %v1601 = vmax.f32 %v1600, 0.0
      %s1602 = scalar_lea.vmem %s231, 7
      %v1603 = vld [vmem:[%s1602] sm:$0x1]
      %vm1604 = vcmp.eq.f32.partialorder %v1603, %v1603
      %v1605 = vand.u32 2147483647, %v1603
      %vm1606 = vcmp.lt.f32.partialorder %v1605, inf
      %vm1607 = vmand %vm1604, %vm1606
      %v1608 = vsel %vm1607, %v1603, 0.0
      %v1609 = vmax.f32 %v1608, 0.0
      %v1610 = vmul.f32 %v260, %v1609
      %v1611 = vmul.f32 %v261, %v1601
      %v1612 = vmul.f32 %v1454, %v293
      %v1613 = vmul.f32 %v1610, %v1612
      %v1614 = vmin.f32 %v1454, %v1613
      %v1615 = vsub.f32 %v1610, %v1614
      %v1616 = vmul.f32 %v1456, %v301
      %v1617 = vmul.f32 %v1615, %v1616
      %v1618 = vmax.f32 %v1617, 0.0
      %v1619 = vsub.f32 %v1454, %v1614
      %v1620 = vsub.f32 %v263, %v1619
      %v1621 = vsub.f32 %v1601, %v1620
      %v1622 = vmax.f32 %v1621, 0.0
      %v1623 = vsub.f32 %v1456, %v1618
      %v1624 = vmul.f32 %v1623, %v297
      %v1625 = vmul.f32 %v1622, %v1624
      %v1626 = vmax.f32 %v1625, 0.0
      %v1627 = vsub.f32 %v1622, %v1626
      %v1628 = vadd.f32 %v1627, %v1623
      %v1629 = vsub.f32 %v1628, %v265
      %v1630 = vmax.f32 %v1629, 0.0
      %v1631 = vadd.f32 %v1619, %v1601
      %v1632 = vmin.f32 %v263, %v1631
      %v1633 = vmax.f32 %v1632, 0.0
      %v1634 = vmin.f32 %v265, %v1628
      %v1635 = vmax.f32 %v1634, 0.0
      %v1636 = vmul.f32 %v1550, %v293
      %v1637 = vmul.f32 %v1610, %v1636
      %v1638 = vmin.f32 %v1550, %v1637
      %v1639 = vsub.f32 %v1610, %v1638
      %v1640 = vmin.f32 %v1552, %v1639
      %v1641 = vmax.f32 %v1640, 0.0
      %v1642 = vsub.f32 %v1639, %v1641
      %v1643 = vmul.f32 %v1561, %v301
      %v1644 = vmul.f32 %v1642, %v1643
      %v1645 = vmax.f32 %v1644, 0.0
      %v1646 = vsub.f32 %v1561, %v1645
      %v1647 = vmax.f32 %v1646, 0.0
      %v1648 = vmul.f32 %v1626, %v262
      %v1649 = vmul.f32 %v1630, %v262
      %v1650 = vadd.f32 %v1550, %v1552
      %v1651 = vsub.f32 %v1650, %v1638
      %v1652 = vsub.f32 %v1651, %v1641
      %v1653 = vadd.f32 %v1601, %v1652
      %v1654 = vsub.f32 %v1653, %v288
      %v1655 = vmax.f32 %v1654, 0.0
      %v1656 = vmul.f32 %v1655, %v281
      %v1657 = vsub.f32 %v1550, %v1638
      %v1658 = vadd.f32 %v1657, %v1601
      %v1659 = vmin.f32 %v263, %v1658
      %v1660 = vmax.f32 %v1659, 0.0
      %v1661 = vsub.f32 %v1653, %v1660
      %v1662 = vmin.f32 %v264, %v1661
      %v1663 = vmax.f32 %v1662, 0.0
      %v1664 = vmul.f32 %v1663, %v272
      %v1665 = vsub.f32 %v1663, %v1664
      %v1666 = vmax.f32 %v1665, 0.0
      %v1667 = vadd.f32 %v1565, %v1569
      %v1668 = vadd.f32 %v1667, %v1647
      %v1669 = vmul.f32 %v1668, %v305
      %v1670 = vsub.f32 1.0, %v1669
      %v1671 = vmax.f32 %v1670, 0.0
      %vm1672 = vcmp.gt.f32.partialorder %v1671, 0.0
      %v1673 = vsel %vm1672, %v1671, 1.0
      %v1674 = vlog2.pop %v1673
      %v1675 = vmul.f32 %v1674, 0.6931472
      %v1676 = vmul.f32 %v271, %v1675
      %v1677 = vmul.f32 %v1676, 1.442695
      %v1678 = vpow.pop %v1677
      %v1679 = vsel %vm1672, %v1678, 0.0
      %v1680 = vmul.f32 %v270, %v1679
      %v1681 = vadd.f32 %v1680, 1.0
      %v1682 = vmul.f32 %v286, %v1681
      %v1683 = vmul.f32 %v1682, %v1666
      %v1684 = vmul.f32 %v1683, %v295
      %v1685 = vsub.f32 %v290, %v1668
      %v1686 = vmin.f32 %v1684, %v1685
      %v1687 = vmax.f32 %v1686, 0.0
      %v1688 = vsub.f32 %v289, %v1667
      %v1689 = vsub.f32 %v265, %v1647
      %v1690 = vsub.f32 %v1687, %v1689
      %v1691 = vmul.f32 %v1687, %v269
      %v1692 = vmax.f32 %v1690, %v1691
      %v1693 = vmin.f32 %v1688, %v1692
      %v1694 = vmax.f32 %v1693, 0.0
      %v1695 = vsub.f32 %v1687, %v1694
      %v1696 = vmax.f32 %v1695, 0.0
      %v1697 = vmul.f32 %v1569, %v299
      %v1698 = vsub.f32 1.0, %v1697
      %v1699 = vmul.f32 %v1698, 2.0
      %v1700 = vrcp.pop %v1698
      %v1701 = vmul.f32 %v1699, %v1700
      %v1702 = vmul.f32 %v311, %v1701
      %v1703 = vmax.f32 %v1702, 0.0
      %v1704 = vmin.f32 %v1703, 1.0
      %v1705 = vsub.f32 %v267, %v1569
      %v1706 = vsub.f32 %v266, %v1565
      %v1707 = vsub.f32 %v1694, %v1706
      %v1708 = vmul.f32 %v1704, %v1694
      %v1709 = vmax.f32 %v1707, %v1708
      %v1710 = vmin.f32 %v1705, %v1709
      %v1711 = vmax.f32 %v1710, 0.0
      %v1712 = vsub.f32 %v1694, %v1711
      %v1713 = vmax.f32 %v1712, 0.0
      %v1714 = vadd.f32 %v1647, %v1696
      %v1715 = vadd.f32 %v1565, %v1713
      %v1716 = vadd.f32 %v1569, %v1711
      %v1717 = vmul.f32 %v1715, %v273
      %v1718 = vsub.f32 %v1715, %v1717
      %v1719 = vmax.f32 %v1718, 0.0
      %v1720 = vmul.f32 %v1716, %v274
      %v1721 = vsub.f32 %v1716, %v1720
      %v1722 = vmax.f32 %v1721, 0.0
      %v1723 = vmul.f32 %v1660, %v293
      %v1724 = vmul.f32 %v1666, %v295
      %v1725 = vadd.f32 %v1660, %v1666
      %v1726 = vmul.f32 %v1725, %v303
      %vm1727 = vcmp.lt.f32.partialorder %v1723, %v1724
      %v1728 = vmul.f32 %v263, %v1726
      %v1729 = vsel %vm1727, %v1728, %v1660
      %v1730 = vmul.f32 %v264, %v1726
      %v1731 = vsel %vm1727, %v1730, %v1666
      %v1732 = vadd.f32 %v1715, %v1716
      %v1733 = vsub.f32 %v1732, %v291
      %v1734 = vadd.f32 %v1733, %v1714
      %v1735 = vmul.f32 %v1734, %v309
      %v1736 = vmax.f32 %v1735, 0.0
      %v1737 = vmul.f32 %v1714, %v297
      %vm1738 = vcmp.lt.f32.partialorder %v1737, %v1736
      %v1739 = vmul.f32 %v265, %v1736
      %v1740 = vsel %vm1738, %v1739, %v1714
      %v1741 = vsub.f32 %v1740, %v1714
      %v1742 = vsub.f32 %v1715, %v1741
      %v1743 = vmax.f32 %v1742, 0.0
      %v1744 = vsel %vm1738, %v1743, %v1719
      %v1745 = vsub.f32 %v1741, %v1715
      %v1746 = vmax.f32 %v1745, 0.0
      %v1747 = vsub.f32 %v1716, %v1746
      %v1748 = vsel %vm1738, %v1747, %v1722
      %v1749 = vadd.f32 %v1648, %v1649
      %v1750 = vmul.f32 %v1749, %v262
      %v1751 = vadd.f32 %v1611, %v1750
      %v1752 = vmul.f32 %v1656, %v282
      %v1753 = vadd.f32 %v1751, %v1752
      %v1754 = vmul.f32 %v1753, 1000.0
      %v1755 = vmul.f32 %v275, %v1580
      %v1756 = vmul.f32 %v312, %v1664
      %v1757 = vmul.f32 %v1756, %v283
      %v1758 = vadd.f32 %v1755, %v1757
      %v1759 = vmax.f32 %v1758, 0.0
      %v1760 = vmul.f32 %v276, %v1585
      %v1761 = vmul.f32 %v313, %v1717
      %v1762 = vmul.f32 %v1761, %v283
      %v1763 = vadd.f32 %v1760, %v1762
      %v1764 = vmax.f32 %v1763, 0.0
      %v1765 = vmul.f32 %v277, %v1590
      %v1766 = vmul.f32 %v314, %v1720
      %v1767 = vmul.f32 %v1766, %v283
      %v1768 = vadd.f32 %v1765, %v1767
      %v1769 = vmax.f32 %v1768, 0.0
      %v1770 = vadd.f32 %v1754, %v1759
      %v1771 = vadd.f32 %v1770, %v1764
      %v1772 = vadd.f32 %v1771, %v1769
      %v1773 = vmul.f32 %v332, %v1593
      %v1774 = vmul.f32 %v326, %v1772
      %v1775 = vadd.f32 %v1773, %v1774
      %v1776 = vmul.f32 %v329, %v1598
      %v1777 = vadd.f32 %v1775, %v1776
      %1778 = vst [vmem:[%s242] sm:$0x1] %v524
      %1779 = vst [vmem:[%s242 + $0x1] sm:$0x1] %v703
      %1780 = vst [vmem:[%s242 + $0x2] sm:$0x1] %v882
      %1781 = vst [vmem:[%s242 + $0x3] sm:$0x1] %v1061
      %1782 = vst [vmem:[%s242 + $0x4] sm:$0x1] %v1240
      %1783 = vst [vmem:[%s242 + $0x5] sm:$0x1] %v1419
      %1784 = vst [vmem:[%s242 + $0x6] sm:$0x1] %v1598
      %1785 = vst [vmem:[%s242 + $0x7] sm:$0x1] %v1777
      %1786 = vst [vmem:[#allocation2] sm:$0x1] %v1633
      %1787 = vst [vmem:[#allocation2 + $0x1] sm:$0x1] %v1635
      %1788 = vst [vmem:[#allocation2 + $0x2] sm:$0x1] %v1729
      %1789 = vst [vmem:[#allocation2 + $0x3] sm:$0x1] %v1731
      %1790 = vst [vmem:[#allocation2 + $0x4] sm:$0x1] %v1740
      %1791 = vst [vmem:[#allocation2 + $0x5] sm:$0x1] %v1744
      %1792 = vst [vmem:[#allocation2 + $0x6] sm:$0x1] %v1748
      %1793 = vst [vmem:[#allocation2 + $0x7] sm:$0x1] %v1754
      %1794 = vst [vmem:[#allocation2 + $0x8] sm:$0x1] %v1759
      %1795 = vst [vmem:[#allocation2 + $0x9] sm:$0x1] %v1764
      %1796 = vst [vmem:[#allocation2 + $0xa] sm:$0x1] %v1769
      %1797 = vst [vmem:[#allocation2 + $0xb] sm:$0x1] %v1777
      %s1798 = smul.u32 8, %s19
      %p1799 = scmp.lt.s32.totalorder %s1798, 15
      %s1800 = scalar_select %p1799, %s1798, 15
      %p1801 = scmp.lt.s32.totalorder %s18, 0
      %s1802 = scalar_select %p1801, %s18, 0
      %s1803 = sadd.s32 %s1802, %s1800
      %s1804 = scalar_lea.vmem %s3, %s1803
      // Predicated region
      $region37: #{dpl_ann_sac_forward.3} parent=31 // pred_check
        %p1805 = pneg %p128
      $region38: #{dpl_ann_sac_forward.3} parent=31 // pred_check_branch
        %1807 = sbr.rel (%p1805) target = $region40
      $region39: #{dpl_ann_sac_forward.3} parent=31 // pred_region
        %s1808 = smul.u32 8, %s19
      $region40: #{dpl_ann_sac_forward.3} parent=31 // pred_fallthru
        _
    $region32: #{dpl_ann_sac_forward.3} parent=5 // pred_fallthru
      _
    %p1809 = scmp.le.s32.totalorder 2, %s9
    // Predicated region
    $region41: #{dpl_ann_sac_forward.3} parent=5 // pred_check
      %p1810 = pneg %p1809
    $region42: #{dpl_ann_sac_forward.3} parent=5 // pred_check_branch
      %1812 = sbr.rel (%p1810) target = $region44
    $region43: #{dpl_ann_sac_forward.3} parent=5 // pred_region
      %s1813 = ssub.s32 %s9, 2
      // Predicated region
      $region45: #{dpl_ann_sac_forward.3} parent=43 // pred_check
        %p1814 = pneg %p134
      $region46: #{dpl_ann_sac_forward.3} parent=43 // pred_check_branch
        %1816 = sbr.rel (%p1814) target = $region48
      $region47: #{dpl_ann_sac_forward.3} parent=43 // pred_region
        %s1817 = smul.u32 8, %s21
        %p1818 = scmp.lt.s32.totalorder %s1817, 15
        %s1819 = scalar_select %p1818, %s1817, 15
        %p1820 = scmp.lt.s32.totalorder %s20, 0
        %s1821 = scalar_select %p1820, %s20, 0
        %s1822 = sadd.s32 %s1821, %s1819
        %s1823 = scalar_lea.vmem %s3, %s1822
      $region48: #{dpl_ann_sac_forward.3} parent=43 // pred_fallthru
        _
    $region44: #{dpl_ann_sac_forward.3} parent=5 // pred_fallthru
      _
  $region6: #{dpl_ann_sac_forward.3} parent=0 // loop_footer
    %s13 = sadd.s32 1, %s9
  $region7: #{dpl_ann_sac_forward.3} parent=0 // loop_footer_branch
    %8 = sbr.rel target = $region3
  $region8: #{dpl_ann_sac_forward.3} parent=0 // loop_exit
    _

</llo_original>
